<compile_context>
chip_gen: v7x
topology: tpu7x:2x2x1
jax: 0.10.0
libtpu: 0.0.40
codegen_flags: <defaults>
</compile_context>

<pallas_src>
import functools
import math

import jax
import jax.numpy as jnp
from jax.experimental import pallas as pl
from jax.experimental.pallas import tpu as pltpu


# ----------------------------------------------------------------------------
# generation-aware VMEM budget
# ----------------------------------------------------------------------------
def _detect_vmem_limit():
    cap = 64 * 1024 * 1024
    try:
        cap = int(pltpu.get_tpu_info().vmem_capacity_bytes)
    except Exception:
        pass
    # leave 1/8 headroom for Mosaic internal scratch / semaphores (v7x only has 64 MiB)
    return max(48 * 1024 * 1024, (cap * 7) // 8)


_VMEM_LIMIT = _detect_vmem_limit()
_BIG_VMEM = _VMEM_LIMIT >= 96 * 1024 * 1024          # v5e / v6e (128 MiB physical)


# ----------------------------------------------------------------------------
# tiling helpers
# ----------------------------------------------------------------------------
def _pick_tile(n, target):
    """Largest multiple of 128 (else 8) that divides n and is <= target; else n."""
    if n <= target:
        return n
    for step in (128, 8):
        t = (min(n, target) // step) * step
        while t >= step:
            if n % t == 0:
                return t
            t -= step
    return n                      # fallback: full dim (may be large; caller beware)


def _pick_heads_per_block(num_heads, head_dim, target):
    """Most heads per block s.t. hb | num_heads and hb*head_dim <= target."""
    best = 1
    for hb in range(1, num_heads + 1):
        if num_heads % hb == 0 and hb * head_dim <= target:
            best = hb
    return best


def _qkv_head_target(d_in, itemsize):
    """Head-block width (lanes) s.t. the 3 double-buffered weight panels fit in ~half VMEM."""
    budget = _VMEM_LIMIT // 2
    t = budget // max(1, 6 * d_in * itemsize)        # 3 weights x 2 buffers
    return int(max(128, min(2048, t)))


# ----------------------------------------------------------------------------
# fused modulated-RMSNorm + QKV projection + per-head RMSNorm (+ RoPE)
# ----------------------------------------------------------------------------
def _fused_qkv_kernel(x_ref, s_ref, wq_ref, wk_ref, wv_ref,
                      bq_ref, bk_ref, bv_ref, qw_ref, kw_ref, *rest,
                      use_rope, heads_per_block, head_dim, mod_eps, head_eps, q_scale):
    if use_rope:
        rot_ref, cos_ref, sin_ref, q_out, k_out, v_out = rest
    else:
        q_out, k_out, v_out = rest

    # modulated RMSNorm of the input tile (f32 statistics)
    x = x_ref[0].astype(jnp.float32)                       # (tl, D)
    sc = s_ref[0].astype(jnp.float32)                      # (1, D)
    ms = jnp.mean(x * x, axis=-1, keepdims=True)
    x_mod = (x * jax.lax.rsqrt(ms + mod_eps)) * (1.0 + sc)
    x_mod = x_mod.astype(wq_ref.dtype)                     # bf16 MXU operands, f32 accum

    q = jnp.dot(x_mod, wq_ref[...], preferred_element_type=jnp.float32) \
        + bq_ref[...].astype(jnp.float32)
    k = jnp.dot(x_mod, wk_ref[...], preferred_element_type=jnp.float32) \
        + bk_ref[...].astype(jnp.float32)
    v = jnp.dot(x_mod, wv_ref[...], preferred_element_type=jnp.float32) \
        + bv_ref[...].astype(jnp.float32)

    def head_rms(t, w_rep):
        # per-head mean-square via XLU lane reduces on static head slices (no MXU work)
        cols = []
        for h in range(heads_per_block):
            th = t[:, h * head_dim:(h + 1) * head_dim]
            ms_h = jnp.mean(th * th, axis=-1, keepdims=True)
            cols.append(th * jax.lax.rsqrt(ms_h + head_eps))
        out = cols[0] if heads_per_block == 1 else jnp.concatenate(cols, axis=-1)
        return out * w_rep

    q = head_rms(q, qw_ref[...].astype(jnp.float32))
    k = head_rms(k, kw_ref[...].astype(jnp.float32))

    if use_rope:
        # interleaved real RoPE: out = t*cos + (t @ R)*sin, R = kron(I, [[0,1],[-1,0]])
        # R has exact 0/+-1 entries -> bf16 operands on the MXU (4x cheaper than f32).
        cos = cos_ref[...].astype(jnp.float32)
        sin = sin_ref[...].astype(jnp.float32)
        rot = rot_ref[...]
        q = q * cos + jnp.dot(q.astype(rot.dtype), rot,
                              preferred_element_type=jnp.float32) * sin
        k = k * cos + jnp.dot(k.astype(rot.dtype), rot,
                              preferred_element_type=jnp.float32) * sin

    if q_scale != 1.0:
        q = q * q_scale                                    # fold softmax 1/sqrt(hd) here

    q_out[0] = q.astype(q_out.dtype)
    k_out[0] = k.astype(k_out.dtype)
    v_out[0] = v.astype(v_out.dtype)


def fused_qkv(x, scale, wq, wk, wv, bq, bk, bv, q_norm_w, k_norm_w, num_heads,
              rope_cos_rep=None, rope_sin_rep=None, q_scale=1.0, out_len=None,
              mod_eps=1e-6, head_eps=1e-5, l_tile=256):
    """Fused modulated-RMSNorm + QKV + per-head RMSNorm (+ RoPE + q prescale).
    Returns q, k, v each of shape (B, out_len, H*hd); rows [L, out_len) are left
    unwritten so the caller can drop another stream in place (avoids a concat copy)."""
    B, L, D = x.shape
    Dout = wq.shape[1]
    hd = Dout // num_heads
    dt = x.dtype
    itemsize = jnp.dtype(dt).itemsize
    hb = _pick_heads_per_block(num_heads, hd, _qkv_head_target(D, itemsize))
    tn = hb * hd
    tl = _pick_tile(L, l_tile)
    use_rope = rope_cos_rep is not None
    if out_len is None or out_len == L or tl % 8 != 0:
        out_len = L                                        # caller falls back to concat

    wq = wq.astype(dt)
    wk = wk.astype(dt)
    wv = wv.astype(dt)
    scale3 = scale.reshape(B, 1, D)
    bq2 = bq.reshape(1, Dout).astype(jnp.float32)
    bk2 = bk.reshape(1, Dout).astype(jnp.float32)
    bv2 = bv.reshape(1, Dout).astype(jnp.float32)
    qw = jnp.tile(q_norm_w.astype(jnp.float32), num_heads).reshape(1, Dout)
    kw = jnp.tile(k_norm_w.astype(jnp.float32), num_heads).reshape(1, Dout)

    # grid: l innermost -> weight panels stay resident across the whole L sweep
    grid = (B, Dout // tn, L // tl)
    w_spec = pl.BlockSpec((D, tn), lambda b, h, l: (0, h))
    b_spec = pl.BlockSpec((1, tn), lambda b, h, l: (0, h))
    out_spec = pl.BlockSpec((1, tl, tn), lambda b, h, l: (b, l, h))

    in_specs = [
        pl.BlockSpec((1, tl, D), lambda b, h, l: (b, l, 0)),      # x
        pl.BlockSpec((1, 1, D), lambda b, h, l: (b, 0, 0)),       # scale
        w_spec, w_spec, w_spec,                                   # Wq, Wk, Wv
        b_spec, b_spec, b_spec,                                   # bq, bk, bv
        b_spec, b_spec,                                           # q_norm, k_norm (tiled)
    ]
    args = [x, scale3, wq, wk, wv, bq2, bk2, bv2, qw, kw]
    if use_rope:
        rot = jnp.kron(jnp.eye(tn // 2, dtype=jnp.float32),
                       jnp.array([[0.0, 1.0], [-1.0, 0.0]], dtype=jnp.float32))
        in_specs += [
            pl.BlockSpec((tn, tn), lambda b, h, l: (0, 0)),       # RoPE rotation (bf16)
            pl.BlockSpec((tl, tn), lambda b, h, l: (l, h)),       # cos (bf16)
            pl.BlockSpec((tl, tn), lambda b, h, l: (l, h)),       # sin (bf16)
        ]
        args += [rot.astype(jnp.bfloat16),
                 rope_cos_rep.astype(jnp.bfloat16),
                 rope_sin_rep.astype(jnp.bfloat16)]

    cost = pl.CostEstimate(
        flops=int(2 * B * L * D * 3 * Dout + (4 * B * L * Dout * tn if use_rope else 0)),
        transcendentals=int(B * L * (1 + 2 * num_heads)),
        bytes_accessed=int(itemsize * (B * L * D * (Dout // tn)
                                       + 3 * D * Dout + 3 * B * L * Dout)),
    )
    return pl.pallas_call(
        functools.partial(_fused_qkv_kernel, use_rope=use_rope, heads_per_block=hb,
                          head_dim=hd, mod_eps=mod_eps, head_eps=head_eps,
                          q_scale=float(q_scale)),
        out_shape=[jax.ShapeDtypeStruct((B, out_len, Dout), dt)] * 3,
        grid=grid,
        in_specs=in_specs,
        out_specs=[out_spec, out_spec, out_spec],
        compiler_params=pltpu.CompilerParams(
            dimension_semantics=("parallel", "parallel", "parallel"),
            vmem_limit_bytes=_VMEM_LIMIT),
        cost_estimate=cost,
    )(*args)


# ----------------------------------------------------------------------------
# flash-style attention in (B, L, H*hd) layout (q is pre-scaled by 1/sqrt(hd))
# ----------------------------------------------------------------------------
def _flash_attn_kernel(q_ref, k_ref, v_ref, o_ref, m_sc, l_sc, acc_sc,
                       *, heads_per_block, head_dim):
    kv_idx = pl.program_id(3)

    @pl.when(kv_idx == 0)
    def _init():
        m_sc[...] = jnp.full(m_sc.shape, -jnp.inf, m_sc.dtype)
        l_sc[...] = jnp.zeros(l_sc.shape, l_sc.dtype)
        acc_sc[...] = jnp.zeros(acc_sc.shape, acc_sc.dtype)

    q_all = q_ref[0]        # (tq, hb*hd)  input dtype (bf16 or f32)
    k_all = k_ref[0]        # (tk, hb*hd)
    v_all = v_ref[0]

    for h in range(heads_per_block):                       # static unroll over heads
        sl = slice(h * head_dim, (h + 1) * head_dim)
        qh = q_all[:, sl]                                  # 1/sqrt(d) already folded in
        kh = k_all[:, sl]
        vh = v_all[:, sl]
        s = jax.lax.dot_general(qh, kh, (((1,), (1,)), ((), ())),
                                preferred_element_type=jnp.float32)    # (tq, tk)
        m_prev = m_sc[h]                                   # (tq, 1)
        m_new = jnp.maximum(m_prev, jnp.max(s, axis=-1, keepdims=True))
        alpha = jnp.exp(m_prev - m_new)
        p = jnp.exp(s - m_new)                             # (tq, tk) f32
        l_sc[h] = alpha * l_sc[h] + jnp.sum(p, axis=-1, keepdims=True)
        pv = jax.lax.dot_general(p.astype(vh.dtype), vh, (((1,), (0,)), ((), ())),
                                 preferred_element_type=jnp.float32)   # (tq, hd)
        acc_sc[h] = alpha * acc_sc[h] + pv
        m_sc[h] = m_new

    @pl.when(kv_idx == pl.num_programs(3) - 1)
    def _finalize():
        outs = []
        for h in range(heads_per_block):
            inv_l = pl.reciprocal(l_sc[h], approx=True)    # EUP slot, off the VALU
            outs.append((acc_sc[h] * inv_l).astype(o_ref.dtype))
        o_ref[0] = jnp.concatenate(outs, axis=-1)          # one lane-dense store


def flash_attention(q, k, v, num_heads, *, q_tile=None, kv_tile=1024, head_target=512):
    """softmax(q k^T) v (q pre-scaled), flash-tiled, q/k/v/out all in (B, L, H*hd)."""
    B, L, F = q.shape
    hd = F // num_heads
    hb = _pick_heads_per_block(num_heads, hd, head_target)
    tn = hb * hd
    if q_tile is None:
        q_tile = 1024 if _BIG_VMEM else 512                # pushes AI past the HBM knee
    tq = _pick_tile(L, q_tile)
    tk = _pick_tile(L, kv_tile)

    grid = (B, num_heads // hb, L // tq, L // tk)
    q_spec = pl.BlockSpec((1, tq, tn), lambda b, h, qi, ki: (b, qi, h))
    kv_spec = pl.BlockSpec((1, tk, tn), lambda b, h, qi, ki: (b, ki, h))
    o_spec = pl.BlockSpec((1, tq, tn), lambda b, h, qi, ki: (b, qi, h))

    itemsize = jnp.dtype(q.dtype).itemsize
    cost = pl.CostEstimate(
        flops=int(4 * B * num_heads * L * L * hd),
        transcendentals=int(B * num_heads * L * L),
        bytes_accessed=int(4 * itemsize * B * L * F),
    )
    return pl.pallas_call(
        functools.partial(_flash_attn_kernel, heads_per_block=hb, head_dim=hd),
        out_shape=jax.ShapeDtypeStruct((B, L, F), q.dtype),
        grid=grid,
        in_specs=[q_spec, kv_spec, kv_spec],
        out_specs=o_spec,
        scratch_shapes=[
            pltpu.VMEM((hb, tq, 1), jnp.float32),   # running max m
            pltpu.VMEM((hb, tq, 1), jnp.float32),   # running denom l
            pltpu.VMEM((hb, tq, hd), jnp.float32),  # output accumulator
        ],
        compiler_params=pltpu.CompilerParams(
            dimension_semantics=("parallel", "parallel", "parallel", "arbitrary"),
            vmem_limit_bytes=_VMEM_LIMIT),
        cost_estimate=cost,
    )(q, k, v)


# ----------------------------------------------------------------------------
# tiled output projections (full-K row panel, no reduction grid axis)
# ----------------------------------------------------------------------------
def _linear_kernel(x_ref, w_ref, b_ref, o_ref):
    o_ref[0] = (jnp.dot(x_ref[0], w_ref[...], preferred_element_type=jnp.float32)
                + b_ref[...]).astype(o_ref.dtype)


def linear(x, w, b, *, rows=None, m_tile=None, n_tile=512):
    """out = x[:, :rows] @ w + b, tiled over (rows, Dout); K kept whole so the row panel
    stays resident across the Dout sweep (no weight/accumulator re-streaming)."""
    B, L, K = x.shape
    Dout = w.shape[1]
    if rows is None:
        rows = L
    if m_tile is None:
        m_tile = 2048 if _BIG_VMEM else 1024
    tm = _pick_tile(rows, m_tile)
    if rows != L and tm % 8 != 0:
        x = x[:, :rows]                                    # rare fallback (tiny copy)
        L = rows
    tn = _pick_tile(Dout, n_tile)
    w = w.astype(x.dtype)
    b2 = b.reshape(1, Dout).astype(jnp.float32)

    grid = (B, rows // tm, Dout // tn)
    itemsize = jnp.dtype(x.dtype).itemsize
    cost = pl.CostEstimate(
        flops=int(2 * B * rows * K * Dout),
        transcendentals=0,
        bytes_accessed=int(itemsize * (B * rows * K + (rows // tm) * B * K * Dout
                                       + B * rows * Dout)),
    )
    return pl.pallas_call(
        _linear_kernel,
        out_shape=jax.ShapeDtypeStruct((B, rows, Dout), x.dtype),
        grid=grid,
        in_specs=[
            pl.BlockSpec((1, tm, K), lambda bi, i, j: (bi, i, 0)),
            pl.BlockSpec((K, tn), lambda bi, i, j: (0, j)),
            pl.BlockSpec((1, tn), lambda bi, i, j: (0, j)),
        ],
        out_specs=pl.BlockSpec((1, tm, tn), lambda bi, i, j: (bi, i, j)),
        compiler_params=pltpu.CompilerParams(
            dimension_semantics=("parallel", "parallel", "parallel"),
            vmem_limit_bytes=_VMEM_LIMIT),
        cost_estimate=cost,
    )(x, w, b2)


# ----------------------------------------------------------------------------
# full forward pass
# ----------------------------------------------------------------------------
def asymmetric_attention_forward(params, x, y, scale_x, scale_y, crop_y,
                                 rope_cos, rope_sin, num_heads):
    B, Nx, Dx = x.shape
    _, Ny, Dy = y.shape
    hd = Dx // num_heads
    L_total = Nx + crop_y
    q_scale = 1.0 / math.sqrt(hd)

    # split the packed qkv weights/biases once (columns ordered [q | k | v])
    wq_x, wk_x, wv_x = (params["w_qkv_x"][:, i * Dx:(i + 1) * Dx] for i in range(3))
    bq_x, bk_x, bv_x = (params["b_qkv_x"][i * Dx:(i + 1) * Dx] for i in range(3))
    wq_y, wk_y, wv_y = (params["w_qkv_y"][:, i * Dx:(i + 1) * Dx] for i in range(3))
    bq_y, bk_y, bv_y = (params["b_qkv_y"][i * Dx:(i + 1) * Dx] for i in range(3))

    # expand interleaved real-RoPE tables (N, H, hd/2) -> flat (N, H*hd) feature layout
    cos_rep = jnp.repeat(rope_cos, 2, axis=-1).reshape(Nx, Dx)
    sin_rep = jnp.repeat(rope_sin, 2, axis=-1).reshape(Nx, Dx)

    # fused mod-RMSNorm + QKV + per-head RMSNorm (+ RoPE + 1/sqrt(hd) on q).
    # The x stream is written straight into joint-length buffers (rows [0, Nx)).
    q_x, k_x, v_x = fused_qkv(x, scale_x, wq_x, wk_x, wv_x, bq_x, bk_x, bv_x,
                              params["q_norm_x"], params["k_norm_x"], num_heads,
                              rope_cos_rep=cos_rep, rope_sin_rep=sin_rep,
                              q_scale=q_scale, out_len=L_total)
    q_y, k_y, v_y = fused_qkv(y, scale_y, wq_y, wk_y, wv_y, bq_y, bk_y, bv_y,
                              params["q_norm_y"], params["k_norm_y"], num_heads,
                              q_scale=q_scale)

    if q_x.shape[1] == L_total:
        # drop the tiny y-crop rows into the joint buffers (XLA does this DUS in place)
        dt = q_x.dtype
        q = jax.lax.dynamic_update_slice(q_x, q_y[:, :crop_y].astype(dt), (0, Nx, 0))
        k = jax.lax.dynamic_update_slice(k_x, k_y[:, :crop_y].astype(dt), (0, Nx, 0))
        v = jax.lax.dynamic_update_slice(v_x, v_y[:, :crop_y].astype(dt), (0, Nx, 0))
    else:  # fallback when Nx can't be expressed as whole output blocks
        q = jnp.concatenate([q_x, q_y[:, :crop_y]], axis=1)
        k = jnp.concatenate([k_x, k_y[:, :crop_y]], axis=1)
        v = jnp.concatenate([v_x, v_y[:, :crop_y]], axis=1)

    # joint attention over [x tokens ; first crop_y y tokens]; still (B, L, H*hd)
    xy = flash_attention(q, k, v, num_heads)                 # (B, Nx + crop_y, Dx)

    # proj_x reads its rows straight out of xy via the BlockSpec (no slice copy)
    x_out = linear(xy, params["w_proj_x"], params["b_proj_x"], rows=Nx)

    # proj_y only on the crop_y rows; padded rows equal proj_y(0) == bias
    y_crop = linear(xy[:, Nx:], params["w_proj_y"], params["b_proj_y"])
    y_out = jnp.zeros((B, Ny, Dy), y_crop.dtype) + params["b_proj_y"].astype(y_crop.dtype)
    y_out = y_out.at[:, :crop_y].set(y_crop)
    return x_out, y_out


# ----------------------------------------------------------------------------
# pure-JAX reference (numeric sanity check of the Pallas path)
# ----------------------------------------------------------------------------
def rms_norm_head(x, weight, eps=1e-5):
    xf = x.astype(jnp.float32)
    ms = jnp.mean(xf * xf, axis=-1, keepdims=True)
    return (xf * jax.lax.rsqrt(ms + eps) * weight.astype(jnp.float32)).astype(x.dtype)


def apply_rotary_emb_qk_real(xqk, freqs_cos, freqs_sin):
    x_even = xqk[..., 0::2].astype(jnp.float32)
    x_odd = xqk[..., 1::2].astype(jnp.float32)
    cos_part = x_even * freqs_cos - x_odd * freqs_sin
    sin_part = x_even * freqs_sin + x_odd * freqs_cos
    out = jnp.stack([cos_part, sin_part], axis=-1)
    return out.reshape(xqk.shape).astype(xqk.dtype)


def reference_forward(params, x, y, scale_x, scale_y, crop_y,
                      rope_cos, rope_sin, num_heads):
    hp = jax.lax.Precision.HIGHEST
    B, Nx, Dx = x.shape
    _, Ny, Dy = y.shape
    hd = Dx // num_heads

    def mod_rms(v, s, eps=1e-6):
        ms = jnp.mean(v * v, axis=-1, keepdims=True)
        return v * jax.lax.rsqrt(ms + eps) * (1.0 + s[:, None, :])

    xm = mod_rms(x, scale_x)
    ym = mod_rms(y, scale_y)
    qkv_x = jnp.einsum("bld,de->ble", xm, params["w_qkv_x"], precision=hp) + params["b_qkv_x"]
    qkv_y = jnp.einsum("bld,de->ble", ym, params["w_qkv_y"], precision=hp) + params["b_qkv_y"]
    qkv_x = qkv_x.reshape(B, Nx, 3, num_heads, hd)
    qkv_y = qkv_y.reshape(B, Ny, 3, num_heads, hd)
    q_x = apply_rotary_emb_qk_real(rms_norm_head(qkv_x[:, :, 0], params["q_norm_x"]), rope_cos, rope_sin)
    k_x = apply_rotary_emb_qk_real(rms_norm_head(qkv_x[:, :, 1], params["k_norm_x"]), rope_cos, rope_sin)
    v_x = qkv_x[:, :, 2]
    q_y = rms_norm_head(qkv_y[:, :, 0], params["q_norm_y"])
    k_y = rms_norm_head(qkv_y[:, :, 1], params["k_norm_y"])
    v_y = qkv_y[:, :, 2]

    q = jnp.concatenate([q_x, q_y[:, :crop_y]], axis=1).transpose(0, 2, 1, 3)
    k = jnp.concatenate([k_x, k_y[:, :crop_y]], axis=1).transpose(0, 2, 1, 3)
    v = jnp.concatenate([v_x, v_y[:, :crop_y]], axis=1).transpose(0, 2, 1, 3)
    s = jnp.einsum("bhqd,bhkd->bhqk", q, k, precision=hp) / (hd ** 0.5)
    p = jax.nn.softmax(s, axis=-1)
    xy = jnp.einsum("bhqk,bhkd->bhqd", p, v, precision=hp)
    xy = xy.transpose(0, 2, 1, 3).reshape(B, Nx + crop_y, Dx)

    x_out = jnp.einsum("bld,de->ble", xy[:, :Nx], params["w_proj_x"], precision=hp) + params["b_proj_x"]
    o = jnp.zeros((B, Ny, Dx), xy.dtype).at[:, :crop_y].set(xy[:, Nx:])
    y_out = jnp.einsum("bld,de->ble", o, params["w_proj_y"], precision=hp) + params["b_proj_y"]
    return x_out, y_out


# ----------------------------------------------------------------------------
if __name__ == "__main__":
    B, Nx, Ny, crop_y = 2, 64, 16, 12
    num_heads, head_dim = 4, 32
    dim_x, dim_y = num_heads * head_dim, 64        # 128, 64

    key = jax.random.PRNGKey(0)
    ks = jax.random.split(key, 20)
    f32 = jnp.float32
    params = {
        "w_qkv_x": 0.02 * jax.random.normal(ks[0], (dim_x, 3 * dim_x), f32),
        "b_qkv_x": 0.02 * jax.random.normal(ks[1], (3 * dim_x,), f32),
        "w_qkv_y": 0.02 * jax.random.normal(ks[2], (dim_y, 3 * dim_x), f32),
        "b_qkv_y": 0.02 * jax.random.normal(ks[3], (3 * dim_x,), f32),
        "q_norm_x": 1.0 + 0.1 * jax.random.normal(ks[4], (head_dim,), f32),
        "k_norm_x": 1.0 + 0.1 * jax.random.normal(ks[5], (head_dim,), f32),
        "q_norm_y": 1.0 + 0.1 * jax.random.normal(ks[6], (head_dim,), f32),
        "k_norm_y": 1.0 + 0.1 * jax.random.normal(ks[7], (head_dim,), f32),
        "w_proj_x": 0.02 * jax.random.normal(ks[8], (dim_x, dim_x), f32),
        "b_proj_x": 0.02 * jax.random.normal(ks[9], (dim_x,), f32),
        "w_proj_y": 0.02 * jax.random.normal(ks[10], (dim_x, dim_y), f32),
        "b_proj_y": 0.02 * jax.random.normal(ks[11], (dim_y,), f32),
    }

    x = jax.random.normal(ks[12], (B, Nx, dim_x), f32)
    y = jax.random.normal(ks[13], (B, Ny, dim_y), f32)
    scale_x = 0.1 * jax.random.normal(ks[14], (B, dim_x), f32)
    scale_y = 0.1 * jax.random.normal(ks[15], (B, dim_y), f32)

    # interleaved real-RoPE tables: (N_x, num_heads, head_dim // 2)
    pos = jnp.arange(Nx, dtype=f32)[:, None, None]
    inv_freq = 1.0 / (10000.0 ** (jnp.arange(head_dim // 2, dtype=f32) / (head_dim // 2)))
    angles = pos * inv_freq[None, None, :]
    angles = jnp.broadcast_to(angles, (Nx, num_heads, head_dim // 2))
    rope_cos = jnp.cos(angles)
    rope_sin = jnp.sin(angles)

    # ---- f32 run (tight check vs f32 reference) ----
    x_out, y_out = asymmetric_attention_forward(
        params, x, y, scale_x, scale_y, crop_y, rope_cos, rope_sin, num_heads)
    jax.block_until_ready((x_out, y_out))

    x_ref, y_ref = reference_forward(
        params, x, y, scale_x, scale_y, crop_y, rope_cos, rope_sin, num_heads)
    assert x_out.shape == (B, Nx, dim_x) and y_out.shape == (B, Ny, dim_y)
    assert jnp.allclose(x_out, x_ref, atol=1e-2, rtol=1e-2)
    assert jnp.allclose(y_out, y_ref, atol=1e-2, rtol=1e-2)

    # ---- bf16 run (recommended production mode: bf16 MXU operands, f32 accumulation) ----
    params_bf16 = {kk: (vv.astype(jnp.bfloat16) if kk.startswith("w_") else vv)
                   for kk, vv in params.items()}
    x_out_b, y_out_b = asymmetric_attention_forward(
        params_bf16, x.astype(jnp.bfloat16), y.astype(jnp.bfloat16),
        scale_x, scale_y, crop_y, rope_cos, rope_sin, num_heads)
    jax.block_until_ready((x_out_b, y_out_b))
    assert jnp.allclose(x_out_b.astype(f32), x_ref, atol=1e-1, rtol=1e-1)
    assert jnp.allclose(y_out_b.astype(f32), y_ref, atol=1e-1, rtol=1e-1)

    # TODO(synk): attn_drop (dropout) is 0.0 in the reference config and is not implemented.
    print("KERNEL_OK")
</pallas_src>

<mosaic_0001>
module attributes {stable_mosaic.version = 11 : i64} {
  func.func @_fused_qkv_kernel(%arg0: i32, %arg1: i32, %arg2: i32, %arg3: memref<1x64x128xf32, #tpu.memory_space<vmem>>, %arg4: memref<1x1x128xf32, #tpu.memory_space<vmem>>, %arg5: memref<128x128xf32, #tpu.memory_space<vmem>>, %arg6: memref<128x128xf32, #tpu.memory_space<vmem>>, %arg7: memref<128x128xf32, #tpu.memory_space<vmem>>, %arg8: memref<1x128xf32, #tpu.memory_space<vmem>>, %arg9: memref<1x128xf32, #tpu.memory_space<vmem>>, %arg10: memref<1x128xf32, #tpu.memory_space<vmem>>, %arg11: memref<1x128xf32, #tpu.memory_space<vmem>>, %arg12: memref<1x128xf32, #tpu.memory_space<vmem>>, %arg13: memref<128x128xbf16, #tpu.memory_space<vmem>>, %arg14: memref<64x128xbf16, #tpu.memory_space<vmem>>, %arg15: memref<64x128xbf16, #tpu.memory_space<vmem>>, %arg16: memref<1x64x128xf32, #tpu.memory_space<vmem>>, %arg17: memref<1x64x128xf32, #tpu.memory_space<vmem>>, %arg18: memref<1x64x128xf32, #tpu.memory_space<vmem>>) attributes {dimension_semantics = [#tpu.dimension_semantics<parallel>, #tpu.dimension_semantics<parallel>, #tpu.dimension_semantics<parallel>], iteration_bounds = array<i64: 2, 1, 1>, scalar_prefetch = 0 : i64, scratch_operands = 0 : i64, tpu.core_type = #tpu.core_type<tc>, window_params = [{transform_indices = @transform_0, window_bounds = array<i64: 1, 64, 128>}, {transform_indices = @transform_1, window_bounds = array<i64: 1, 1, 128>}, {transform_indices = @transform_2, window_bounds = array<i64: 128, 128>}, {transform_indices = @transform_3, window_bounds = array<i64: 128, 128>}, {transform_indices = @transform_4, window_bounds = array<i64: 128, 128>}, {transform_indices = @transform_5, window_bounds = array<i64: 1, 128>}, {transform_indices = @transform_6, window_bounds = array<i64: 1, 128>}, {transform_indices = @transform_7, window_bounds = array<i64: 1, 128>}, {transform_indices = @transform_8, window_bounds = array<i64: 1, 128>}, {transform_indices = @transform_9, window_bounds = array<i64: 1, 128>}, {pipeline_mode = #tpu.pipeline_mode<synchronous>, transform_indices = @transform_10, window_bounds = array<i64: 128, 128>}, {transform_indices = @transform_11, window_bounds = array<i64: 64, 128>}, {transform_indices = @transform_12, window_bounds = array<i64: 64, 128>}, {transform_indices = @transform_13, window_bounds = array<i64: 1, 64, 128>}, {transform_indices = @transform_14, window_bounds = array<i64: 1, 64, 128>}, {transform_indices = @transform_15, window_bounds = array<i64: 1, 64, 128>}]} {
    %c0 = arith.constant 0 : index
    %c0_0 = arith.constant 0 : index
    %c0_1 = arith.constant 0 : index
    %0 = vector.load %arg3[%c0, %c0_0, %c0_1] : memref<1x64x128xf32, #tpu.memory_space<vmem>>, vector<1x64x128xf32>
    %1 = vector.shape_cast %0 : vector<1x64x128xf32> to vector<64x128xf32>
    %c0_2 = arith.constant 0 : index
    %c0_3 = arith.constant 0 : index
    %c0_4 = arith.constant 0 : index
    %2 = vector.load %arg4[%c0_2, %c0_3, %c0_4] : memref<1x1x128xf32, #tpu.memory_space<vmem>>, vector<1x1x128xf32>
    %3 = vector.shape_cast %2 : vector<1x1x128xf32> to vector<1x128xf32>
    %4 = arith.mulf %1, %1 : vector<64x128xf32>
    %cst = arith.constant dense<0.000000e+00> : vector<64xf32>
    %5 = vector.multi_reduction <add>, %4, %cst [1] : vector<64x128xf32> to vector<64xf32>
    %6 = vector.shape_cast %5 : vector<64xf32> to vector<64x1xf32>
    %cst_5 = arith.constant 1.280000e+02 : f32
    %7 = vector.broadcast %cst_5 : f32 to vector<64x1xf32>
    %8 = arith.divf %6, %7 : vector<64x1xf32>
    %cst_6 = arith.constant 9.99999997E-7 : f32
    %9 = vector.broadcast %cst_6 : f32 to vector<64x1xf32>
    %10 = arith.addf %8, %9 : vector<64x1xf32>
    %11 = math.rsqrt %10 : vector<64x1xf32>
    %12 = vector.broadcast %11 : vector<64x1xf32> to vector<64x128xf32>
    %13 = arith.mulf %1, %12 : vector<64x128xf32>
    %cst_7 = arith.constant 1.000000e+00 : f32
    %14 = vector.broadcast %cst_7 : f32 to vector<1x128xf32>
    %15 = arith.addf %14, %3 : vector<1x128xf32>
    %16 = vector.broadcast %15 : vector<1x128xf32> to vector<64x128xf32>
    %17 = arith.mulf %13, %16 : vector<64x128xf32>
    %c0_8 = arith.constant 0 : index
    %c0_9 = arith.constant 0 : index
    %18 = vector.load %arg5[%c0_8, %c0_9] : memref<128x128xf32, #tpu.memory_space<vmem>>, vector<128x128xf32>
    %cst_10 = arith.constant dense<0.000000e+00> : vector<64x128xf32>
    %19 = tpu.matmul %17, %18, %cst_10 {dimension_numbers = #tpu.dot_dimension_numbers<[1], [0], [0], [1], [0, 0, 1, 1], [], []>} : vector<64x128xf32>, vector<128x128xf32>, vector<64x128xf32> -> vector<64x128xf32>
    %c0_11 = arith.constant 0 : index
    %c0_12 = arith.constant 0 : index
    %20 = vector.load %arg8[%c0_11, %c0_12] : memref<1x128xf32, #tpu.memory_space<vmem>>, vector<1x128xf32>
    %21 = vector.broadcast %20 : vector<1x128xf32> to vector<64x128xf32>
    %22 = arith.addf %19, %21 : vector<64x128xf32>
    %c0_13 = arith.constant 0 : index
    %c0_14 = arith.constant 0 : index
    %23 = vector.load %arg6[%c0_13, %c0_14] : memref<128x128xf32, #tpu.memory_space<vmem>>, vector<128x128xf32>
    %cst_15 = arith.constant dense<0.000000e+00> : vector<64x128xf32>
    %24 = tpu.matmul %17, %23, %cst_15 {dimension_numbers = #tpu.dot_dimension_numbers<[1], [0], [0], [1], [0, 0, 1, 1], [], []>} : vector<64x128xf32>, vector<128x128xf32>, vector<64x128xf32> -> vector<64x128xf32>
    %c0_16 = arith.constant 0 : index
    %c0_17 = arith.constant 0 : index
    %25 = vector.load %arg9[%c0_16, %c0_17] : memref<1x128xf32, #tpu.memory_space<vmem>>, vector<1x128xf32>
    %26 = vector.broadcast %25 : vector<1x128xf32> to vector<64x128xf32>
    %27 = arith.addf %24, %26 : vector<64x128xf32>
    %c0_18 = arith.constant 0 : index
    %c0_19 = arith.constant 0 : index
    %28 = vector.load %arg7[%c0_18, %c0_19] : memref<128x128xf32, #tpu.memory_space<vmem>>, vector<128x128xf32>
    %cst_20 = arith.constant dense<0.000000e+00> : vector<64x128xf32>
    %29 = tpu.matmul %17, %28, %cst_20 {dimension_numbers = #tpu.dot_dimension_numbers<[1], [0], [0], [1], [0, 0, 1, 1], [], []>} : vector<64x128xf32>, vector<128x128xf32>, vector<64x128xf32> -> vector<64x128xf32>
    %c0_21 = arith.constant 0 : index
    %c0_22 = arith.constant 0 : index
    %30 = vector.load %arg10[%c0_21, %c0_22] : memref<1x128xf32, #tpu.memory_space<vmem>>, vector<1x128xf32>
    %31 = vector.broadcast %30 : vector<1x128xf32> to vector<64x128xf32>
    %32 = arith.addf %29, %31 : vector<64x128xf32>
    %c0_23 = arith.constant 0 : index
    %c0_24 = arith.constant 0 : index
    %33 = vector.load %arg11[%c0_23, %c0_24] : memref<1x128xf32, #tpu.memory_space<vmem>>, vector<1x128xf32>
    %34 = vector.extract_strided_slice %22 {offsets = [0, 0], sizes = [64, 32], strides = [1, 1]} : vector<64x128xf32> to vector<64x32xf32>
    %35 = arith.mulf %34, %34 : vector<64x32xf32>
    %cst_25 = arith.constant dense<0.000000e+00> : vector<64xf32>
    %36 = vector.multi_reduction <add>, %35, %cst_25 [1] : vector<64x32xf32> to vector<64xf32>
    %37 = vector.shape_cast %36 : vector<64xf32> to vector<64x1xf32>
    %cst_26 = arith.constant 3.200000e+01 : f32
    %38 = vector.broadcast %cst_26 : f32 to vector<64x1xf32>
    %39 = arith.divf %37, %38 : vector<64x1xf32>
    %cst_27 = arith.constant 9.99999974E-6 : f32
    %40 = vector.broadcast %cst_27 : f32 to vector<64x1xf32>
    %41 = arith.addf %39, %40 : vector<64x1xf32>
    %42 = math.rsqrt %41 : vector<64x1xf32>
    %43 = vector.broadcast %42 : vector<64x1xf32> to vector<64x32xf32>
    %44 = arith.mulf %34, %43 : vector<64x32xf32>
    %45 = vector.extract_strided_slice %22 {offsets = [0, 32], sizes = [64, 32], strides = [1, 1]} : vector<64x128xf32> to vector<64x32xf32>
    %46 = arith.mulf %45, %45 : vector<64x32xf32>
    %cst_28 = arith.constant dense<0.000000e+00> : vector<64xf32>
    %47 = vector.multi_reduction <add>, %46, %cst_28 [1] : vector<64x32xf32> to vector<64xf32>
    %48 = vector.shape_cast %47 : vector<64xf32> to vector<64x1xf32>
    %cst_29 = arith.constant 3.200000e+01 : f32
    %49 = vector.broadcast %cst_29 : f32 to vector<64x1xf32>
    %50 = arith.divf %48, %49 : vector<64x1xf32>
    %cst_30 = arith.constant 9.99999974E-6 : f32
    %51 = vector.broadcast %cst_30 : f32 to vector<64x1xf32>
    %52 = arith.addf %50, %51 : vector<64x1xf32>
    %53 = math.rsqrt %52 : vector<64x1xf32>
    %54 = vector.broadcast %53 : vector<64x1xf32> to vector<64x32xf32>
    %55 = arith.mulf %45, %54 : vector<64x32xf32>
    %56 = vector.extract_strided_slice %22 {offsets = [0, 64], sizes = [64, 32], strides = [1, 1]} : vector<64x128xf32> to vector<64x32xf32>
    %57 = arith.mulf %56, %56 : vector<64x32xf32>
    %cst_31 = arith.constant dense<0.000000e+00> : vector<64xf32>
    %58 = vector.multi_reduction <add>, %57, %cst_31 [1] : vector<64x32xf32> to vector<64xf32>
    %59 = vector.shape_cast %58 : vector<64xf32> to vector<64x1xf32>
    %cst_32 = arith.constant 3.200000e+01 : f32
    %60 = vector.broadcast %cst_32 : f32 to vector<64x1xf32>
    %61 = arith.divf %59, %60 : vector<64x1xf32>
    %cst_33 = arith.constant 9.99999974E-6 : f32
    %62 = vector.broadcast %cst_33 : f32 to vector<64x1xf32>
    %63 = arith.addf %61, %62 : vector<64x1xf32>
    %64 = math.rsqrt %63 : vector<64x1xf32>
    %65 = vector.broadcast %64 : vector<64x1xf32> to vector<64x32xf32>
    %66 = arith.mulf %56, %65 : vector<64x32xf32>
    %67 = vector.extract_strided_slice %22 {offsets = [0, 96], sizes = [64, 32], strides = [1, 1]} : vector<64x128xf32> to vector<64x32xf32>
    %68 = arith.mulf %67, %67 : vector<64x32xf32>
    %cst_34 = arith.constant dense<0.000000e+00> : vector<64xf32>
    %69 = vector.multi_reduction <add>, %68, %cst_34 [1] : vector<64x32xf32> to vector<64xf32>
    %70 = vector.shape_cast %69 : vector<64xf32> to vector<64x1xf32>
    %cst_35 = arith.constant 3.200000e+01 : f32
    %71 = vector.broadcast %cst_35 : f32 to vector<64x1xf32>
    %72 = arith.divf %70, %71 : vector<64x1xf32>
    %cst_36 = arith.constant 9.99999974E-6 : f32
    %73 = vector.broadcast %cst_36 : f32 to vector<64x1xf32>
    %74 = arith.addf %72, %73 : vector<64x1xf32>
    %75 = math.rsqrt %74 : vector<64x1xf32>
    %76 = vector.broadcast %75 : vector<64x1xf32> to vector<64x32xf32>
    %77 = arith.mulf %67, %76 : vector<64x32xf32>
    %78 = tpu.concatenate %44, %55, %66, %77 in 1 : vector<64x32xf32>, vector<64x32xf32>, vector<64x32xf32>, vector<64x32xf32> -> vector<64x128xf32>
    %79 = vector.broadcast %33 : vector<1x128xf32> to vector<64x128xf32>
    %80 = arith.mulf %78, %79 : vector<64x128xf32>
    %c0_37 = arith.constant 0 : index
    %c0_38 = arith.constant 0 : index
    %81 = vector.load %arg12[%c0_37, %c0_38] : memref<1x128xf32, #tpu.memory_space<vmem>>, vector<1x128xf32>
    %82 = vector.extract_strided_slice %27 {offsets = [0, 0], sizes = [64, 32], strides = [1, 1]} : vector<64x128xf32> to vector<64x32xf32>
    %83 = arith.mulf %82, %82 : vector<64x32xf32>
    %cst_39 = arith.constant dense<0.000000e+00> : vector<64xf32>
    %84 = vector.multi_reduction <add>, %83, %cst_39 [1] : vector<64x32xf32> to vector<64xf32>
    %85 = vector.shape_cast %84 : vector<64xf32> to vector<64x1xf32>
    %cst_40 = arith.constant 3.200000e+01 : f32
    %86 = vector.broadcast %cst_40 : f32 to vector<64x1xf32>
    %87 = arith.divf %85, %86 : vector<64x1xf32>
    %cst_41 = arith.constant 9.99999974E-6 : f32
    %88 = vector.broadcast %cst_41 : f32 to vector<64x1xf32>
    %89 = arith.addf %87, %88 : vector<64x1xf32>
    %90 = math.rsqrt %89 : vector<64x1xf32>
    %91 = vector.broadcast %90 : vector<64x1xf32> to vector<64x32xf32>
    %92 = arith.mulf %82, %91 : vector<64x32xf32>
    %93 = vector.extract_strided_slice %27 {offsets = [0, 32], sizes = [64, 32], strides = [1, 1]} : vector<64x128xf32> to vector<64x32xf32>
    %94 = arith.mulf %93, %93 : vector<64x32xf32>
    %cst_42 = arith.constant dense<0.000000e+00> : vector<64xf32>
    %95 = vector.multi_reduction <add>, %94, %cst_42 [1] : vector<64x32xf32> to vector<64xf32>
    %96 = vector.shape_cast %95 : vector<64xf32> to vector<64x1xf32>
    %cst_43 = arith.constant 3.200000e+01 : f32
    %97 = vector.broadcast %cst_43 : f32 to vector<64x1xf32>
    %98 = arith.divf %96, %97 : vector<64x1xf32>
    %cst_44 = arith.constant 9.99999974E-6 : f32
    %99 = vector.broadcast %cst_44 : f32 to vector<64x1xf32>
    %100 = arith.addf %98, %99 : vector<64x1xf32>
    %101 = math.rsqrt %100 : vector<64x1xf32>
    %102 = vector.broadcast %101 : vector<64x1xf32> to vector<64x32xf32>
    %103 = arith.mulf %93, %102 : vector<64x32xf32>
    %104 = vector.extract_strided_slice %27 {offsets = [0, 64], sizes = [64, 32], strides = [1, 1]} : vector<64x128xf32> to vector<64x32xf32>
    %105 = arith.mulf %104, %104 : vector<64x32xf32>
    %cst_45 = arith.constant dense<0.000000e+00> : vector<64xf32>
    %106 = vector.multi_reduction <add>, %105, %cst_45 [1] : vector<64x32xf32> to vector<64xf32>
    %107 = vector.shape_cast %106 : vector<64xf32> to vector<64x1xf32>
    %cst_46 = arith.constant 3.200000e+01 : f32
    %108 = vector.broadcast %cst_46 : f32 to vector<64x1xf32>
    %109 = arith.divf %107, %108 : vector<64x1xf32>
    %cst_47 = arith.constant 9.99999974E-6 : f32
    %110 = vector.broadcast %cst_47 : f32 to vector<64x1xf32>
    %111 = arith.addf %109, %110 : vector<64x1xf32>
    %112 = math.rsqrt %111 : vector<64x1xf32>
    %113 = vector.broadcast %112 : vector<64x1xf32> to vector<64x32xf32>
    %114 = arith.mulf %104, %113 : vector<64x32xf32>
    %115 = vector.extract_strided_slice %27 {offsets = [0, 96], sizes = [64, 32], strides = [1, 1]} : vector<64x128xf32> to vector<64x32xf32>
    %116 = arith.mulf %115, %115 : vector<64x32xf32>
    %cst_48 = arith.constant dense<0.000000e+00> : vector<64xf32>
    %117 = vector.multi_reduction <add>, %116, %cst_48 [1] : vector<64x32xf32> to vector<64xf32>
    %118 = vector.shape_cast %117 : vector<64xf32> to vector<64x1xf32>
    %cst_49 = arith.constant 3.200000e+01 : f32
    %119 = vector.broadcast %cst_49 : f32 to vector<64x1xf32>
    %120 = arith.divf %118, %119 : vector<64x1xf32>
    %cst_50 = arith.constant 9.99999974E-6 : f32
    %121 = vector.broadcast %cst_50 : f32 to vector<64x1xf32>
    %122 = arith.addf %120, %121 : vector<64x1xf32>
    %123 = math.rsqrt %122 : vector<64x1xf32>
    %124 = vector.broadcast %123 : vector<64x1xf32> to vector<64x32xf32>
    %125 = arith.mulf %115, %124 : vector<64x32xf32>
    %126 = tpu.concatenate %92, %103, %114, %125 in 1 : vector<64x32xf32>, vector<64x32xf32>, vector<64x32xf32>, vector<64x32xf32> -> vector<64x128xf32>
    %127 = vector.broadcast %81 : vector<1x128xf32> to vector<64x128xf32>
    %128 = arith.mulf %126, %127 : vector<64x128xf32>
    %c0_51 = arith.constant 0 : index
    %c0_52 = arith.constant 0 : index
    %129 = vector.load %arg14[%c0_51, %c0_52] : memref<64x128xbf16, #tpu.memory_space<vmem>>, vector<64x128xbf16>
    %130 = arith.extf %129 : vector<64x128xbf16> to vector<64x128xf32>
    %c0_53 = arith.constant 0 : index
    %c0_54 = arith.constant 0 : index
    %131 = vector.load %arg15[%c0_53, %c0_54] : memref<64x128xbf16, #tpu.memory_space<vmem>>, vector<64x128xbf16>
    %132 = arith.extf %131 : vector<64x128xbf16> to vector<64x128xf32>
    %c0_55 = arith.constant 0 : index
    %c0_56 = arith.constant 0 : index
    %133 = vector.load %arg13[%c0_55, %c0_56] : memref<128x128xbf16, #tpu.memory_space<vmem>>, vector<128x128xbf16>
    %134 = arith.mulf %80, %130 : vector<64x128xf32>
    %135 = arith.truncf %80 : vector<64x128xf32> to vector<64x128xbf16>
    %cst_57 = arith.constant dense<0.000000e+00> : vector<64x128xf32>
    %136 = tpu.matmul %135, %133, %cst_57 {dimension_numbers = #tpu.dot_dimension_numbers<[1], [0], [0], [1], [0, 0, 1, 1], [], []>} : vector<64x128xbf16>, vector<128x128xbf16>, vector<64x128xf32> -> vector<64x128xf32>
    %137 = arith.mulf %136, %132 : vector<64x128xf32>
    %138 = arith.addf %134, %137 : vector<64x128xf32>
    %139 = arith.mulf %128, %130 : vector<64x128xf32>
    %140 = arith.truncf %128 : vector<64x128xf32> to vector<64x128xbf16>
    %cst_58 = arith.constant dense<0.000000e+00> : vector<64x128xf32>
    %141 = tpu.matmul %140, %133, %cst_58 {dimension_numbers = #tpu.dot_dimension_numbers<[1], [0], [0], [1], [0, 0, 1, 1], [], []>} : vector<64x128xbf16>, vector<128x128xbf16>, vector<64x128xf32> -> vector<64x128xf32>
    %142 = arith.mulf %141, %132 : vector<64x128xf32>
    %143 = arith.addf %139, %142 : vector<64x128xf32>
    %cst_59 = arith.constant 0.176776692 : f32
    %144 = vector.broadcast %cst_59 : f32 to vector<64x128xf32>
    %145 = arith.mulf %138, %144 : vector<64x128xf32>
    %c0_60 = arith.constant 0 : index
    %c0_61 = arith.constant 0 : index
    %c0_62 = arith.constant 0 : index
    %146 = vector.load %arg16[%c0_60, %c0_61, %c0_62] : memref<1x64x128xf32, #tpu.memory_space<vmem>>, vector<1x64x128xf32>
    %147 = vector.shape_cast %146 : vector<1x64x128xf32> to vector<64x128xf32>
    %148 = vector.shape_cast %145 : vector<64x128xf32> to vector<1x64x128xf32>
    tpu.vector_store %arg16[%c0_60, %c0_61, %c0_62], %148 {strides = array<i32>} : memref<1x64x128xf32, #tpu.memory_space<vmem>>, vector<1x64x128xf32>,
    %c0_63 = arith.constant 0 : index
    %c0_64 = arith.constant 0 : index
    %c0_65 = arith.constant 0 : index
    %149 = vector.load %arg17[%c0_63, %c0_64, %c0_65] : memref<1x64x128xf32, #tpu.memory_space<vmem>>, vector<1x64x128xf32>
    %150 = vector.shape_cast %149 : vector<1x64x128xf32> to vector<64x128xf32>
    %151 = vector.shape_cast %143 : vector<64x128xf32> to vector<1x64x128xf32>
    tpu.vector_store %arg17[%c0_63, %c0_64, %c0_65], %151 {strides = array<i32>} : memref<1x64x128xf32, #tpu.memory_space<vmem>>, vector<1x64x128xf32>,
    %c0_66 = arith.constant 0 : index
    %c0_67 = arith.constant 0 : index
    %c0_68 = arith.constant 0 : index
    %152 = vector.load %arg18[%c0_66, %c0_67, %c0_68] : memref<1x64x128xf32, #tpu.memory_space<vmem>>, vector<1x64x128xf32>
    %153 = vector.shape_cast %152 : vector<1x64x128xf32> to vector<64x128xf32>
    %154 = vector.shape_cast %32 : vector<64x128xf32> to vector<1x64x128xf32>
    tpu.vector_store %arg18[%c0_66, %c0_67, %c0_68], %154 {strides = array<i32>} : memref<1x64x128xf32, #tpu.memory_space<vmem>>, vector<1x64x128xf32>,
    return
  }
  func.func @transform_0(%arg0: i32, %arg1: i32, %arg2: i32) -> (i32, i32, i32) {
    %c0_i32 = arith.constant 0 : i32
    %c0_i32_0 = arith.constant 0 : i32
    return %arg0, %arg2, %c0_i32 : i32, i32, i32
  }
  func.func @transform_1(%arg0: i32, %arg1: i32, %arg2: i32) -> (i32, i32, i32) {
    %c0_i32 = arith.constant 0 : i32
    %c0_i32_0 = arith.constant 0 : i32
    %c0_i32_1 = arith.constant 0 : i32
    return %arg0, %c0_i32, %c0_i32_0 : i32, i32, i32
  }
  func.func @transform_2(%arg0: i32, %arg1: i32, %arg2: i32) -> (i32, i32) {
    %c0_i32 = arith.constant 0 : i32
    %c0_i32_0 = arith.constant 0 : i32
    return %c0_i32, %arg1 : i32, i32
  }
  func.func @transform_3(%arg0: i32, %arg1: i32, %arg2: i32) -> (i32, i32) {
    %c0_i32 = arith.constant 0 : i32
    %c0_i32_0 = arith.constant 0 : i32
    return %c0_i32, %arg1 : i32, i32
  }
  func.func @transform_4(%arg0: i32, %arg1: i32, %arg2: i32) -> (i32, i32) {
    %c0_i32 = arith.constant 0 : i32
    %c0_i32_0 = arith.constant 0 : i32
    return %c0_i32, %arg1 : i32, i32
  }
  func.func @transform_5(%arg0: i32, %arg1: i32, %arg2: i32) -> (i32, i32) {
    %c0_i32 = arith.constant 0 : i32
    %c0_i32_0 = arith.constant 0 : i32
    return %c0_i32, %arg1 : i32, i32
  }
  func.func @transform_6(%arg0: i32, %arg1: i32, %arg2: i32) -> (i32, i32) {
    %c0_i32 = arith.constant 0 : i32
    %c0_i32_0 = arith.constant 0 : i32
    return %c0_i32, %arg1 : i32, i32
  }
  func.func @transform_7(%arg0: i32, %arg1: i32, %arg2: i32) -> (i32, i32) {
    %c0_i32 = arith.constant 0 : i32
    %c0_i32_0 = arith.constant 0 : i32
    return %c0_i32, %arg1 : i32, i32
  }
  func.func @transform_8(%arg0: i32, %arg1: i32, %arg2: i32) -> (i32, i32) {
    %c0_i32 = arith.constant 0 : i32
    %c0_i32_0 = arith.constant 0 : i32
    return %c0_i32, %arg1 : i32, i32
  }
  func.func @transform_9(%arg0: i32, %arg1: i32, %arg2: i32) -> (i32, i32) {
    %c0_i32 = arith.constant 0 : i32
    %c0_i32_0 = arith.constant 0 : i32
    return %c0_i32, %arg1 : i32, i32
  }
  func.func @transform_10(%arg0: i32, %arg1: i32, %arg2: i32) -> (i32, i32) {
    %c0_i32 = arith.constant 0 : i32
    %c0_i32_0 = arith.constant 0 : i32
    %c0_i32_1 = arith.constant 0 : i32
    return %c0_i32, %c0_i32_0 : i32, i32
  }
  func.func @transform_11(%arg0: i32, %arg1: i32, %arg2: i32) -> (i32, i32) {
    %c0_i32 = arith.constant 0 : i32
    return %arg2, %arg1 : i32, i32
  }
  func.func @transform_12(%arg0: i32, %arg1: i32, %arg2: i32) -> (i32, i32) {
    %c0_i32 = arith.constant 0 : i32
    return %arg2, %arg1 : i32, i32
  }
  func.func @transform_13(%arg0: i32, %arg1: i32, %arg2: i32) -> (i32, i32, i32) {
    %c0_i32 = arith.constant 0 : i32
    return %arg0, %arg2, %arg1 : i32, i32, i32
  }
  func.func @transform_14(%arg0: i32, %arg1: i32, %arg2: i32) -> (i32, i32, i32) {
    %c0_i32 = arith.constant 0 : i32
    return %arg0, %arg2, %arg1 : i32, i32, i32
  }
  func.func @transform_15(%arg0: i32, %arg1: i32, %arg2: i32) -> (i32, i32, i32) {
    %c0_i32 = arith.constant 0 : i32
    return %arg0, %arg2, %arg1 : i32, i32, i32
  }
}

</mosaic_0001>

<llo_original>
// kernel: tpu_custom_call.1
$region0: #{tpu_custom_call.1}
  #allocation0 [shape = 'u32[]', space=smem, size = 0x4, offset = 0x4, fixed_abs, tag = 'smem constant byte address 0x4 - core index']
  #allocation1 [shape = 'u32[144,128]{1,0:T(1,128)}', space=vmem, size = 0x12000, scoped, tag = 'internal scratch']
  %s0 = inlined_call_operand.hbm [shape: f32[2,64,128], index: 0, kind: input, shape index: {}]
  %s1 = inlined_call_operand.vmem [shape: f32[2,1,128], index: 1, kind: input, shape index: {}]
  %s2 = inlined_call_operand.hbm [shape: f32[128,128], index: 2, kind: input, shape index: {}]
  %s3 = inlined_call_operand.hbm [shape: f32[128,128], index: 3, kind: input, shape index: {}]
  %s4 = inlined_call_operand.hbm [shape: f32[128,128], index: 4, kind: input, shape index: {}]
  %s5 = inlined_call_operand.vmem [shape: f32[1,128], index: 5, kind: input, shape index: {}]
  %s6 = inlined_call_operand.vmem [shape: f32[1,128], index: 6, kind: input, shape index: {}]
  %s7 = inlined_call_operand.vmem [shape: f32[1,128], index: 7, kind: input, shape index: {}]
  %s8 = inlined_call_operand.vmem [shape: f32[1,128], index: 8, kind: input, shape index: {}]
  %s9 = inlined_call_operand.vmem [shape: f32[1,128], index: 9, kind: input, shape index: {}]
  %s10 = inlined_call_operand.hbm [shape: bf16[128,128], index: 10, kind: input, shape index: {}]
  %s11 = inlined_call_operand.vmem [shape: bf16[64,128], index: 11, kind: input, shape index: {}]
  %s12 = inlined_call_operand.hbm [shape: bf16[64,128], index: 12, kind: input, shape index: {}]
  %s13 = inlined_call_operand.vmem [shape: f32[2,76,128], index: 13, kind: output, shape index: {0}]
  %s14 = inlined_call_operand.vmem [shape: f32[2,76,128], index: 14, kind: output, shape index: {1}]
  %s15 = inlined_call_operand.vmem [shape: f32[2,76,128], index: 15, kind: output, shape index: {2}]
  %16 = xla_tuple %s13, %s14, %s15
  %s17 = sld [smem:[#allocation0]]
  $region269: #{tpu_custom_call.1} parent=0
    _
  %s19 = ssub.s32 1, %s17
  %s20 = scalar_select 0, %s19, %s17
  $region1: #{tpu_custom_call.1} parent=0
    #allocation2 [shape = 'u8[65536]{0}', space=vmem, size = 0x10000, scoped, tag = 'input window, operand 0']
    #allocation3 [shape = 's32[2]{0}', space=sflag, size = 0x8, scoped, tag = 'scoped memory for tpu_custom_call.1']
    #allocation4 [shape = 'u8[65536]{0}', space=vmem, size = 0x10000, scoped, tag = 'input window, operand 2, single buffered']
    #allocation5 [shape = 's32[1]{0}', space=sflag, size = 0x4, scoped, tag = 'scoped memory for tpu_custom_call.1']
    #allocation6 [shape = 'u8[65536]{0}', space=vmem, size = 0x10000, scoped, tag = 'input window, operand 3, single buffered']
    #allocation7 [shape = 'u8[65536]{0}', space=vmem, size = 0x10000, scoped, tag = 'input window, operand 4, single buffered']
    #allocation8 [shape = 's32[1]{0}', space=sflag, size = 0x4, scoped, tag = 'scoped memory for tpu_custom_call.1']
    #allocation9 [shape = 'u8[32768]{0}', space=vmem, size = 0x8000, scoped, tag = 'input window, operand 10, single buffered']
    #allocation10 [shape = 'u8[16384]{0}', space=vmem, size = 0x4000, scoped, tag = 'input window, operand 12, single buffered']
    #allocation11 [shape = 's32[1]{0}', space=sflag, size = 0x4, scoped, tag = 'scoped memory for tpu_custom_call.1']
    #allocation12 [shape = 'u8[65536]{0}', space=vmem, size = 0x10000, scoped, tag = 'output window, operand 0']
    #allocation13 [shape = 'u8[65536]{0}', space=vmem, size = 0x10000, scoped, tag = 'output window, operand 1']
    #allocation14 [shape = 'u8[65536]{0}', space=vmem, size = 0x10000, scoped, tag = 'output window, operand 2']
    %21 = vsyncpa [#allocation3], 0
    %s22 = scalar_lea.sflag [#allocation3], 1
    %23 = vsyncpa %s22, 0
    %24 = vsyncpa [#allocation5], 0
    %25 = vsyncpa [#allocation8], 0
    %26 = vsyncpa [#allocation11], 0
    loop: start=0, step=1, limit=4
    $region2: #{tpu_custom_call.1} parent=1 // loop_pre_header
      _
    $region3: #{tpu_custom_call.1} parent=1 // loop_header
      %s28 = sphi 0, %s32
      %p29 = scmp.ge.s32.totalorder %s28, 4
      %s35 = sphi 0, %s54
      %s36 = sphi 0, %s50
      %s37 = sphi 0, %s46
      %s38 = sphi 0, %s35
      %s39 = sphi 0, %s36
      %s40 = sphi 0, %s37
      %s41 = sphi 0, %s38
      %s42 = sphi 0, %s39
      %s43 = sphi 0, %s40
      %s59 = sphi 0, %s61
      %s62 = sphi 0, %s59
      %s63 = sphi 0, %s62
      %s79 = sphi 0, %s63
      %s85 = sphi 0, %s87
      %s88 = sphi 0, %s85
      %s89 = sphi 0, %s88
      %s105 = sphi 0, %s89
      %s111 = sphi 0, %s113
      %s114 = sphi 0, %s111
      %s115 = sphi 0, %s114
      %s131 = sphi 0, %s115
      %s137 = sphi 0, %s139
      %s140 = sphi 0, %s137
      %s141 = sphi 0, %s140
      %s157 = sphi 0, %s141
      %s163 = sphi 0, %s165
      %s166 = sphi 0, %s163
      %s167 = sphi 0, %s166
      %s183 = sphi 0, %s167
      %s189 = sphi 0, %s191
      %s192 = sphi 0, %s189
      %s193 = sphi 0, %s192
      %s209 = sphi 0, %s193
      %s215 = sphi 0, %s217
      %s218 = sphi 0, %s215
      %s219 = sphi 0, %s218
      %s235 = sphi 0, %s219
      %s241 = sphi 0, %s243
      %s244 = sphi 0, %s241
      %s245 = sphi 0, %s244
      %s261 = sphi 0, %s245
      %s267 = sphi 0, %s269
      %s270 = sphi 0, %s267
      %s271 = sphi 0, %s270
      %s287 = sphi 0, %s271
      %s293 = sphi 0, %s295
      %s296 = sphi 0, %s293
      %s297 = sphi 0, %s296
      %s313 = sphi 0, %s297
      %s317 = sphi 0, %s317
      %s319 = sphi 0, %s317
      %s320 = sphi 0, %s319
      %s334 = sphi 0, %s320
      %s342 = sphi 0, %s344
      %s345 = sphi 0, %s342
      %s346 = sphi 0, %s345
      %s362 = sphi 0, %s346
      %s370 = sphi 0, %s372
      %s373 = sphi 0, %s370
      %s374 = sphi 0, %s373
      %s390 = sphi 0, %s374
      %s400 = sphi 0, %s402
      %s403 = sphi 0, %s400
      %s404 = sphi 0, %s403
      %s420 = sphi 0, %s404
      %s430 = sphi 0, %s432
      %s433 = sphi 0, %s430
      %s434 = sphi 0, %s433
      %s450 = sphi 0, %s434
      %s460 = sphi 0, %s462
      %s463 = sphi 0, %s460
      %s464 = sphi 0, %s463
      %s480 = sphi 0, %s464
    $region4: #{tpu_custom_call.1} parent=1 // loop_header_branch
      %31 = sbr.rel (%p29) target = $region8
    $region5: #{tpu_custom_call.1} parent=1 // loop_body
      %s33 = ssub.s32 %s28, 1
      %s34 = ssub.s32 %s28, 2
      %s44 = sadd.s32 1, %s37
      %p45 = scmp.ge.s32.totalorder %s44, 1
      %s46 = scalar_select %p45, 0, %s44
      %s47 = sadd.s32 1, %s36
      %s48 = scalar_select %p45, %s47, %s36
      %p49 = scmp.ge.s32.totalorder %s48, 1
      %s50 = scalar_select %p49, 0, %s48
      %s51 = sadd.s32 1, %s35
      %s52 = scalar_select %p49, %s51, %s35
      %p53 = scmp.ge.s32.totalorder %s52, 2
      %s54 = scalar_select %p53, 0, %s52
      %s55 = ssub.s32 %s35, %s54
      %s56 = ssub.s32 %s37, %s46
      %s57 = sor.u32 %s55, %s56
      %p58 = scmp.eq.s32.totalorder %s57, 0
      %s60 = sadd.s32 %s59, 1
      %s61 = scalar_select %p58, %s59, %s60
      %p64 = pneg %p58
      %p65 = scmp.eq.s32.totalorder %s28, 1
      %p66 = por %p64, %p65
      %p67 = scmp.ne.s32.totalorder %s59, %s62
      %p68 = scmp.eq.s32.totalorder %s28, 0
      %p69 = por %p67, %p68
      %p70 = scmp.ne.s32.totalorder %s59, %s62
      %p71 = scmp.eq.s32.totalorder %s33, 1
      %p72 = por %p70, %p71
      %p73 = scmp.ne.s32.totalorder %s62, %s63
      %p74 = scmp.eq.s32.totalorder %s33, 0
      %p75 = por %p73, %p74
      %p76 = scmp.ne.s32.totalorder %s62, %s63
      %p77 = scmp.eq.s32.totalorder %s34, 1
      %p78 = por %p76, %p77
      %p80 = scmp.ne.s32.totalorder %s63, %s79
      %p81 = scmp.eq.s32.totalorder %s34, 0
      %p82 = por %p80, %p81
      %s83 = ssub.s32 %s35, %s54
      %p84 = scmp.eq.s32.totalorder %s83, 0
      %s86 = sadd.s32 %s85, 1
      %s87 = scalar_select %p84, %s85, %s86
      %p90 = pneg %p84
      %p91 = scmp.eq.s32.totalorder %s28, 1
      %p92 = por %p90, %p91
      %p93 = scmp.ne.s32.totalorder %s85, %s88
      %p94 = scmp.eq.s32.totalorder %s28, 0
      %p95 = por %p93, %p94
      %p96 = scmp.ne.s32.totalorder %s85, %s88
      %p97 = scmp.eq.s32.totalorder %s33, 1
      %p98 = por %p96, %p97
      %p99 = scmp.ne.s32.totalorder %s88, %s89
      %p100 = scmp.eq.s32.totalorder %s33, 0
      %p101 = por %p99, %p100
      %p102 = scmp.ne.s32.totalorder %s88, %s89
      %p103 = scmp.eq.s32.totalorder %s34, 1
      %p104 = por %p102, %p103
      %p106 = scmp.ne.s32.totalorder %s89, %s105
      %p107 = scmp.eq.s32.totalorder %s34, 0
      %p108 = por %p106, %p107
      %s109 = ssub.s32 %s36, %s50
      %p110 = scmp.eq.s32.totalorder %s109, 0
      %s112 = sadd.s32 %s111, 1
      %s113 = scalar_select %p110, %s111, %s112
      %p116 = pneg %p110
      %p117 = scmp.eq.s32.totalorder %s28, 1
      %p118 = por %p116, %p117
      %p119 = scmp.ne.s32.totalorder %s111, %s114
      %p120 = scmp.eq.s32.totalorder %s28, 0
      %p121 = por %p119, %p120
      %p122 = scmp.ne.s32.totalorder %s111, %s114
      %p123 = scmp.eq.s32.totalorder %s33, 1
      %p124 = por %p122, %p123
      %p125 = scmp.ne.s32.totalorder %s114, %s115
      %p126 = scmp.eq.s32.totalorder %s33, 0
      %p127 = por %p125, %p126
      %p128 = scmp.ne.s32.totalorder %s114, %s115
      %p129 = scmp.eq.s32.totalorder %s34, 1
      %p130 = por %p128, %p129
      %p132 = scmp.ne.s32.totalorder %s115, %s131
      %p133 = scmp.eq.s32.totalorder %s34, 0
      %p134 = por %p132, %p133
      %s135 = ssub.s32 %s36, %s50
      %p136 = scmp.eq.s32.totalorder %s135, 0
      %s138 = sadd.s32 %s137, 1
      %s139 = scalar_select %p136, %s137, %s138
      %p142 = pneg %p136
      %p143 = scmp.eq.s32.totalorder %s28, 1
      %p144 = por %p142, %p143
      %p145 = scmp.ne.s32.totalorder %s137, %s140
      %p146 = scmp.eq.s32.totalorder %s28, 0
      %p147 = por %p145, %p146
      %p148 = scmp.ne.s32.totalorder %s137, %s140
      %p149 = scmp.eq.s32.totalorder %s33, 1
      %p150 = por %p148, %p149
      %p151 = scmp.ne.s32.totalorder %s140, %s141
      %p152 = scmp.eq.s32.totalorder %s33, 0
      %p153 = por %p151, %p152
      %p154 = scmp.ne.s32.totalorder %s140, %s141
      %p155 = scmp.eq.s32.totalorder %s34, 1
      %p156 = por %p154, %p155
      %p158 = scmp.ne.s32.totalorder %s141, %s157
      %p159 = scmp.eq.s32.totalorder %s34, 0
      %p160 = por %p158, %p159
      %s161 = ssub.s32 %s36, %s50
      %p162 = scmp.eq.s32.totalorder %s161, 0
      %s164 = sadd.s32 %s163, 1
      %s165 = scalar_select %p162, %s163, %s164
      %p168 = pneg %p162
      %p169 = scmp.eq.s32.totalorder %s28, 1
      %p170 = por %p168, %p169
      %p171 = scmp.ne.s32.totalorder %s163, %s166
      %p172 = scmp.eq.s32.totalorder %s28, 0
      %p173 = por %p171, %p172
      %p174 = scmp.ne.s32.totalorder %s163, %s166
      %p175 = scmp.eq.s32.totalorder %s33, 1
      %p176 = por %p174, %p175
      %p177 = scmp.ne.s32.totalorder %s166, %s167
      %p178 = scmp.eq.s32.totalorder %s33, 0
      %p179 = por %p177, %p178
      %p180 = scmp.ne.s32.totalorder %s166, %s167
      %p181 = scmp.eq.s32.totalorder %s34, 1
      %p182 = por %p180, %p181
      %p184 = scmp.ne.s32.totalorder %s167, %s183
      %p185 = scmp.eq.s32.totalorder %s34, 0
      %p186 = por %p184, %p185
      %s187 = ssub.s32 %s36, %s50
      %p188 = scmp.eq.s32.totalorder %s187, 0
      %s190 = sadd.s32 %s189, 1
      %s191 = scalar_select %p188, %s189, %s190
      %p194 = pneg %p188
      %p195 = scmp.eq.s32.totalorder %s28, 1
      %p196 = por %p194, %p195
      %p197 = scmp.ne.s32.totalorder %s189, %s192
      %p198 = scmp.eq.s32.totalorder %s28, 0
      %p199 = por %p197, %p198
      %p200 = scmp.ne.s32.totalorder %s189, %s192
      %p201 = scmp.eq.s32.totalorder %s33, 1
      %p202 = por %p200, %p201
      %p203 = scmp.ne.s32.totalorder %s192, %s193
      %p204 = scmp.eq.s32.totalorder %s33, 0
      %p205 = por %p203, %p204
      %p206 = scmp.ne.s32.totalorder %s192, %s193
      %p207 = scmp.eq.s32.totalorder %s34, 1
      %p208 = por %p206, %p207
      %p210 = scmp.ne.s32.totalorder %s193, %s209
      %p211 = scmp.eq.s32.totalorder %s34, 0
      %p212 = por %p210, %p211
      %s213 = ssub.s32 %s36, %s50
      %p214 = scmp.eq.s32.totalorder %s213, 0
      %s216 = sadd.s32 %s215, 1
      %s217 = scalar_select %p214, %s215, %s216
      %p220 = pneg %p214
      %p221 = scmp.eq.s32.totalorder %s28, 1
      %p222 = por %p220, %p221
      %p223 = scmp.ne.s32.totalorder %s215, %s218
      %p224 = scmp.eq.s32.totalorder %s28, 0
      %p225 = por %p223, %p224
      %p226 = scmp.ne.s32.totalorder %s215, %s218
      %p227 = scmp.eq.s32.totalorder %s33, 1
      %p228 = por %p226, %p227
      %p229 = scmp.ne.s32.totalorder %s218, %s219
      %p230 = scmp.eq.s32.totalorder %s33, 0
      %p231 = por %p229, %p230
      %p232 = scmp.ne.s32.totalorder %s218, %s219
      %p233 = scmp.eq.s32.totalorder %s34, 1
      %p234 = por %p232, %p233
      %p236 = scmp.ne.s32.totalorder %s219, %s235
      %p237 = scmp.eq.s32.totalorder %s34, 0
      %p238 = por %p236, %p237
      %s239 = ssub.s32 %s36, %s50
      %p240 = scmp.eq.s32.totalorder %s239, 0
      %s242 = sadd.s32 %s241, 1
      %s243 = scalar_select %p240, %s241, %s242
      %p246 = pneg %p240
      %p247 = scmp.eq.s32.totalorder %s28, 1
      %p248 = por %p246, %p247
      %p249 = scmp.ne.s32.totalorder %s241, %s244
      %p250 = scmp.eq.s32.totalorder %s28, 0
      %p251 = por %p249, %p250
      %p252 = scmp.ne.s32.totalorder %s241, %s244
      %p253 = scmp.eq.s32.totalorder %s33, 1
      %p254 = por %p252, %p253
      %p255 = scmp.ne.s32.totalorder %s244, %s245
      %p256 = scmp.eq.s32.totalorder %s33, 0
      %p257 = por %p255, %p256
      %p258 = scmp.ne.s32.totalorder %s244, %s245
      %p259 = scmp.eq.s32.totalorder %s34, 1
      %p260 = por %p258, %p259
      %p262 = scmp.ne.s32.totalorder %s245, %s261
      %p263 = scmp.eq.s32.totalorder %s34, 0
      %p264 = por %p262, %p263
      %s265 = ssub.s32 %s36, %s50
      %p266 = scmp.eq.s32.totalorder %s265, 0
      %s268 = sadd.s32 %s267, 1
      %s269 = scalar_select %p266, %s267, %s268
      %p272 = pneg %p266
      %p273 = scmp.eq.s32.totalorder %s28, 1
      %p274 = por %p272, %p273
      %p275 = scmp.ne.s32.totalorder %s267, %s270
      %p276 = scmp.eq.s32.totalorder %s28, 0
      %p277 = por %p275, %p276
      %p278 = scmp.ne.s32.totalorder %s267, %s270
      %p279 = scmp.eq.s32.totalorder %s33, 1
      %p280 = por %p278, %p279
      %p281 = scmp.ne.s32.totalorder %s270, %s271
      %p282 = scmp.eq.s32.totalorder %s33, 0
      %p283 = por %p281, %p282
      %p284 = scmp.ne.s32.totalorder %s270, %s271
      %p285 = scmp.eq.s32.totalorder %s34, 1
      %p286 = por %p284, %p285
      %p288 = scmp.ne.s32.totalorder %s271, %s287
      %p289 = scmp.eq.s32.totalorder %s34, 0
      %p290 = por %p288, %p289
      %s291 = ssub.s32 %s36, %s50
      %p292 = scmp.eq.s32.totalorder %s291, 0
      %s294 = sadd.s32 %s293, 1
      %s295 = scalar_select %p292, %s293, %s294
      %p298 = pneg %p292
      %p299 = scmp.eq.s32.totalorder %s28, 1
      %p300 = por %p298, %p299
      %p301 = scmp.ne.s32.totalorder %s293, %s296
      %p302 = scmp.eq.s32.totalorder %s28, 0
      %p303 = por %p301, %p302
      %p304 = scmp.ne.s32.totalorder %s293, %s296
      %p305 = scmp.eq.s32.totalorder %s33, 1
      %p306 = por %p304, %p305
      %p307 = scmp.ne.s32.totalorder %s296, %s297
      %p308 = scmp.eq.s32.totalorder %s33, 0
      %p309 = por %p307, %p308
      %p310 = scmp.ne.s32.totalorder %s296, %s297
      %p311 = scmp.eq.s32.totalorder %s34, 1
      %p312 = por %p310, %p311
      %p314 = scmp.ne.s32.totalorder %s297, %s313
      %p315 = scmp.eq.s32.totalorder %s34, 0
      %p316 = por %p314, %p315
      %s318 = sadd.s32 %s317, 1
      %p321 = scmp.eq.s32.totalorder %s28, 1
      %p322 = scmp.ne.s32.totalorder %s317, %s319
      %p323 = scmp.eq.s32.totalorder %s28, 0
      %p324 = por %p322, %p323
      %p325 = scmp.ne.s32.totalorder %s317, %s319
      %p326 = scmp.eq.s32.totalorder %s33, 1
      %p327 = por %p325, %p326
      %p328 = scmp.ne.s32.totalorder %s319, %s320
      %p329 = scmp.eq.s32.totalorder %s33, 0
      %p330 = por %p328, %p329
      %p331 = scmp.ne.s32.totalorder %s319, %s320
      %p332 = scmp.eq.s32.totalorder %s34, 1
      %p333 = por %p331, %p332
      %p335 = scmp.ne.s32.totalorder %s320, %s334
      %p336 = scmp.eq.s32.totalorder %s34, 0
      %p337 = por %p335, %p336
      %s338 = ssub.s32 %s37, %s46
      %s339 = ssub.s32 %s36, %s50
      %s340 = sor.u32 %s338, %s339
      %p341 = scmp.eq.s32.totalorder %s340, 0
      %s343 = sadd.s32 %s342, 1
      %s344 = scalar_select %p341, %s342, %s343
      %p347 = pneg %p341
      %p348 = scmp.eq.s32.totalorder %s28, 1
      %p349 = por %p347, %p348
      %p350 = scmp.ne.s32.totalorder %s342, %s345
      %p351 = scmp.eq.s32.totalorder %s28, 0
      %p352 = por %p350, %p351
      %p353 = scmp.ne.s32.totalorder %s342, %s345
      %p354 = scmp.eq.s32.totalorder %s33, 1
      %p355 = por %p353, %p354
      %p356 = scmp.ne.s32.totalorder %s345, %s346
      %p357 = scmp.eq.s32.totalorder %s33, 0
      %p358 = por %p356, %p357
      %p359 = scmp.ne.s32.totalorder %s345, %s346
      %p360 = scmp.eq.s32.totalorder %s34, 1
      %p361 = por %p359, %p360
      %p363 = scmp.ne.s32.totalorder %s346, %s362
      %p364 = scmp.eq.s32.totalorder %s34, 0
      %p365 = por %p363, %p364
      %s366 = ssub.s32 %s37, %s46
      %s367 = ssub.s32 %s36, %s50
      %s368 = sor.u32 %s366, %s367
      %p369 = scmp.eq.s32.totalorder %s368, 0
      %s371 = sadd.s32 %s370, 1
      %s372 = scalar_select %p369, %s370, %s371
      %p375 = pneg %p369
      %p376 = scmp.eq.s32.totalorder %s28, 1
      %p377 = por %p375, %p376
      %p378 = scmp.ne.s32.totalorder %s370, %s373
      %p379 = scmp.eq.s32.totalorder %s28, 0
      %p380 = por %p378, %p379
      %p381 = scmp.ne.s32.totalorder %s370, %s373
      %p382 = scmp.eq.s32.totalorder %s33, 1
      %p383 = por %p381, %p382
      %p384 = scmp.ne.s32.totalorder %s373, %s374
      %p385 = scmp.eq.s32.totalorder %s33, 0
      %p386 = por %p384, %p385
      %p387 = scmp.ne.s32.totalorder %s373, %s374
      %p388 = scmp.eq.s32.totalorder %s34, 1
      %p389 = por %p387, %p388
      %p391 = scmp.ne.s32.totalorder %s374, %s390
      %p392 = scmp.eq.s32.totalorder %s34, 0
      %p393 = por %p391, %p392
      %s394 = ssub.s32 %s35, %s54
      %s395 = ssub.s32 %s37, %s46
      %s396 = sor.u32 %s394, %s395
      %s397 = ssub.s32 %s36, %s50
      %s398 = sor.u32 %s396, %s397
      %p399 = scmp.eq.s32.totalorder %s398, 0
      %s401 = sadd.s32 %s400, 1
      %s402 = scalar_select %p399, %s400, %s401
      %p405 = pneg %p399
      %p406 = scmp.eq.s32.totalorder %s28, 1
      %p407 = por %p405, %p406
      %p408 = scmp.ne.s32.totalorder %s400, %s403
      %p409 = scmp.eq.s32.totalorder %s28, 0
      %p410 = por %p408, %p409
      %p411 = scmp.ne.s32.totalorder %s400, %s403
      %p412 = scmp.eq.s32.totalorder %s33, 1
      %p413 = por %p411, %p412
      %p414 = scmp.ne.s32.totalorder %s403, %s404
      %p415 = scmp.eq.s32.totalorder %s33, 0
      %p416 = por %p414, %p415
      %p417 = scmp.ne.s32.totalorder %s403, %s404
      %p418 = scmp.eq.s32.totalorder %s34, 1
      %p419 = por %p417, %p418
      %p421 = scmp.ne.s32.totalorder %s404, %s420
      %p422 = scmp.eq.s32.totalorder %s34, 0
      %p423 = por %p421, %p422
      %s424 = ssub.s32 %s35, %s54
      %s425 = ssub.s32 %s37, %s46
      %s426 = sor.u32 %s424, %s425
      %s427 = ssub.s32 %s36, %s50
      %s428 = sor.u32 %s426, %s427
      %p429 = scmp.eq.s32.totalorder %s428, 0
      %s431 = sadd.s32 %s430, 1
      %s432 = scalar_select %p429, %s430, %s431
      %p435 = pneg %p429
      %p436 = scmp.eq.s32.totalorder %s28, 1
      %p437 = por %p435, %p436
      %p438 = scmp.ne.s32.totalorder %s430, %s433
      %p439 = scmp.eq.s32.totalorder %s28, 0
      %p440 = por %p438, %p439
      %p441 = scmp.ne.s32.totalorder %s430, %s433
      %p442 = scmp.eq.s32.totalorder %s33, 1
      %p443 = por %p441, %p442
      %p444 = scmp.ne.s32.totalorder %s433, %s434
      %p445 = scmp.eq.s32.totalorder %s33, 0
      %p446 = por %p444, %p445
      %p447 = scmp.ne.s32.totalorder %s433, %s434
      %p448 = scmp.eq.s32.totalorder %s34, 1
      %p449 = por %p447, %p448
      %p451 = scmp.ne.s32.totalorder %s434, %s450
      %p452 = scmp.eq.s32.totalorder %s34, 0
      %p453 = por %p451, %p452
      %s454 = ssub.s32 %s35, %s54
      %s455 = ssub.s32 %s37, %s46
      %s456 = sor.u32 %s454, %s455
      %s457 = ssub.s32 %s36, %s50
      %s458 = sor.u32 %s456, %s457
      %p459 = scmp.eq.s32.totalorder %s458, 0
      %s461 = sadd.s32 %s460, 1
      %s462 = scalar_select %p459, %s460, %s461
      %p465 = pneg %p459
      %p466 = scmp.eq.s32.totalorder %s28, 1
      %p467 = por %p465, %p466
      %p468 = scmp.ne.s32.totalorder %s460, %s463
      %p469 = scmp.eq.s32.totalorder %s28, 0
      %p470 = por %p468, %p469
      %p471 = scmp.ne.s32.totalorder %s460, %s463
      %p472 = scmp.eq.s32.totalorder %s33, 1
      %p473 = por %p471, %p472
      %p474 = scmp.ne.s32.totalorder %s463, %s464
      %p475 = scmp.eq.s32.totalorder %s33, 0
      %p476 = por %p474, %p475
      %p477 = scmp.ne.s32.totalorder %s463, %s464
      %p478 = scmp.eq.s32.totalorder %s34, 1
      %p479 = por %p477, %p478
      %p481 = scmp.ne.s32.totalorder %s464, %s480
      %p482 = scmp.eq.s32.totalorder %s34, 0
      %p483 = por %p481, %p482
      %p484 = scmp.le.s32.totalorder 1, %s28
      %p485 = scmp.lt.s32.totalorder %s28, 3
      %p486 = pnand %p484, %p485
      %p487 = pneg %p486
      // Predicated region
      $region9: #{tpu_custom_call.1} parent=5 // pred_check
        _
      $region10: #{tpu_custom_call.1} parent=5 // pred_check_branch
        %489 = sbr.rel (%p486) target = $region12
      $region11: #{tpu_custom_call.1} parent=5 // pred_region
        %s490 = ssub.s32 %s28, 1
        // Predicated region
        $region13: #{tpu_custom_call.1} parent=11 // pred_check
          %p491 = pneg %p127
        $region14: #{tpu_custom_call.1} parent=11 // pred_check_branch
          %493 = sbr.rel (%p491) target = $region16
        $region15: #{tpu_custom_call.1} parent=11 // pred_region
          %s495 = ssub.s32 2048, 2048
          %496 = vsyncadd [#allocation5], %s495
          %s497 = smul.addr %s39, 128
          %s498 = scalar_lea.hbm %s2, %s497
          %s499 = sshll.u32 [#allocation4], 4
          %s500 = int_to_ptr.vmem [resolvable:$true] %s499
          %505 = dma.hbm_to_vmem [thread:$0]  %s498, 2048, %s500, [#allocation5], 128, 128, 8
        $region16: #{tpu_custom_call.1} parent=11 // pred_fallthru
          _
        // Predicated region
        $region17: #{tpu_custom_call.1} parent=11 // pred_check
          %p506 = pneg %p153
        $region18: #{tpu_custom_call.1} parent=11 // pred_check_branch
          %508 = sbr.rel (%p506) target = $region20
        $region19: #{tpu_custom_call.1} parent=11 // pred_region
          %s510 = ssub.s32 2048, 2048
          %511 = vsyncadd [#allocation5], %s510
          %s512 = smul.addr %s39, 128
          %s513 = scalar_lea.hbm %s3, %s512
          %s514 = sshll.u32 [#allocation6], 4
          %s515 = int_to_ptr.vmem [resolvable:$true] %s514
          %520 = dma.hbm_to_vmem [thread:$0]  %s513, 2048, %s515, [#allocation5], 128, 128, 8
        $region20: #{tpu_custom_call.1} parent=11 // pred_fallthru
          _
        // Predicated region
        $region21: #{tpu_custom_call.1} parent=11 // pred_check
          %p521 = pneg %p179
        $region22: #{tpu_custom_call.1} parent=11 // pred_check_branch
          %523 = sbr.rel (%p521) target = $region24
        $region23: #{tpu_custom_call.1} parent=11 // pred_region
          %s525 = ssub.s32 2048, 2048
          %526 = vsyncadd [#allocation8], %s525
          %s527 = smul.addr %s39, 128
          %s528 = scalar_lea.hbm %s4, %s527
          %s529 = sshll.u32 [#allocation7], 4
          %s530 = int_to_ptr.vmem [resolvable:$true] %s529
          %535 = dma.hbm_to_vmem [thread:$0]  %s528, 2048, %s530, [#allocation8], 128, 128, 8
        $region24: #{tpu_custom_call.1} parent=11 // pred_fallthru
          _
        // Predicated region
        $region25: #{tpu_custom_call.1} parent=11 // pred_check
          %p536 = pneg %p205
        $region26: #{tpu_custom_call.1} parent=11 // pred_check_branch
          %538 = sbr.rel (%p536) target = $region28
        $region27: #{tpu_custom_call.1} parent=11 // pred_region
          %p539 = scmp.lt.s32.totalorder %s39, 0
          %s540 = scalar_select %p539, %s39, 0
          %s541 = scalar_lea.vmem %s5, %s540
        $region28: #{tpu_custom_call.1} parent=11 // pred_fallthru
          _
        // Predicated region
        $region29: #{tpu_custom_call.1} parent=11 // pred_check
          %p542 = pneg %p231
        $region30: #{tpu_custom_call.1} parent=11 // pred_check_branch
          %544 = sbr.rel (%p542) target = $region32
        $region31: #{tpu_custom_call.1} parent=11 // pred_region
          %p545 = scmp.lt.s32.totalorder %s39, 0
          %s546 = scalar_select %p545, %s39, 0
          %s547 = scalar_lea.vmem %s6, %s546
        $region32: #{tpu_custom_call.1} parent=11 // pred_fallthru
          _
        // Predicated region
        $region33: #{tpu_custom_call.1} parent=11 // pred_check
          %p548 = pneg %p257
        $region34: #{tpu_custom_call.1} parent=11 // pred_check_branch
          %550 = sbr.rel (%p548) target = $region36
        $region35: #{tpu_custom_call.1} parent=11 // pred_region
          %p551 = scmp.lt.s32.totalorder %s39, 0
          %s552 = scalar_select %p551, %s39, 0
          %s553 = scalar_lea.vmem %s7, %s552
        $region36: #{tpu_custom_call.1} parent=11 // pred_fallthru
          _
        // Predicated region
        $region37: #{tpu_custom_call.1} parent=11 // pred_check
          %p554 = pneg %p283
        $region38: #{tpu_custom_call.1} parent=11 // pred_check_branch
          %556 = sbr.rel (%p554) target = $region40
        $region39: #{tpu_custom_call.1} parent=11 // pred_region
          %p557 = scmp.lt.s32.totalorder %s39, 0
          %s558 = scalar_select %p557, %s39, 0
          %s559 = scalar_lea.vmem %s8, %s558
        $region40: #{tpu_custom_call.1} parent=11 // pred_fallthru
          _
        // Predicated region
        $region41: #{tpu_custom_call.1} parent=11 // pred_check
          %p560 = pneg %p309
        $region42: #{tpu_custom_call.1} parent=11 // pred_check_branch
          %562 = sbr.rel (%p560) target = $region44
        $region43: #{tpu_custom_call.1} parent=11 // pred_region
          %p563 = scmp.lt.s32.totalorder %s39, 0
          %s564 = scalar_select %p563, %s39, 0
          %s565 = scalar_lea.vmem %s9, %s564
        $region44: #{tpu_custom_call.1} parent=11 // pred_fallthru
          _
        // Predicated region
        $region45: #{tpu_custom_call.1} parent=11 // pred_check
          %p566 = pneg %p330
        $region46: #{tpu_custom_call.1} parent=11 // pred_check_branch
          %568 = sbr.rel (%p566) target = $region48
        $region47: #{tpu_custom_call.1} parent=11 // pred_region
          %s570 = ssub.s32 1024, 1024
          %571 = vsyncadd [#allocation8], %s570
          %s572 = sshll.u32 [#allocation9], 4
          %s573 = int_to_ptr.vmem [resolvable:$true] %s572
          %578 = dma.hbm_to_vmem [thread:$0]  %s10, 1024, %s573, [#allocation8], 64, 64, 4
        $region48: #{tpu_custom_call.1} parent=11 // pred_fallthru
          _
        // Predicated region
        $region49: #{tpu_custom_call.1} parent=11 // pred_check
          %p579 = pneg %p358
        $region50: #{tpu_custom_call.1} parent=11 // pred_check_branch
          %581 = sbr.rel (%p579) target = $region52
        $region51: #{tpu_custom_call.1} parent=11 // pred_region
          %s582 = smul.u32 8, %s40
          %p583 = scmp.lt.s32.totalorder %s582, 7
          %s584 = scalar_select %p583, %s582, 7
          %p585 = scmp.lt.s32.totalorder %s39, 0
          %s586 = scalar_select %p585, %s39, 0
          %s587 = sadd.s32 %s586, %s584
          %s588 = smul.addr %s587, 4
          %s589 = scalar_lea.vmem %s11, %s588
          %s590 = smul.u32 8, %s40
        $region52: #{tpu_custom_call.1} parent=11 // pred_fallthru
          _
        // Predicated region
        $region53: #{tpu_custom_call.1} parent=11 // pred_check
          %p591 = pneg %p386
        $region54: #{tpu_custom_call.1} parent=11 // pred_check_branch
          %593 = sbr.rel (%p591) target = $region56
        $region55: #{tpu_custom_call.1} parent=11 // pred_region
          %s594 = smul.u32 8, %s40
          %s596 = ssub.s32 512, 512
          %597 = vsyncadd [#allocation11], %s596
          %s598 = sadd.s32 %s39, %s594
          %s599 = smul.addr %s598, 64
          %s600 = scalar_lea.hbm %s12, %s599
          %s601 = sshll.u32 [#allocation10], 4
          %s602 = int_to_ptr.vmem [resolvable:$true] %s601
          %607 = dma.hbm_to_vmem [thread:$0]  %s600, 512, %s602, [#allocation11], 64, 64, 4
        $region56: #{tpu_custom_call.1} parent=11 // pred_fallthru
          _
      $region12: #{tpu_custom_call.1} parent=5 // pred_fallthru
        _
      %p608 = scmp.lt.s32.totalorder %s28, 2
      // Predicated region
      $region57: #{tpu_custom_call.1} parent=5 // pred_check
        %p609 = pneg %p608
      $region58: #{tpu_custom_call.1} parent=5 // pred_check_branch
        %611 = sbr.rel (%p609) target = $region60
      $region59: #{tpu_custom_call.1} parent=5 // pred_region
        // Predicated region
        $region61: #{tpu_custom_call.1} parent=59 // pred_check
          %p612 = pneg %p69
        $region62: #{tpu_custom_call.1} parent=59 // pred_check_branch
          %614 = sbr.rel (%p612) target = $region64
        $region63: #{tpu_custom_call.1} parent=59 // pred_region
          %s615 = sand.u32 %s59, 1
          %s616 = scalar_lea.sflag [#allocation3], %s615
          %s617 = sand.u32 %s59, 1
          %s618 = smul.addr %s617, 64
          %s619 = scalar_lea.vmem [#allocation2], %s618
          %s620 = smul.u32 8, %s37
          %s622 = ssub.s32 1024, 1024
          %623 = vsyncadd %s616, %s622
          %s624 = smul.addr %s35, 8
          %s625 = sadd.s32 %s620, %s624
          %s626 = smul.addr %s625, 128
          %s627 = scalar_lea.hbm %s0, %s626
          %s628 = sshll.u32 %s619, 4
          %s629 = int_to_ptr.vmem [resolvable:$true] %s628
          %634 = dma.hbm_to_vmem [thread:$0]  %s627, 1024, %s629, %s616, 128, 128, 8
        $region64: #{tpu_custom_call.1} parent=59 // pred_fallthru
          _
        // Predicated region
        $region65: #{tpu_custom_call.1} parent=59 // pred_check
          %p635 = pneg %p95
        $region66: #{tpu_custom_call.1} parent=59 // pred_check_branch
          %637 = sbr.rel (%p635) target = $region68
        $region67: #{tpu_custom_call.1} parent=59 // pred_region
          %p638 = scmp.lt.s32.totalorder %s35, 1
          %s639 = scalar_select %p638, %s35, 1
          %s640 = scalar_lea.vmem %s1, %s639
        $region68: #{tpu_custom_call.1} parent=59 // pred_fallthru
          _
      $region60: #{tpu_custom_call.1} parent=5 // pred_fallthru
        _
      %p641 = scmp.le.s32.totalorder 1, %s28
      %p642 = scmp.lt.s32.totalorder %s28, 3
      %p643 = pnand %p641, %p642
      %p644 = pneg %p643
      // Predicated region
      $region69: #{tpu_custom_call.1} parent=5 // pred_check
        _
      $region70: #{tpu_custom_call.1} parent=5 // pred_check_branch
        %646 = sbr.rel (%p643) target = $region72
      $region71: #{tpu_custom_call.1} parent=5 // pred_region
        %s647 = ssub.s32 %s28, 1
        %s648 = sand.u32 %s62, 1
        %s649 = scalar_lea.sflag [#allocation3], %s648
        %s650 = sand.u32 %s62, 1
        %s651 = smul.addr %s650, 64
        %s652 = scalar_lea.vmem [#allocation2], %s651
        // Predicated region
        $region73: #{tpu_custom_call.1} parent=71 // pred_check
          %p653 = pneg %p75
        $region74: #{tpu_custom_call.1} parent=71 // pred_check_branch
          %655 = sbr.rel (%p653) target = $region76
        $region75: #{tpu_custom_call.1} parent=71 // pred_region
          %656 = dma.done %s649, 1024
        $region76: #{tpu_custom_call.1} parent=71 // pred_fallthru
          _
        // Predicated region
        $region77: #{tpu_custom_call.1} parent=71 // pred_check
          %p657 = pneg %p127
        $region78: #{tpu_custom_call.1} parent=71 // pred_check_branch
          %659 = sbr.rel (%p657) target = $region80
        $region79: #{tpu_custom_call.1} parent=71 // pred_region
          %660 = dma.done [#allocation5], 2048
        $region80: #{tpu_custom_call.1} parent=71 // pred_fallthru
          _
        // Predicated region
        $region81: #{tpu_custom_call.1} parent=71 // pred_check
          %p661 = pneg %p153
        $region82: #{tpu_custom_call.1} parent=71 // pred_check_branch
          %663 = sbr.rel (%p661) target = $region84
        $region83: #{tpu_custom_call.1} parent=71 // pred_region
          %664 = dma.done [#allocation5], 2048
        $region84: #{tpu_custom_call.1} parent=71 // pred_fallthru
          _
        // Predicated region
        $region85: #{tpu_custom_call.1} parent=71 // pred_check
          %p665 = pneg %p179
        $region86: #{tpu_custom_call.1} parent=71 // pred_check_branch
          %667 = sbr.rel (%p665) target = $region88
        $region87: #{tpu_custom_call.1} parent=71 // pred_region
          %668 = dma.done [#allocation8], 2048
        $region88: #{tpu_custom_call.1} parent=71 // pred_fallthru
          _
        // Predicated region
        $region89: #{tpu_custom_call.1} parent=71 // pred_check
          %p669 = pneg %p330
        $region90: #{tpu_custom_call.1} parent=71 // pred_check_branch
          %671 = sbr.rel (%p669) target = $region92
        $region91: #{tpu_custom_call.1} parent=71 // pred_region
          %672 = dma.done [#allocation8], 1024
        $region92: #{tpu_custom_call.1} parent=71 // pred_fallthru
          _
        // Predicated region
        $region93: #{tpu_custom_call.1} parent=71 // pred_check
          %p673 = pneg %p386
        $region94: #{tpu_custom_call.1} parent=71 // pred_check_branch
          %675 = sbr.rel (%p673) target = $region96
        $region95: #{tpu_custom_call.1} parent=71 // pred_region
          %676 = dma.done [#allocation11], 512
        $region96: #{tpu_custom_call.1} parent=71 // pred_fallthru
          _
        %s677 = sand.u32 %s62, 1
        %s678 = scalar_lea.sflag [#allocation3], %s677
        %s679 = sand.u32 %s62, 1
        %s680 = smul.addr %s679, 64
        %s681 = scalar_lea.vmem [#allocation2], %s680
        %p682 = pneg %p75
        %p683 = pneg %p72
        %p684 = scmp.lt.s32.totalorder %s38, 1
        %s685 = scalar_select %p684, %s38, 1
        %s686 = scalar_lea.vmem %s1, %s685
        %p687 = pneg %p101
        %p688 = pneg %p98
        %p689 = pneg %p127
        %p690 = pneg %p124
        %p691 = pneg %p153
        %p692 = pneg %p150
        %p693 = pneg %p179
        %p694 = pneg %p176
        %p695 = scmp.lt.s32.totalorder %s39, 0
        %s696 = scalar_select %p695, %s39, 0
        %s697 = scalar_lea.vmem %s5, %s696
        %p698 = pneg %p205
        %p699 = pneg %p202
        %p700 = scmp.lt.s32.totalorder %s39, 0
        %s701 = scalar_select %p700, %s39, 0
        %s702 = scalar_lea.vmem %s6, %s701
        %p703 = pneg %p231
        %p704 = pneg %p228
        %p705 = scmp.lt.s32.totalorder %s39, 0
        %s706 = scalar_select %p705, %s39, 0
        %s707 = scalar_lea.vmem %s7, %s706
        %p708 = pneg %p257
        %p709 = pneg %p254
        %p710 = scmp.lt.s32.totalorder %s39, 0
        %s711 = scalar_select %p710, %s39, 0
        %s712 = scalar_lea.vmem %s8, %s711
        %p713 = pneg %p283
        %p714 = pneg %p280
        %p715 = scmp.lt.s32.totalorder %s39, 0
        %s716 = scalar_select %p715, %s39, 0
        %s717 = scalar_lea.vmem %s9, %s716
        %p718 = pneg %p309
        %p719 = pneg %p306
        %p720 = pneg %p330
        %p721 = pneg %p327
        %s722 = smul.u32 8, %s40
        %p723 = scmp.lt.s32.totalorder %s722, 7
        %s724 = scalar_select %p723, %s722, 7
        %p725 = scmp.lt.s32.totalorder %s39, 0
        %s726 = scalar_select %p725, %s39, 0
        %s727 = sadd.s32 %s726, %s724
        %s728 = smul.addr %s727, 4
        %s729 = scalar_lea.vmem %s11, %s728
        %p730 = pneg %p358
        %p731 = pneg %p355
        %p732 = pneg %p386
        %p733 = pneg %p383
        %p734 = pneg %p416
        %p735 = pneg %p413
        %s736 = sand.u32 %s403, 1
        %s737 = sand.u32 %s403, 1
        %s738 = smul.addr %s737, 64
        %s739 = scalar_lea.vmem [#allocation12], %s738
        %p740 = pneg %p446
        %p741 = pneg %p443
        %s742 = sand.u32 %s433, 1
        %s743 = sand.u32 %s433, 1
        %s744 = smul.addr %s743, 64
        %s745 = scalar_lea.vmem [#allocation13], %s744
        %p746 = pneg %p476
        %p747 = pneg %p473
        %s748 = sand.u32 %s463, 1
        %s749 = sand.u32 %s463, 1
        %s750 = smul.addr %s749, 64
        %s751 = scalar_lea.vmem [#allocation14], %s750
        %s752 = smul.u32 8, %s40
        %p753 = scmp.lt.s32.totalorder %s38, 1
        %s754 = scalar_select %p753, %s38, 1
        %s755 = scalar_lea.vmem %s1, %s754
        %p756 = scmp.lt.s32.totalorder %s39, 0
        %s757 = scalar_select %p756, %s39, 0
        %s758 = scalar_lea.vmem %s5, %s757
        %p759 = scmp.lt.s32.totalorder %s39, 0
        %s760 = scalar_select %p759, %s39, 0
        %s761 = scalar_lea.vmem %s6, %s760
        %p762 = scmp.lt.s32.totalorder %s39, 0
        %s763 = scalar_select %p762, %s39, 0
        %s764 = scalar_lea.vmem %s7, %s763
        %p765 = scmp.lt.s32.totalorder %s39, 0
        %s766 = scalar_select %p765, %s39, 0
        %s767 = scalar_lea.vmem %s8, %s766
        %p768 = scmp.lt.s32.totalorder %s39, 0
        %s769 = scalar_select %p768, %s39, 0
        %s770 = scalar_lea.vmem %s9, %s769
        %s771 = smul.u32 8, %s40
        %p772 = scmp.lt.s32.totalorder %s771, 7
        %s773 = scalar_select %p772, %s771, 7
        %p774 = scmp.lt.s32.totalorder %s39, 0
        %s775 = scalar_select %p774, %s39, 0
        %s776 = sadd.s32 %s775, %s773
        %s777 = smul.addr %s776, 4
        %s778 = scalar_lea.vmem %s11, %s777
        %s779 = smul.u32 8, %s40
        %s780 = smul.u32 8, %s40
        %s781 = smul.u32 8, %s40
        %s782 = ssub.s32 10, %s781
        %p783 = scmp.lt.s32.totalorder %s782, 8
        %s784 = scalar_select %p783, %s782, 8
        %s785 = smul.u32 128, %s784
        %s786 = smul.u32 8, %s40
        %s787 = ssub.s32 10, %s786
        %p788 = scmp.lt.s32.totalorder %s787, 8
        %s789 = scalar_select %p788, %s787, 8
        %s790 = smul.u32 128, %s789
        %s791 = smul.u32 8, %s40
        %s792 = ssub.s32 10, %s791
        %p793 = scmp.lt.s32.totalorder %s792, 8
        %s794 = scalar_select %p793, %s792, 8
        %s795 = smul.u32 128, %s794
        %v797 = vld [vmem:[%s652] sm:$0xff]
        %v798 = vld [vmem:[%s652 + $0x8] sm:$0xff]
        %v799 = vld [vmem:[%s652 + $0x10] sm:$0xff]
        %v800 = vld [vmem:[%s652 + $0x18] sm:$0xff]
        %v801 = vld [vmem:[%s652 + $0x20] sm:$0xff]
        %v802 = vld [vmem:[%s652 + $0x28] sm:$0xff]
        %v803 = vld [vmem:[%s652 + $0x30] sm:$0xff]
        %v804 = vld [vmem:[%s652 + $0x38] sm:$0xff]
        %v805 = vld [vmem:[%s755] sm:$0x1]
        %v806 = vmul.f32 %v797, %v797
        %v807 = vmul.f32 %v798, %v798
        %v808 = vmul.f32 %v799, %v799
        %v809 = vmul.f32 %v800, %v800
        %v810 = vmul.f32 %v801, %v801
        %v811 = vmul.f32 %v802, %v802
        %v812 = vmul.f32 %v803, %v803
        %v813 = vmul.f32 %v804, %v804
        %814 = vadd.xlane.f32.xlu0 %v806
        %v815 = vpop.xlane.xlu0 %814
        %816 = vadd.xlane.f32.xlu0 %v807
        %v817 = vpop.xlane.xlu0 %816
        %818 = vadd.xlane.f32.xlu0 %v808
        %v819 = vpop.xlane.xlu0 %818
        %820 = vadd.xlane.f32.xlu0 %v809
        %v821 = vpop.xlane.xlu0 %820
        %822 = vadd.xlane.f32.xlu0 %v810
        %v823 = vpop.xlane.xlu0 %822
        %824 = vadd.xlane.f32.xlu0 %v811
        %v825 = vpop.xlane.xlu0 %824
        %826 = vadd.xlane.f32.xlu0 %v812
        %v827 = vpop.xlane.xlu0 %826
        %828 = vadd.xlane.f32.xlu0 %v813
        %v829 = vpop.xlane.xlu0 %828
        %v830 = vrcp.pop 128.0
        %v831 = vmul.f32 %v815, %v830
        %v832 = vmul.f32 %v817, %v830
        %v833 = vmul.f32 %v819, %v830
        %v834 = vmul.f32 %v821, %v830
        %v835 = vmul.f32 %v823, %v830
        %v836 = vmul.f32 %v825, %v830
        %v837 = vmul.f32 %v827, %v830
        %v838 = vmul.f32 %v829, %v830
        %v839 = vadd.f32 %v831, 1e-06
        %v840 = vadd.f32 %v832, 1e-06
        %v841 = vadd.f32 %v833, 1e-06
        %v842 = vadd.f32 %v834, 1e-06
        %v843 = vadd.f32 %v835, 1e-06
        %v844 = vadd.f32 %v836, 1e-06
        %v845 = vadd.f32 %v837, 1e-06
        %v846 = vadd.f32 %v838, 1e-06
        %v847 = vrsqrt.pop %v839
        %v848 = vrsqrt.pop %v840
        %v849 = vrsqrt.pop %v841
        %v850 = vrsqrt.pop %v842
        %v851 = vrsqrt.pop %v843
        %v852 = vrsqrt.pop %v844
        %v853 = vrsqrt.pop %v845
        %v854 = vrsqrt.pop %v846
        %v855 = vmul.f32 %v797, %v847
        %v856 = vmul.f32 %v798, %v848
        %v857 = vmul.f32 %v799, %v849
        %v858 = vmul.f32 %v800, %v850
        %v859 = vmul.f32 %v801, %v851
        %v860 = vmul.f32 %v802, %v852
        %v861 = vmul.f32 %v803, %v853
        %v862 = vmul.f32 %v804, %v854
        %v863 = vadd.f32 %v805, 1.0
        %v865 = vlaneseq
        %v866 = vshrl.u32 %v865, 7
        %v867 = vsub.s32 0, %v866
        %v868 = vrot.slane %v863, %v867
        %v870 = vmul.f32 %v855, %v868
        %v871 = vmul.f32 %v856, %v868
        %v872 = vmul.f32 %v857, %v868
        %v873 = vmul.f32 %v858, %v868
        %v874 = vmul.f32 %v859, %v868
        %v875 = vmul.f32 %v860, %v868
        %v876 = vmul.f32 %v861, %v868
        %v877 = vmul.f32 %v862, %v868
        %v878 = vld [vmem:[#allocation4] sm:$0xff]
        %v879 = vld [vmem:[#allocation4 + $0x8] sm:$0xff]
        %v880 = vld [vmem:[#allocation4 + $0x10] sm:$0xff]
        %v881 = vld [vmem:[#allocation4 + $0x18] sm:$0xff]
        %v882 = vld [vmem:[#allocation4 + $0x20] sm:$0xff]
        %v883 = vld [vmem:[#allocation4 + $0x28] sm:$0xff]
        %v884 = vld [vmem:[#allocation4 + $0x30] sm:$0xff]
        %v885 = vld [vmem:[#allocation4 + $0x38] sm:$0xff]
        %v886 = vld [vmem:[#allocation4 + $0x40] sm:$0xff]
        %v887 = vld [vmem:[#allocation4 + $0x48] sm:$0xff]
        %v888 = vld [vmem:[#allocation4 + $0x50] sm:$0xff]
        %v889 = vld [vmem:[#allocation4 + $0x58] sm:$0xff]
        %v890 = vld [vmem:[#allocation4 + $0x60] sm:$0xff]
        %v891 = vld [vmem:[#allocation4 + $0x68] sm:$0xff]
        %v892 = vld [vmem:[#allocation4 + $0x70] sm:$0xff]
        %v893 = vld [vmem:[#allocation4 + $0x78] sm:$0xff]
        %v894 = vld [vmem:[%s758] sm:$0x1]
        %v896 = vlaneseq
        %v897 = vshrl.u32 %v896, 7
        %v898 = vsub.s32 0, %v897
        %v899 = vrot.slane %v894, %v898
        %901 = vmatprep.subr.mxu0 0.0
        %902 = vmatpush1.msra.mxu0 %v878
        %903 = vmatprep.subr.mxu0 0.0
        %904 = vmatpush1.msra.mxu0 %v879
        %905 = vmatprep.subr.mxu0 0.0
        %906 = vmatpush1.msra.mxu0 %v880
        %907 = vmatprep.subr.mxu0 0.0
        %908 = vmatpush1.msra.mxu0 %v881
        %909 = vmatprep.subr.mxu0 0.0
        %910 = vmatpush1.msra.mxu0 %v882
        %911 = vmatprep.subr.mxu0 0.0
        %912 = vmatpush1.msra.mxu0 %v883
        %913 = vmatprep.subr.mxu0 0.0
        %914 = vmatpush1.msra.mxu0 %v884
        %915 = vmatprep.subr.mxu0 0.0
        %916 = vmatpush1.msra.mxu0 %v885
        %917 = vmatprep.subr.mxu0 0.0
        %918 = vmatpush1.msra.mxu0 %v886
        %919 = vmatprep.subr.mxu0 0.0
        %920 = vmatpush1.msra.mxu0 %v887
        %921 = vmatprep.subr.mxu0 0.0
        %922 = vmatpush1.msra.mxu0 %v888
        %923 = vmatprep.subr.mxu0 0.0
        %924 = vmatpush1.msra.mxu0 %v889
        %925 = vmatprep.subr.mxu0 0.0
        %926 = vmatpush1.msra.mxu0 %v890
        %927 = vmatprep.subr.mxu0 0.0
        %928 = vmatpush1.msra.mxu0 %v891
        %929 = vmatprep.subr.mxu0 0.0
        %930 = vmatpush1.msra.mxu0 %v892
        %931 = vmatprep.subr.mxu0 0.0
        %932 = vmatpush1.msra.mxu0 %v893
        %933 = vmatprep.subr.mxu0 0.0
        %934 = vmatpush1.msra.mxu0 0.0
        %935 = vmatprep.subr.mxu0 0.0
        %936 = vmatpush1.msra.mxu0 0.0
        %937 = vmatprep.subr.mxu0 0.0
        %938 = vmatpush1.msra.mxu0 0.0
        %939 = vmatprep.subr.mxu0 0.0
        %940 = vmatpush1.msra.mxu0 0.0
        %941 = vmatprep.subr.mxu0 0.0
        %942 = vmatpush1.msra.mxu0 0.0
        %943 = vmatprep.subr.mxu0 0.0
        %944 = vmatpush1.msra.mxu0 0.0
        %945 = vmatprep.subr.mxu0 0.0
        %946 = vmatpush1.msra.mxu0 0.0
        %947 = vmatprep.subr.mxu0 0.0
        %948 = vmatpush1.msra.mxu0 0.0
        %949 = vmatprep.subr.mxu0 0.0
        %950 = vmatpush1.msra.mxu0 0.0
        %951 = vmatprep.subr.mxu0 0.0
        %952 = vmatpush1.msra.mxu0 0.0
        %953 = vmatprep.subr.mxu0 0.0
        %954 = vmatpush1.msra.mxu0 0.0
        %955 = vmatprep.subr.mxu0 0.0
        %956 = vmatpush1.msra.mxu0 0.0
        %957 = vmatprep.subr.mxu0 0.0
        %958 = vmatpush1.msra.mxu0 0.0
        %959 = vmatprep.subr.mxu0 0.0
        %960 = vmatpush1.msra.mxu0 0.0
        %961 = vmatprep.subr.mxu0 0.0
        %962 = vmatpush1.msra.mxu0 0.0
        %963 = vmatprep.subr.mxu0 0.0
        %964 = vmatpush1.msra.mxu0 0.0
        %965 = vmatprep.mubr.f32.mxu0 0.0
        %966 = vmatmul.mubr.f32.gmra.mrb[0].mxu0 %v870
        %v967 = vpop.f32.mrb[0].mxu0
        %v968 = vadd.f32 %v899, %v967
        %v969 = vpop.f32.mrb[0].mxu0
        %970 = vmatprep.mubr.f32.mxu0 0.0
        %971 = vmatmul.mubr.f32.gmra.mrb[0].mxu0 %v871
        %v972 = vpop.f32.mrb[0].mxu0
        %v973 = vadd.f32 %v899, %v972
        %v974 = vpop.f32.mrb[0].mxu0
        %975 = vmatprep.mubr.f32.mxu0 0.0
        %976 = vmatmul.mubr.f32.gmra.mrb[0].mxu0 %v872
        %v977 = vpop.f32.mrb[0].mxu0
        %v978 = vadd.f32 %v899, %v977
        %v979 = vpop.f32.mrb[0].mxu0
        %980 = vmatprep.mubr.f32.mxu0 0.0
        %981 = vmatmul.mubr.f32.gmra.mrb[0].mxu0 %v873
        %v982 = vpop.f32.mrb[0].mxu0
        %v983 = vadd.f32 %v899, %v982
        %v984 = vpop.f32.mrb[0].mxu0
        %985 = vmatprep.mubr.f32.mxu0 0.0
        %986 = vmatmul.mubr.f32.gmra.mrb[0].mxu0 %v874
        %v987 = vpop.f32.mrb[0].mxu0
        %v988 = vadd.f32 %v899, %v987
        %v989 = vpop.f32.mrb[0].mxu0
        %990 = vmatprep.mubr.f32.mxu0 0.0
        %991 = vmatmul.mubr.f32.gmra.mrb[0].mxu0 %v875
        %v992 = vpop.f32.mrb[0].mxu0
        %v993 = vadd.f32 %v899, %v992
        %v994 = vpop.f32.mrb[0].mxu0
        %995 = vmatprep.mubr.f32.mxu0 0.0
        %996 = vmatmul.mubr.f32.gmra.mrb[0].mxu0 %v876
        %v997 = vpop.f32.mrb[0].mxu0
        %v998 = vadd.f32 %v899, %v997
        %v999 = vpop.f32.mrb[0].mxu0
        %1000 = vmatprep.mubr.f32.mxu0 0.0
        %1001 = vmatmul.mubr.f32.gmra.mrb[0].mxu0 %v877
        %v1002 = vpop.f32.mrb[0].mxu0
        %v1003 = vadd.f32 %v899, %v1002
        %v1004 = vpop.f32.mrb[0].mxu0
        %1005 = vdwg.mxu0
        %v1006 = vld [vmem:[#allocation6] sm:$0xff]
        %v1007 = vld [vmem:[#allocation6 + $0x8] sm:$0xff]
        %v1008 = vld [vmem:[#allocation6 + $0x10] sm:$0xff]
        %v1009 = vld [vmem:[#allocation6 + $0x18] sm:$0xff]
        %v1010 = vld [vmem:[#allocation6 + $0x20] sm:$0xff]
        %v1011 = vld [vmem:[#allocation6 + $0x28] sm:$0xff]
        %v1012 = vld [vmem:[#allocation6 + $0x30] sm:$0xff]
        %v1013 = vld [vmem:[#allocation6 + $0x38] sm:$0xff]
        %v1014 = vld [vmem:[#allocation6 + $0x40] sm:$0xff]
        %v1015 = vld [vmem:[#allocation6 + $0x48] sm:$0xff]
        %v1016 = vld [vmem:[#allocation6 + $0x50] sm:$0xff]
        %v1017 = vld [vmem:[#allocation6 + $0x58] sm:$0xff]
        %v1018 = vld [vmem:[#allocation6 + $0x60] sm:$0xff]
        %v1019 = vld [vmem:[#allocation6 + $0x68] sm:$0xff]
        %v1020 = vld [vmem:[#allocation6 + $0x70] sm:$0xff]
        %v1021 = vld [vmem:[#allocation6 + $0x78] sm:$0xff]
        %v1022 = vld [vmem:[%s761] sm:$0x1]
        %v1024 = vlaneseq
        %v1025 = vshrl.u32 %v1024, 7
        %v1026 = vsub.s32 0, %v1025
        %v1027 = vrot.slane %v1022, %v1026
        %1029 = vmatprep.subr.mxu0 0.0
        %1030 = vmatpush1.msra.mxu0 %v1006
        %1031 = vmatprep.subr.mxu0 0.0
        %1032 = vmatpush1.msra.mxu0 %v1007
        %1033 = vmatprep.subr.mxu0 0.0
        %1034 = vmatpush1.msra.mxu0 %v1008
        %1035 = vmatprep.subr.mxu0 0.0
        %1036 = vmatpush1.msra.mxu0 %v1009
        %1037 = vmatprep.subr.mxu0 0.0
        %1038 = vmatpush1.msra.mxu0 %v1010
        %1039 = vmatprep.subr.mxu0 0.0
        %1040 = vmatpush1.msra.mxu0 %v1011
        %1041 = vmatprep.subr.mxu0 0.0
        %1042 = vmatpush1.msra.mxu0 %v1012
        %1043 = vmatprep.subr.mxu0 0.0
        %1044 = vmatpush1.msra.mxu0 %v1013
        %1045 = vmatprep.subr.mxu0 0.0
        %1046 = vmatpush1.msra.mxu0 %v1014
        %1047 = vmatprep.subr.mxu0 0.0
        %1048 = vmatpush1.msra.mxu0 %v1015
        %1049 = vmatprep.subr.mxu0 0.0
        %1050 = vmatpush1.msra.mxu0 %v1016
        %1051 = vmatprep.subr.mxu0 0.0
        %1052 = vmatpush1.msra.mxu0 %v1017
        %1053 = vmatprep.subr.mxu0 0.0
        %1054 = vmatpush1.msra.mxu0 %v1018
        %1055 = vmatprep.subr.mxu0 0.0
        %1056 = vmatpush1.msra.mxu0 %v1019
        %1057 = vmatprep.subr.mxu0 0.0
        %1058 = vmatpush1.msra.mxu0 %v1020
        %1059 = vmatprep.subr.mxu0 0.0
        %1060 = vmatpush1.msra.mxu0 %v1021
        %1061 = vmatprep.subr.mxu0 0.0
        %1062 = vmatpush1.msra.mxu0 0.0
        %1063 = vmatprep.subr.mxu0 0.0
        %1064 = vmatpush1.msra.mxu0 0.0
        %1065 = vmatprep.subr.mxu0 0.0
        %1066 = vmatpush1.msra.mxu0 0.0
        %1067 = vmatprep.subr.mxu0 0.0
        %1068 = vmatpush1.msra.mxu0 0.0
        %1069 = vmatprep.subr.mxu0 0.0
        %1070 = vmatpush1.msra.mxu0 0.0
        %1071 = vmatprep.subr.mxu0 0.0
        %1072 = vmatpush1.msra.mxu0 0.0
        %1073 = vmatprep.subr.mxu0 0.0
        %1074 = vmatpush1.msra.mxu0 0.0
        %1075 = vmatprep.subr.mxu0 0.0
        %1076 = vmatpush1.msra.mxu0 0.0
        %1077 = vmatprep.subr.mxu0 0.0
        %1078 = vmatpush1.msra.mxu0 0.0
        %1079 = vmatprep.subr.mxu0 0.0
        %1080 = vmatpush1.msra.mxu0 0.0
        %1081 = vmatprep.subr.mxu0 0.0
        %1082 = vmatpush1.msra.mxu0 0.0
        %1083 = vmatprep.subr.mxu0 0.0
        %1084 = vmatpush1.msra.mxu0 0.0
        %1085 = vmatprep.subr.mxu0 0.0
        %1086 = vmatpush1.msra.mxu0 0.0
        %1087 = vmatprep.subr.mxu0 0.0
        %1088 = vmatpush1.msra.mxu0 0.0
        %1089 = vmatprep.subr.mxu0 0.0
        %1090 = vmatpush1.msra.mxu0 0.0
        %1091 = vmatprep.subr.mxu0 0.0
        %1092 = vmatpush1.msra.mxu0 0.0
        %1093 = vmatprep.mubr.f32.mxu0 0.0
        %1094 = vmatmul.mubr.f32.gmra.mrb[0].mxu0 %v870
        %v1095 = vpop.f32.mrb[0].mxu0
        %v1096 = vadd.f32 %v1027, %v1095
        %v1097 = vpop.f32.mrb[0].mxu0
        %1098 = vmatprep.mubr.f32.mxu0 0.0
        %1099 = vmatmul.mubr.f32.gmra.mrb[0].mxu0 %v871
        %v1100 = vpop.f32.mrb[0].mxu0
        %v1101 = vadd.f32 %v1027, %v1100
        %v1102 = vpop.f32.mrb[0].mxu0
        %1103 = vmatprep.mubr.f32.mxu0 0.0
        %1104 = vmatmul.mubr.f32.gmra.mrb[0].mxu0 %v872
        %v1105 = vpop.f32.mrb[0].mxu0
        %v1106 = vadd.f32 %v1027, %v1105
        %v1107 = vpop.f32.mrb[0].mxu0
        %1108 = vmatprep.mubr.f32.mxu0 0.0
        %1109 = vmatmul.mubr.f32.gmra.mrb[0].mxu0 %v873
        %v1110 = vpop.f32.mrb[0].mxu0
        %v1111 = vadd.f32 %v1027, %v1110
        %v1112 = vpop.f32.mrb[0].mxu0
        %1113 = vmatprep.mubr.f32.mxu0 0.0
        %1114 = vmatmul.mubr.f32.gmra.mrb[0].mxu0 %v874
        %v1115 = vpop.f32.mrb[0].mxu0
        %v1116 = vadd.f32 %v1027, %v1115
        %v1117 = vpop.f32.mrb[0].mxu0
        %1118 = vmatprep.mubr.f32.mxu0 0.0
        %1119 = vmatmul.mubr.f32.gmra.mrb[0].mxu0 %v875
        %v1120 = vpop.f32.mrb[0].mxu0
        %v1121 = vadd.f32 %v1027, %v1120
        %v1122 = vpop.f32.mrb[0].mxu0
        %1123 = vmatprep.mubr.f32.mxu0 0.0
        %1124 = vmatmul.mubr.f32.gmra.mrb[0].mxu0 %v876
        %v1125 = vpop.f32.mrb[0].mxu0
        %v1126 = vadd.f32 %v1027, %v1125
        %v1127 = vpop.f32.mrb[0].mxu0
        %1128 = vmatprep.mubr.f32.mxu0 0.0
        %1129 = vmatmul.mubr.f32.gmra.mrb[0].mxu0 %v877
        %v1130 = vpop.f32.mrb[0].mxu0
        %v1131 = vadd.f32 %v1027, %v1130
        %v1132 = vpop.f32.mrb[0].mxu0
        %1133 = vdwg.mxu0
        %v1134 = vld [vmem:[#allocation7] sm:$0xff]
        %v1135 = vld [vmem:[#allocation7 + $0x8] sm:$0xff]
        %v1136 = vld [vmem:[#allocation7 + $0x10] sm:$0xff]
        %v1137 = vld [vmem:[#allocation7 + $0x18] sm:$0xff]
        %v1138 = vld [vmem:[#allocation7 + $0x20] sm:$0xff]
        %v1139 = vld [vmem:[#allocation7 + $0x28] sm:$0xff]
        %v1140 = vld [vmem:[#allocation7 + $0x30] sm:$0xff]
        %v1141 = vld [vmem:[#allocation7 + $0x38] sm:$0xff]
        %v1142 = vld [vmem:[#allocation7 + $0x40] sm:$0xff]
        %v1143 = vld [vmem:[#allocation7 + $0x48] sm:$0xff]
        %v1144 = vld [vmem:[#allocation7 + $0x50] sm:$0xff]
        %v1145 = vld [vmem:[#allocation7 + $0x58] sm:$0xff]
        %v1146 = vld [vmem:[#allocation7 + $0x60] sm:$0xff]
        %v1147 = vld [vmem:[#allocation7 + $0x68] sm:$0xff]
        %v1148 = vld [vmem:[#allocation7 + $0x70] sm:$0xff]
        %v1149 = vld [vmem:[#allocation7 + $0x78] sm:$0xff]
        %v1150 = vld [vmem:[%s764] sm:$0x1]
        %v1152 = vlaneseq
        %v1153 = vshrl.u32 %v1152, 7
        %v1154 = vsub.s32 0, %v1153
        %v1155 = vrot.slane %v1150, %v1154
        %1157 = vmatprep.subr.mxu0 0.0
        %1158 = vmatpush1.msra.mxu0 %v1134
        %1159 = vmatprep.subr.mxu0 0.0
        %1160 = vmatpush1.msra.mxu0 %v1135
        %1161 = vmatprep.subr.mxu0 0.0
        %1162 = vmatpush1.msra.mxu0 %v1136
        %1163 = vmatprep.subr.mxu0 0.0
        %1164 = vmatpush1.msra.mxu0 %v1137
        %1165 = vmatprep.subr.mxu0 0.0
        %1166 = vmatpush1.msra.mxu0 %v1138
        %1167 = vmatprep.subr.mxu0 0.0
        %1168 = vmatpush1.msra.mxu0 %v1139
        %1169 = vmatprep.subr.mxu0 0.0
        %1170 = vmatpush1.msra.mxu0 %v1140
        %1171 = vmatprep.subr.mxu0 0.0
        %1172 = vmatpush1.msra.mxu0 %v1141
        %1173 = vmatprep.subr.mxu0 0.0
        %1174 = vmatpush1.msra.mxu0 %v1142
        %1175 = vmatprep.subr.mxu0 0.0
        %1176 = vmatpush1.msra.mxu0 %v1143
        %1177 = vmatprep.subr.mxu0 0.0
        %1178 = vmatpush1.msra.mxu0 %v1144
        %1179 = vmatprep.subr.mxu0 0.0
        %1180 = vmatpush1.msra.mxu0 %v1145
        %1181 = vmatprep.subr.mxu0 0.0
        %1182 = vmatpush1.msra.mxu0 %v1146
        %1183 = vmatprep.subr.mxu0 0.0
        %1184 = vmatpush1.msra.mxu0 %v1147
        %1185 = vmatprep.subr.mxu0 0.0
        %1186 = vmatpush1.msra.mxu0 %v1148
        %1187 = vmatprep.subr.mxu0 0.0
        %1188 = vmatpush1.msra.mxu0 %v1149
        %1189 = vmatprep.subr.mxu0 0.0
        %1190 = vmatpush1.msra.mxu0 0.0
        %1191 = vmatprep.subr.mxu0 0.0
        %1192 = vmatpush1.msra.mxu0 0.0
        %1193 = vmatprep.subr.mxu0 0.0
        %1194 = vmatpush1.msra.mxu0 0.0
        %1195 = vmatprep.subr.mxu0 0.0
        %1196 = vmatpush1.msra.mxu0 0.0
        %1197 = vmatprep.subr.mxu0 0.0
        %1198 = vmatpush1.msra.mxu0 0.0
        %1199 = vmatprep.subr.mxu0 0.0
        %1200 = vmatpush1.msra.mxu0 0.0
        %1201 = vmatprep.subr.mxu0 0.0
        %1202 = vmatpush1.msra.mxu0 0.0
        %1203 = vmatprep.subr.mxu0 0.0
        %1204 = vmatpush1.msra.mxu0 0.0
        %1205 = vmatprep.subr.mxu0 0.0
        %1206 = vmatpush1.msra.mxu0 0.0
        %1207 = vmatprep.subr.mxu0 0.0
        %1208 = vmatpush1.msra.mxu0 0.0
        %1209 = vmatprep.subr.mxu0 0.0
        %1210 = vmatpush1.msra.mxu0 0.0
        %1211 = vmatprep.subr.mxu0 0.0
        %1212 = vmatpush1.msra.mxu0 0.0
        %1213 = vmatprep.subr.mxu0 0.0
        %1214 = vmatpush1.msra.mxu0 0.0
        %1215 = vmatprep.subr.mxu0 0.0
        %1216 = vmatpush1.msra.mxu0 0.0
        %1217 = vmatprep.subr.mxu0 0.0
        %1218 = vmatpush1.msra.mxu0 0.0
        %1219 = vmatprep.subr.mxu0 0.0
        %1220 = vmatpush1.msra.mxu0 0.0
        %1221 = vmatprep.mubr.f32.mxu0 0.0
        %1222 = vmatmul.mubr.f32.gmra.mrb[0].mxu0 %v870
        %v1223 = vpop.f32.mrb[0].mxu0
        %v1224 = vadd.f32 %v1155, %v1223
        %v1225 = vpop.f32.mrb[0].mxu0
        %1226 = vmatprep.mubr.f32.mxu0 0.0
        %1227 = vmatmul.mubr.f32.gmra.mrb[0].mxu0 %v871
        %v1228 = vpop.f32.mrb[0].mxu0
        %v1229 = vadd.f32 %v1155, %v1228
        %v1230 = vpop.f32.mrb[0].mxu0
        %1231 = vmatprep.mubr.f32.mxu0 0.0
        %1232 = vmatmul.mubr.f32.gmra.mrb[0].mxu0 %v872
        %v1233 = vpop.f32.mrb[0].mxu0
        %v1234 = vadd.f32 %v1155, %v1233
        %v1235 = vpop.f32.mrb[0].mxu0
        %1236 = vmatprep.mubr.f32.mxu0 0.0
        %1237 = vmatmul.mubr.f32.gmra.mrb[0].mxu0 %v873
        %v1238 = vpop.f32.mrb[0].mxu0
        %v1239 = vadd.f32 %v1155, %v1238
        %v1240 = vpop.f32.mrb[0].mxu0
        %1241 = vmatprep.mubr.f32.mxu0 0.0
        %1242 = vmatmul.mubr.f32.gmra.mrb[0].mxu0 %v874
        %v1243 = vpop.f32.mrb[0].mxu0
        %v1244 = vadd.f32 %v1155, %v1243
        %v1245 = vpop.f32.mrb[0].mxu0
        %1246 = vmatprep.mubr.f32.mxu0 0.0
        %1247 = vmatmul.mubr.f32.gmra.mrb[0].mxu0 %v875
        %v1248 = vpop.f32.mrb[0].mxu0
        %v1249 = vadd.f32 %v1155, %v1248
        %v1250 = vpop.f32.mrb[0].mxu0
        %1251 = vmatprep.mubr.f32.mxu0 0.0
        %1252 = vmatmul.mubr.f32.gmra.mrb[0].mxu0 %v876
        %v1253 = vpop.f32.mrb[0].mxu0
        %v1254 = vadd.f32 %v1155, %v1253
        %v1255 = vpop.f32.mrb[0].mxu0
        %1256 = vmatprep.mubr.f32.mxu0 0.0
        %1257 = vmatmul.mubr.f32.gmra.mrb[0].mxu0 %v877
        %v1258 = vpop.f32.mrb[0].mxu0
        %v1259 = vadd.f32 %v1155, %v1258
        %v1260 = vpop.f32.mrb[0].mxu0
        %1261 = vdwg.mxu0
        %v1262 = vld [vmem:[%s767] sm:$0x1]
        %v1263 = vmul.f32 %v968, %v968
        %v1264 = vmul.f32 %v973, %v973
        %v1265 = vmul.f32 %v978, %v978
        %v1266 = vmul.f32 %v983, %v983
        %v1267 = vmul.f32 %v988, %v988
        %v1268 = vmul.f32 %v993, %v993
        %v1269 = vmul.f32 %v998, %v998
        %v1270 = vmul.f32 %v1003, %v1003
        %vm1271 = vcmask 261120
        %v1272 = vsel %vm1271, %v1263, 0.0
        %1273 = vadd.xlane.f32.xlu0 %v1272
        %v1274 = vpop.xlane.xlu0 %1273
        %v1275 = vsel %vm1271, %v1264, 0.0
        %1276 = vadd.xlane.f32.xlu0 %v1275
        %v1277 = vpop.xlane.xlu0 %1276
        %v1278 = vsel %vm1271, %v1265, 0.0
        %1279 = vadd.xlane.f32.xlu0 %v1278
        %v1280 = vpop.xlane.xlu0 %1279
        %v1281 = vsel %vm1271, %v1266, 0.0
        %1282 = vadd.xlane.f32.xlu0 %v1281
        %v1283 = vpop.xlane.xlu0 %1282
        %v1284 = vsel %vm1271, %v1267, 0.0
        %1285 = vadd.xlane.f32.xlu0 %v1284
        %v1286 = vpop.xlane.xlu0 %1285
        %v1287 = vsel %vm1271, %v1268, 0.0
        %1288 = vadd.xlane.f32.xlu0 %v1287
        %v1289 = vpop.xlane.xlu0 %1288
        %v1290 = vsel %vm1271, %v1269, 0.0
        %1291 = vadd.xlane.f32.xlu0 %v1290
        %v1292 = vpop.xlane.xlu0 %1291
        %v1293 = vsel %vm1271, %v1270, 0.0
        %1294 = vadd.xlane.f32.xlu0 %v1293
        %v1295 = vpop.xlane.xlu0 %1294
        %v1296 = vrcp.pop 32.0
        %v1297 = vmul.f32 %v1274, %v1296
        %v1298 = vmul.f32 %v1277, %v1296
        %v1299 = vmul.f32 %v1280, %v1296
        %v1300 = vmul.f32 %v1283, %v1296
        %v1301 = vmul.f32 %v1286, %v1296
        %v1302 = vmul.f32 %v1289, %v1296
        %v1303 = vmul.f32 %v1292, %v1296
        %v1304 = vmul.f32 %v1295, %v1296
        %v1305 = vadd.f32 %v1297, 1e-05
        %v1306 = vadd.f32 %v1298, 1e-05
        %v1307 = vadd.f32 %v1299, 1e-05
        %v1308 = vadd.f32 %v1300, 1e-05
        %v1309 = vadd.f32 %v1301, 1e-05
        %v1310 = vadd.f32 %v1302, 1e-05
        %v1311 = vadd.f32 %v1303, 1e-05
        %v1312 = vadd.f32 %v1304, 1e-05
        %v1313 = vrsqrt.pop %v1305
        %v1314 = vrsqrt.pop %v1306
        %v1315 = vrsqrt.pop %v1307
        %v1316 = vrsqrt.pop %v1308
        %v1317 = vrsqrt.pop %v1309
        %v1318 = vrsqrt.pop %v1310
        %v1319 = vrsqrt.pop %v1311
        %v1320 = vrsqrt.pop %v1312
        %v1321 = vmul.f32 %v968, %v1313
        %v1322 = vmul.f32 %v973, %v1314
        %v1323 = vmul.f32 %v978, %v1315
        %v1324 = vmul.f32 %v983, %v1316
        %v1325 = vmul.f32 %v988, %v1317
        %v1326 = vmul.f32 %v993, %v1318
        %v1327 = vmul.f32 %v998, %v1319
        %v1328 = vmul.f32 %v1003, %v1320
        %1337 = vrot.lane.b32.xlu0 %v1263, 96
        %v1338 = vpop.permute.xlu0 %1337
        %1339 = vrot.lane.b32.xlu0 %v1264, 96
        %v1340 = vpop.permute.xlu0 %1339
        %1341 = vrot.lane.b32.xlu0 %v1265, 96
        %v1342 = vpop.permute.xlu0 %1341
        %1343 = vrot.lane.b32.xlu0 %v1266, 96
        %v1344 = vpop.permute.xlu0 %1343
        %1345 = vrot.lane.b32.xlu0 %v1267, 96
        %v1346 = vpop.permute.xlu0 %1345
        %1347 = vrot.lane.b32.xlu0 %v1268, 96
        %v1348 = vpop.permute.xlu0 %1347
        %1349 = vrot.lane.b32.xlu0 %v1269, 96
        %v1350 = vpop.permute.xlu0 %1349
        %1351 = vrot.lane.b32.xlu0 %v1270, 96
        %v1352 = vpop.permute.xlu0 %1351
        %v1361 = vsel %vm1271, %v1338, 0.0
        %1362 = vadd.xlane.f32.xlu0 %v1361
        %v1363 = vpop.xlane.xlu0 %1362
        %v1364 = vsel %vm1271, %v1340, 0.0
        %1365 = vadd.xlane.f32.xlu0 %v1364
        %v1366 = vpop.xlane.xlu0 %1365
        %v1367 = vsel %vm1271, %v1342, 0.0
        %1368 = vadd.xlane.f32.xlu0 %v1367
        %v1369 = vpop.xlane.xlu0 %1368
        %v1370 = vsel %vm1271, %v1344, 0.0
        %1371 = vadd.xlane.f32.xlu0 %v1370
        %v1372 = vpop.xlane.xlu0 %1371
        %v1373 = vsel %vm1271, %v1346, 0.0
        %1374 = vadd.xlane.f32.xlu0 %v1373
        %v1375 = vpop.xlane.xlu0 %1374
        %v1376 = vsel %vm1271, %v1348, 0.0
        %1377 = vadd.xlane.f32.xlu0 %v1376
        %v1378 = vpop.xlane.xlu0 %1377
        %v1379 = vsel %vm1271, %v1350, 0.0
        %1380 = vadd.xlane.f32.xlu0 %v1379
        %v1381 = vpop.xlane.xlu0 %1380
        %v1382 = vsel %vm1271, %v1352, 0.0
        %1383 = vadd.xlane.f32.xlu0 %v1382
        %v1384 = vpop.xlane.xlu0 %1383
        %v1385 = vmul.f32 %v1363, %v1296
        %v1386 = vmul.f32 %v1366, %v1296
        %v1387 = vmul.f32 %v1369, %v1296
        %v1388 = vmul.f32 %v1372, %v1296
        %v1389 = vmul.f32 %v1375, %v1296
        %v1390 = vmul.f32 %v1378, %v1296
        %v1391 = vmul.f32 %v1381, %v1296
        %v1392 = vmul.f32 %v1384, %v1296
        %v1393 = vadd.f32 %v1385, 1e-05
        %v1394 = vadd.f32 %v1386, 1e-05
        %v1395 = vadd.f32 %v1387, 1e-05
        %v1396 = vadd.f32 %v1388, 1e-05
        %v1397 = vadd.f32 %v1389, 1e-05
        %v1398 = vadd.f32 %v1390, 1e-05
        %v1399 = vadd.f32 %v1391, 1e-05
        %v1400 = vadd.f32 %v1392, 1e-05
        %v1401 = vrsqrt.pop %v1393
        %v1402 = vrsqrt.pop %v1394
        %v1403 = vrsqrt.pop %v1395
        %v1404 = vrsqrt.pop %v1396
        %v1405 = vrsqrt.pop %v1397
        %v1406 = vrsqrt.pop %v1398
        %v1407 = vrsqrt.pop %v1399
        %v1408 = vrsqrt.pop %v1400
        %v1409 = vmul.f32 %v968, %v1401
        %v1410 = vmul.f32 %v973, %v1402
        %v1411 = vmul.f32 %v978, %v1403
        %v1412 = vmul.f32 %v983, %v1404
        %v1413 = vmul.f32 %v988, %v1405
        %v1414 = vmul.f32 %v993, %v1406
        %v1415 = vmul.f32 %v998, %v1407
        %v1416 = vmul.f32 %v1003, %v1408
        %1417 = vrot.lane.b32.xlu0 %v1263, 64
        %v1418 = vpop.permute.xlu0 %1417
        %1419 = vrot.lane.b32.xlu0 %v1264, 64
        %v1420 = vpop.permute.xlu0 %1419
        %1421 = vrot.lane.b32.xlu0 %v1265, 64
        %v1422 = vpop.permute.xlu0 %1421
        %1423 = vrot.lane.b32.xlu0 %v1266, 64
        %v1424 = vpop.permute.xlu0 %1423
        %1425 = vrot.lane.b32.xlu0 %v1267, 64
        %v1426 = vpop.permute.xlu0 %1425
        %1427 = vrot.lane.b32.xlu0 %v1268, 64
        %v1428 = vpop.permute.xlu0 %1427
        %1429 = vrot.lane.b32.xlu0 %v1269, 64
        %v1430 = vpop.permute.xlu0 %1429
        %1431 = vrot.lane.b32.xlu0 %v1270, 64
        %v1432 = vpop.permute.xlu0 %1431
        %v1441 = vsel %vm1271, %v1418, 0.0
        %1442 = vadd.xlane.f32.xlu0 %v1441
        %v1443 = vpop.xlane.xlu0 %1442
        %v1444 = vsel %vm1271, %v1420, 0.0
        %1445 = vadd.xlane.f32.xlu0 %v1444
        %v1446 = vpop.xlane.xlu0 %1445
        %v1447 = vsel %vm1271, %v1422, 0.0
        %1448 = vadd.xlane.f32.xlu0 %v1447
        %v1449 = vpop.xlane.xlu0 %1448
        %v1450 = vsel %vm1271, %v1424, 0.0
        %1451 = vadd.xlane.f32.xlu0 %v1450
        %v1452 = vpop.xlane.xlu0 %1451
        %v1453 = vsel %vm1271, %v1426, 0.0
        %1454 = vadd.xlane.f32.xlu0 %v1453
        %v1455 = vpop.xlane.xlu0 %1454
        %v1456 = vsel %vm1271, %v1428, 0.0
        %1457 = vadd.xlane.f32.xlu0 %v1456
        %v1458 = vpop.xlane.xlu0 %1457
        %v1459 = vsel %vm1271, %v1430, 0.0
        %1460 = vadd.xlane.f32.xlu0 %v1459
        %v1461 = vpop.xlane.xlu0 %1460
        %v1462 = vsel %vm1271, %v1432, 0.0
        %1463 = vadd.xlane.f32.xlu0 %v1462
        %v1464 = vpop.xlane.xlu0 %1463
        %v1465 = vmul.f32 %v1443, %v1296
        %v1466 = vmul.f32 %v1446, %v1296
        %v1467 = vmul.f32 %v1449, %v1296
        %v1468 = vmul.f32 %v1452, %v1296
        %v1469 = vmul.f32 %v1455, %v1296
        %v1470 = vmul.f32 %v1458, %v1296
        %v1471 = vmul.f32 %v1461, %v1296
        %v1472 = vmul.f32 %v1464, %v1296
        %v1473 = vadd.f32 %v1465, 1e-05
        %v1474 = vadd.f32 %v1466, 1e-05
        %v1475 = vadd.f32 %v1467, 1e-05
        %v1476 = vadd.f32 %v1468, 1e-05
        %v1477 = vadd.f32 %v1469, 1e-05
        %v1478 = vadd.f32 %v1470, 1e-05
        %v1479 = vadd.f32 %v1471, 1e-05
        %v1480 = vadd.f32 %v1472, 1e-05
        %v1481 = vrsqrt.pop %v1473
        %v1482 = vrsqrt.pop %v1474
        %v1483 = vrsqrt.pop %v1475
        %v1484 = vrsqrt.pop %v1476
        %v1485 = vrsqrt.pop %v1477
        %v1486 = vrsqrt.pop %v1478
        %v1487 = vrsqrt.pop %v1479
        %v1488 = vrsqrt.pop %v1480
        %v1489 = vmul.f32 %v968, %v1481
        %v1490 = vmul.f32 %v973, %v1482
        %v1491 = vmul.f32 %v978, %v1483
        %v1492 = vmul.f32 %v983, %v1484
        %v1493 = vmul.f32 %v988, %v1485
        %v1494 = vmul.f32 %v993, %v1486
        %v1495 = vmul.f32 %v998, %v1487
        %v1496 = vmul.f32 %v1003, %v1488
        %1497 = vrot.lane.b32.xlu0 %v1263, 32
        %v1498 = vpop.permute.xlu0 %1497
        %1499 = vrot.lane.b32.xlu0 %v1264, 32
        %v1500 = vpop.permute.xlu0 %1499
        %1501 = vrot.lane.b32.xlu0 %v1265, 32
        %v1502 = vpop.permute.xlu0 %1501
        %1503 = vrot.lane.b32.xlu0 %v1266, 32
        %v1504 = vpop.permute.xlu0 %1503
        %1505 = vrot.lane.b32.xlu0 %v1267, 32
        %v1506 = vpop.permute.xlu0 %1505
        %1507 = vrot.lane.b32.xlu0 %v1268, 32
        %v1508 = vpop.permute.xlu0 %1507
        %1509 = vrot.lane.b32.xlu0 %v1269, 32
        %v1510 = vpop.permute.xlu0 %1509
        %1511 = vrot.lane.b32.xlu0 %v1270, 32
        %v1512 = vpop.permute.xlu0 %1511
        %v1521 = vsel %vm1271, %v1498, 0.0
        %1522 = vadd.xlane.f32.xlu0 %v1521
        %v1523 = vpop.xlane.xlu0 %1522
        %v1524 = vsel %vm1271, %v1500, 0.0
        %1525 = vadd.xlane.f32.xlu0 %v1524
        %v1526 = vpop.xlane.xlu0 %1525
        %v1527 = vsel %vm1271, %v1502, 0.0
        %1528 = vadd.xlane.f32.xlu0 %v1527
        %v1529 = vpop.xlane.xlu0 %1528
        %v1530 = vsel %vm1271, %v1504, 0.0
        %1531 = vadd.xlane.f32.xlu0 %v1530
        %v1532 = vpop.xlane.xlu0 %1531
        %v1533 = vsel %vm1271, %v1506, 0.0
        %1534 = vadd.xlane.f32.xlu0 %v1533
        %v1535 = vpop.xlane.xlu0 %1534
        %v1536 = vsel %vm1271, %v1508, 0.0
        %1537 = vadd.xlane.f32.xlu0 %v1536
        %v1538 = vpop.xlane.xlu0 %1537
        %v1539 = vsel %vm1271, %v1510, 0.0
        %1540 = vadd.xlane.f32.xlu0 %v1539
        %v1541 = vpop.xlane.xlu0 %1540
        %v1542 = vsel %vm1271, %v1512, 0.0
        %1543 = vadd.xlane.f32.xlu0 %v1542
        %v1544 = vpop.xlane.xlu0 %1543
        %v1545 = vmul.f32 %v1523, %v1296
        %v1546 = vmul.f32 %v1526, %v1296
        %v1547 = vmul.f32 %v1529, %v1296
        %v1548 = vmul.f32 %v1532, %v1296
        %v1549 = vmul.f32 %v1535, %v1296
        %v1550 = vmul.f32 %v1538, %v1296
        %v1551 = vmul.f32 %v1541, %v1296
        %v1552 = vmul.f32 %v1544, %v1296
        %v1553 = vadd.f32 %v1545, 1e-05
        %v1554 = vadd.f32 %v1546, 1e-05
        %v1555 = vadd.f32 %v1547, 1e-05
        %v1556 = vadd.f32 %v1548, 1e-05
        %v1557 = vadd.f32 %v1549, 1e-05
        %v1558 = vadd.f32 %v1550, 1e-05
        %v1559 = vadd.f32 %v1551, 1e-05
        %v1560 = vadd.f32 %v1552, 1e-05
        %v1561 = vrsqrt.pop %v1553
        %v1562 = vrsqrt.pop %v1554
        %v1563 = vrsqrt.pop %v1555
        %v1564 = vrsqrt.pop %v1556
        %v1565 = vrsqrt.pop %v1557
        %v1566 = vrsqrt.pop %v1558
        %v1567 = vrsqrt.pop %v1559
        %v1568 = vrsqrt.pop %v1560
        %v1569 = vmul.f32 %v968, %v1561
        %v1570 = vmul.f32 %v973, %v1562
        %v1571 = vmul.f32 %v978, %v1563
        %v1572 = vmul.f32 %v983, %v1564
        %v1573 = vmul.f32 %v988, %v1565
        %v1574 = vmul.f32 %v993, %v1566
        %v1575 = vmul.f32 %v998, %v1567
        %v1576 = vmul.f32 %v1003, %v1568
        %v1577 = vsel %vm1271, %v1321, %v1409
        %v1578 = vsel %vm1271, %v1322, %v1410
        %v1579 = vsel %vm1271, %v1323, %v1411
        %v1580 = vsel %vm1271, %v1324, %v1412
        %v1581 = vsel %vm1271, %v1325, %v1413
        %v1582 = vsel %vm1271, %v1326, %v1414
        %v1583 = vsel %vm1271, %v1327, %v1415
        %v1584 = vsel %vm1271, %v1328, %v1416
        %vm1585 = vcmask 523264
        %v1586 = vsel %vm1585, %v1577, %v1489
        %v1587 = vsel %vm1585, %v1578, %v1490
        %v1588 = vsel %vm1585, %v1579, %v1491
        %v1589 = vsel %vm1585, %v1580, %v1492
        %v1590 = vsel %vm1585, %v1581, %v1493
        %v1591 = vsel %vm1585, %v1582, %v1494
        %v1592 = vsel %vm1585, %v1583, %v1495
        %v1593 = vsel %vm1585, %v1584, %v1496
        %vm1594 = vcmask 785408
        %v1595 = vsel %vm1594, %v1586, %v1569
        %v1596 = vsel %vm1594, %v1587, %v1570
        %v1597 = vsel %vm1594, %v1588, %v1571
        %v1598 = vsel %vm1594, %v1589, %v1572
        %v1599 = vsel %vm1594, %v1590, %v1573
        %v1600 = vsel %vm1594, %v1591, %v1574
        %v1601 = vsel %vm1594, %v1592, %v1575
        %v1602 = vsel %vm1594, %v1593, %v1576
        %v1604 = vlaneseq
        %v1605 = vshrl.u32 %v1604, 7
        %v1606 = vsub.s32 0, %v1605
        %v1607 = vrot.slane %v1262, %v1606
        %v1609 = vmul.f32 %v1595, %v1607
        %v1610 = vmul.f32 %v1596, %v1607
        %v1611 = vmul.f32 %v1597, %v1607
        %v1612 = vmul.f32 %v1598, %v1607
        %v1613 = vmul.f32 %v1599, %v1607
        %v1614 = vmul.f32 %v1600, %v1607
        %v1615 = vmul.f32 %v1601, %v1607
        %v1616 = vmul.f32 %v1602, %v1607
        %v1617 = vld [vmem:[%s770] sm:$0x1]
        %v1618 = vmul.f32 %v1096, %v1096
        %v1619 = vmul.f32 %v1101, %v1101
        %v1620 = vmul.f32 %v1106, %v1106
        %v1621 = vmul.f32 %v1111, %v1111
        %v1622 = vmul.f32 %v1116, %v1116
        %v1623 = vmul.f32 %v1121, %v1121
        %v1624 = vmul.f32 %v1126, %v1126
        %v1625 = vmul.f32 %v1131, %v1131
        %v1626 = vsel %vm1271, %v1618, 0.0
        %1627 = vadd.xlane.f32.xlu0 %v1626
        %v1628 = vpop.xlane.xlu0 %1627
        %v1629 = vsel %vm1271, %v1619, 0.0
        %1630 = vadd.xlane.f32.xlu0 %v1629
        %v1631 = vpop.xlane.xlu0 %1630
        %v1632 = vsel %vm1271, %v1620, 0.0
        %1633 = vadd.xlane.f32.xlu0 %v1632
        %v1634 = vpop.xlane.xlu0 %1633
        %v1635 = vsel %vm1271, %v1621, 0.0
        %1636 = vadd.xlane.f32.xlu0 %v1635
        %v1637 = vpop.xlane.xlu0 %1636
        %v1638 = vsel %vm1271, %v1622, 0.0
        %1639 = vadd.xlane.f32.xlu0 %v1638
        %v1640 = vpop.xlane.xlu0 %1639
        %v1641 = vsel %vm1271, %v1623, 0.0
        %1642 = vadd.xlane.f32.xlu0 %v1641
        %v1643 = vpop.xlane.xlu0 %1642
        %v1644 = vsel %vm1271, %v1624, 0.0
        %1645 = vadd.xlane.f32.xlu0 %v1644
        %v1646 = vpop.xlane.xlu0 %1645
        %v1647 = vsel %vm1271, %v1625, 0.0
        %1648 = vadd.xlane.f32.xlu0 %v1647
        %v1649 = vpop.xlane.xlu0 %1648
        %v1650 = vmul.f32 %v1628, %v1296
        %v1651 = vmul.f32 %v1631, %v1296
        %v1652 = vmul.f32 %v1634, %v1296
        %v1653 = vmul.f32 %v1637, %v1296
        %v1654 = vmul.f32 %v1640, %v1296
        %v1655 = vmul.f32 %v1643, %v1296
        %v1656 = vmul.f32 %v1646, %v1296
        %v1657 = vmul.f32 %v1649, %v1296
        %v1658 = vadd.f32 %v1650, 1e-05
        %v1659 = vadd.f32 %v1651, 1e-05
        %v1660 = vadd.f32 %v1652, 1e-05
        %v1661 = vadd.f32 %v1653, 1e-05
        %v1662 = vadd.f32 %v1654, 1e-05
        %v1663 = vadd.f32 %v1655, 1e-05
        %v1664 = vadd.f32 %v1656, 1e-05
        %v1665 = vadd.f32 %v1657, 1e-05
        %v1666 = vrsqrt.pop %v1658
        %v1667 = vrsqrt.pop %v1659
        %v1668 = vrsqrt.pop %v1660
        %v1669 = vrsqrt.pop %v1661
        %v1670 = vrsqrt.pop %v1662
        %v1671 = vrsqrt.pop %v1663
        %v1672 = vrsqrt.pop %v1664
        %v1673 = vrsqrt.pop %v1665
        %v1674 = vmul.f32 %v1096, %v1666
        %v1675 = vmul.f32 %v1101, %v1667
        %v1676 = vmul.f32 %v1106, %v1668
        %v1677 = vmul.f32 %v1111, %v1669
        %v1678 = vmul.f32 %v1116, %v1670
        %v1679 = vmul.f32 %v1121, %v1671
        %v1680 = vmul.f32 %v1126, %v1672
        %v1681 = vmul.f32 %v1131, %v1673
        %1690 = vrot.lane.b32.xlu0 %v1618, 96
        %v1691 = vpop.permute.xlu0 %1690
        %1692 = vrot.lane.b32.xlu0 %v1619, 96
        %v1693 = vpop.permute.xlu0 %1692
        %1694 = vrot.lane.b32.xlu0 %v1620, 96
        %v1695 = vpop.permute.xlu0 %1694
        %1696 = vrot.lane.b32.xlu0 %v1621, 96
        %v1697 = vpop.permute.xlu0 %1696
        %1698 = vrot.lane.b32.xlu0 %v1622, 96
        %v1699 = vpop.permute.xlu0 %1698
        %1700 = vrot.lane.b32.xlu0 %v1623, 96
        %v1701 = vpop.permute.xlu0 %1700
        %1702 = vrot.lane.b32.xlu0 %v1624, 96
        %v1703 = vpop.permute.xlu0 %1702
        %1704 = vrot.lane.b32.xlu0 %v1625, 96
        %v1705 = vpop.permute.xlu0 %1704
        %v1714 = vsel %vm1271, %v1691, 0.0
        %1715 = vadd.xlane.f32.xlu0 %v1714
        %v1716 = vpop.xlane.xlu0 %1715
        %v1717 = vsel %vm1271, %v1693, 0.0
        %1718 = vadd.xlane.f32.xlu0 %v1717
        %v1719 = vpop.xlane.xlu0 %1718
        %v1720 = vsel %vm1271, %v1695, 0.0
        %1721 = vadd.xlane.f32.xlu0 %v1720
        %v1722 = vpop.xlane.xlu0 %1721
        %v1723 = vsel %vm1271, %v1697, 0.0
        %1724 = vadd.xlane.f32.xlu0 %v1723
        %v1725 = vpop.xlane.xlu0 %1724
        %v1726 = vsel %vm1271, %v1699, 0.0
        %1727 = vadd.xlane.f32.xlu0 %v1726
        %v1728 = vpop.xlane.xlu0 %1727
        %v1729 = vsel %vm1271, %v1701, 0.0
        %1730 = vadd.xlane.f32.xlu0 %v1729
        %v1731 = vpop.xlane.xlu0 %1730
        %v1732 = vsel %vm1271, %v1703, 0.0
        %1733 = vadd.xlane.f32.xlu0 %v1732
        %v1734 = vpop.xlane.xlu0 %1733
        %v1735 = vsel %vm1271, %v1705, 0.0
        %1736 = vadd.xlane.f32.xlu0 %v1735
        %v1737 = vpop.xlane.xlu0 %1736
        %v1738 = vmul.f32 %v1716, %v1296
        %v1739 = vmul.f32 %v1719, %v1296
        %v1740 = vmul.f32 %v1722, %v1296
        %v1741 = vmul.f32 %v1725, %v1296
        %v1742 = vmul.f32 %v1728, %v1296
        %v1743 = vmul.f32 %v1731, %v1296
        %v1744 = vmul.f32 %v1734, %v1296
        %v1745 = vmul.f32 %v1737, %v1296
        %v1746 = vadd.f32 %v1738, 1e-05
        %v1747 = vadd.f32 %v1739, 1e-05
        %v1748 = vadd.f32 %v1740, 1e-05
        %v1749 = vadd.f32 %v1741, 1e-05
        %v1750 = vadd.f32 %v1742, 1e-05
        %v1751 = vadd.f32 %v1743, 1e-05
        %v1752 = vadd.f32 %v1744, 1e-05
        %v1753 = vadd.f32 %v1745, 1e-05
        %v1754 = vrsqrt.pop %v1746
        %v1755 = vrsqrt.pop %v1747
        %v1756 = vrsqrt.pop %v1748
        %v1757 = vrsqrt.pop %v1749
        %v1758 = vrsqrt.pop %v1750
        %v1759 = vrsqrt.pop %v1751
        %v1760 = vrsqrt.pop %v1752
        %v1761 = vrsqrt.pop %v1753
        %v1762 = vmul.f32 %v1096, %v1754
        %v1763 = vmul.f32 %v1101, %v1755
        %v1764 = vmul.f32 %v1106, %v1756
        %v1765 = vmul.f32 %v1111, %v1757
        %v1766 = vmul.f32 %v1116, %v1758
        %v1767 = vmul.f32 %v1121, %v1759
        %v1768 = vmul.f32 %v1126, %v1760
        %v1769 = vmul.f32 %v1131, %v1761
        %1770 = vrot.lane.b32.xlu0 %v1618, 64
        %v1771 = vpop.permute.xlu0 %1770
        %1772 = vrot.lane.b32.xlu0 %v1619, 64
        %v1773 = vpop.permute.xlu0 %1772
        %1774 = vrot.lane.b32.xlu0 %v1620, 64
        %v1775 = vpop.permute.xlu0 %1774
        %1776 = vrot.lane.b32.xlu0 %v1621, 64
        %v1777 = vpop.permute.xlu0 %1776
        %1778 = vrot.lane.b32.xlu0 %v1622, 64
        %v1779 = vpop.permute.xlu0 %1778
        %1780 = vrot.lane.b32.xlu0 %v1623, 64
        %v1781 = vpop.permute.xlu0 %1780
        %1782 = vrot.lane.b32.xlu0 %v1624, 64
        %v1783 = vpop.permute.xlu0 %1782
        %1784 = vrot.lane.b32.xlu0 %v1625, 64
        %v1785 = vpop.permute.xlu0 %1784
        %v1794 = vsel %vm1271, %v1771, 0.0
        %1795 = vadd.xlane.f32.xlu0 %v1794
        %v1796 = vpop.xlane.xlu0 %1795
        %v1797 = vsel %vm1271, %v1773, 0.0
        %1798 = vadd.xlane.f32.xlu0 %v1797
        %v1799 = vpop.xlane.xlu0 %1798
        %v1800 = vsel %vm1271, %v1775, 0.0
        %1801 = vadd.xlane.f32.xlu0 %v1800
        %v1802 = vpop.xlane.xlu0 %1801
        %v1803 = vsel %vm1271, %v1777, 0.0
        %1804 = vadd.xlane.f32.xlu0 %v1803
        %v1805 = vpop.xlane.xlu0 %1804
        %v1806 = vsel %vm1271, %v1779, 0.0
        %1807 = vadd.xlane.f32.xlu0 %v1806
        %v1808 = vpop.xlane.xlu0 %1807
        %v1809 = vsel %vm1271, %v1781, 0.0
        %1810 = vadd.xlane.f32.xlu0 %v1809
        %v1811 = vpop.xlane.xlu0 %1810
        %v1812 = vsel %vm1271, %v1783, 0.0
        %1813 = vadd.xlane.f32.xlu0 %v1812
        %v1814 = vpop.xlane.xlu0 %1813
        %v1815 = vsel %vm1271, %v1785, 0.0
        %1816 = vadd.xlane.f32.xlu0 %v1815
        %v1817 = vpop.xlane.xlu0 %1816
        %v1818 = vmul.f32 %v1796, %v1296
        %v1819 = vmul.f32 %v1799, %v1296
        %v1820 = vmul.f32 %v1802, %v1296
        %v1821 = vmul.f32 %v1805, %v1296
        %v1822 = vmul.f32 %v1808, %v1296
        %v1823 = vmul.f32 %v1811, %v1296
        %v1824 = vmul.f32 %v1814, %v1296
        %v1825 = vmul.f32 %v1817, %v1296
        %v1826 = vadd.f32 %v1818, 1e-05
        %v1827 = vadd.f32 %v1819, 1e-05
        %v1828 = vadd.f32 %v1820, 1e-05
        %v1829 = vadd.f32 %v1821, 1e-05
        %v1830 = vadd.f32 %v1822, 1e-05
        %v1831 = vadd.f32 %v1823, 1e-05
        %v1832 = vadd.f32 %v1824, 1e-05
        %v1833 = vadd.f32 %v1825, 1e-05
        %v1834 = vrsqrt.pop %v1826
        %v1835 = vrsqrt.pop %v1827
        %v1836 = vrsqrt.pop %v1828
        %v1837 = vrsqrt.pop %v1829
        %v1838 = vrsqrt.pop %v1830
        %v1839 = vrsqrt.pop %v1831
        %v1840 = vrsqrt.pop %v1832
        %v1841 = vrsqrt.pop %v1833
        %v1842 = vmul.f32 %v1096, %v1834
        %v1843 = vmul.f32 %v1101, %v1835
        %v1844 = vmul.f32 %v1106, %v1836
        %v1845 = vmul.f32 %v1111, %v1837
        %v1846 = vmul.f32 %v1116, %v1838
        %v1847 = vmul.f32 %v1121, %v1839
        %v1848 = vmul.f32 %v1126, %v1840
        %v1849 = vmul.f32 %v1131, %v1841
        %1850 = vrot.lane.b32.xlu0 %v1618, 32
        %v1851 = vpop.permute.xlu0 %1850
        %1852 = vrot.lane.b32.xlu0 %v1619, 32
        %v1853 = vpop.permute.xlu0 %1852
        %1854 = vrot.lane.b32.xlu0 %v1620, 32
        %v1855 = vpop.permute.xlu0 %1854
        %1856 = vrot.lane.b32.xlu0 %v1621, 32
        %v1857 = vpop.permute.xlu0 %1856
        %1858 = vrot.lane.b32.xlu0 %v1622, 32
        %v1859 = vpop.permute.xlu0 %1858
        %1860 = vrot.lane.b32.xlu0 %v1623, 32
        %v1861 = vpop.permute.xlu0 %1860
        %1862 = vrot.lane.b32.xlu0 %v1624, 32
        %v1863 = vpop.permute.xlu0 %1862
        %1864 = vrot.lane.b32.xlu0 %v1625, 32
        %v1865 = vpop.permute.xlu0 %1864
        %v1874 = vsel %vm1271, %v1851, 0.0
        %1875 = vadd.xlane.f32.xlu0 %v1874
        %v1876 = vpop.xlane.xlu0 %1875
        %v1877 = vsel %vm1271, %v1853, 0.0
        %1878 = vadd.xlane.f32.xlu0 %v1877
        %v1879 = vpop.xlane.xlu0 %1878
        %v1880 = vsel %vm1271, %v1855, 0.0
        %1881 = vadd.xlane.f32.xlu0 %v1880
        %v1882 = vpop.xlane.xlu0 %1881
        %v1883 = vsel %vm1271, %v1857, 0.0
        %1884 = vadd.xlane.f32.xlu0 %v1883
        %v1885 = vpop.xlane.xlu0 %1884
        %v1886 = vsel %vm1271, %v1859, 0.0
        %1887 = vadd.xlane.f32.xlu0 %v1886
        %v1888 = vpop.xlane.xlu0 %1887
        %v1889 = vsel %vm1271, %v1861, 0.0
        %1890 = vadd.xlane.f32.xlu0 %v1889
        %v1891 = vpop.xlane.xlu0 %1890
        %v1892 = vsel %vm1271, %v1863, 0.0
        %1893 = vadd.xlane.f32.xlu0 %v1892
        %v1894 = vpop.xlane.xlu0 %1893
        %v1895 = vsel %vm1271, %v1865, 0.0
        %1896 = vadd.xlane.f32.xlu0 %v1895
        %v1897 = vpop.xlane.xlu0 %1896
        %v1898 = vmul.f32 %v1876, %v1296
        %v1899 = vmul.f32 %v1879, %v1296
        %v1900 = vmul.f32 %v1882, %v1296
        %v1901 = vmul.f32 %v1885, %v1296
        %v1902 = vmul.f32 %v1888, %v1296
        %v1903 = vmul.f32 %v1891, %v1296
        %v1904 = vmul.f32 %v1894, %v1296
        %v1905 = vmul.f32 %v1897, %v1296
        %v1906 = vadd.f32 %v1898, 1e-05
        %v1907 = vadd.f32 %v1899, 1e-05
        %v1908 = vadd.f32 %v1900, 1e-05
        %v1909 = vadd.f32 %v1901, 1e-05
        %v1910 = vadd.f32 %v1902, 1e-05
        %v1911 = vadd.f32 %v1903, 1e-05
        %v1912 = vadd.f32 %v1904, 1e-05
        %v1913 = vadd.f32 %v1905, 1e-05
        %v1914 = vrsqrt.pop %v1906
        %v1915 = vrsqrt.pop %v1907
        %v1916 = vrsqrt.pop %v1908
        %v1917 = vrsqrt.pop %v1909
        %v1918 = vrsqrt.pop %v1910
        %v1919 = vrsqrt.pop %v1911
        %v1920 = vrsqrt.pop %v1912
        %v1921 = vrsqrt.pop %v1913
        %v1922 = vmul.f32 %v1096, %v1914
        %v1923 = vmul.f32 %v1101, %v1915
        %v1924 = vmul.f32 %v1106, %v1916
        %v1925 = vmul.f32 %v1111, %v1917
        %v1926 = vmul.f32 %v1116, %v1918
        %v1927 = vmul.f32 %v1121, %v1919
        %v1928 = vmul.f32 %v1126, %v1920
        %v1929 = vmul.f32 %v1131, %v1921
        %v1930 = vsel %vm1271, %v1674, %v1762
        %v1931 = vsel %vm1271, %v1675, %v1763
        %v1932 = vsel %vm1271, %v1676, %v1764
        %v1933 = vsel %vm1271, %v1677, %v1765
        %v1934 = vsel %vm1271, %v1678, %v1766
        %v1935 = vsel %vm1271, %v1679, %v1767
        %v1936 = vsel %vm1271, %v1680, %v1768
        %v1937 = vsel %vm1271, %v1681, %v1769
        %v1938 = vsel %vm1585, %v1930, %v1842
        %v1939 = vsel %vm1585, %v1931, %v1843
        %v1940 = vsel %vm1585, %v1932, %v1844
        %v1941 = vsel %vm1585, %v1933, %v1845
        %v1942 = vsel %vm1585, %v1934, %v1846
        %v1943 = vsel %vm1585, %v1935, %v1847
        %v1944 = vsel %vm1585, %v1936, %v1848
        %v1945 = vsel %vm1585, %v1937, %v1849
        %v1946 = vsel %vm1594, %v1938, %v1922
        %v1947 = vsel %vm1594, %v1939, %v1923
        %v1948 = vsel %vm1594, %v1940, %v1924
        %v1949 = vsel %vm1594, %v1941, %v1925
        %v1950 = vsel %vm1594, %v1942, %v1926
        %v1951 = vsel %vm1594, %v1943, %v1927
        %v1952 = vsel %vm1594, %v1944, %v1928
        %v1953 = vsel %vm1594, %v1945, %v1929
        %v1955 = vlaneseq
        %v1956 = vshrl.u32 %v1955, 7
        %v1957 = vsub.s32 0, %v1956
        %v1958 = vrot.slane %v1617, %v1957
        %v1960 = vmul.f32 %v1946, %v1958
        %v1961 = vmul.f32 %v1947, %v1958
        %v1962 = vmul.f32 %v1948, %v1958
        %v1963 = vmul.f32 %v1949, %v1958
        %v1964 = vmul.f32 %v1950, %v1958
        %v1965 = vmul.f32 %v1951, %v1958
        %v1966 = vmul.f32 %v1952, %v1958
        %v1967 = vmul.f32 %v1953, %v1958
        %v1968 = vld [vmem:[%s778] sm:$0xf]
        %v1969 = vld [vmem:[%s778 + $0x4] sm:$0xf]
        %v1970 = vld [vmem:[%s778 + $0x8] sm:$0xf]
        %v1971 = vld [vmem:[%s778 + $0xc] sm:$0xf]
        %v1972 = vld [vmem:[%s778 + $0x10] sm:$0xf]
        %v1973 = vld [vmem:[%s778 + $0x14] sm:$0xf]
        %v1974 = vld [vmem:[%s778 + $0x18] sm:$0xf]
        %v1975 = vld [vmem:[%s778 + $0x1c] sm:$0xf]
        %v1976 = vunpack.c.l.bf16 %v1968
        %v1977 = vunpack.c.l.bf16 %v1969
        %v1978 = vunpack.c.l.bf16 %v1970
        %v1979 = vunpack.c.l.bf16 %v1971
        %v1980 = vunpack.c.l.bf16 %v1972
        %v1981 = vunpack.c.l.bf16 %v1973
        %v1982 = vunpack.c.l.bf16 %v1974
        %v1983 = vunpack.c.l.bf16 %v1975
        %v1984 = vld [vmem:[#allocation10] sm:$0xf]
        %v1985 = vld [vmem:[#allocation10 + $0x4] sm:$0xf]
        %v1986 = vld [vmem:[#allocation10 + $0x8] sm:$0xf]
        %v1987 = vld [vmem:[#allocation10 + $0xc] sm:$0xf]
        %v1988 = vld [vmem:[#allocation10 + $0x10] sm:$0xf]
        %v1989 = vld [vmem:[#allocation10 + $0x14] sm:$0xf]
        %v1990 = vld [vmem:[#allocation10 + $0x18] sm:$0xf]
        %v1991 = vld [vmem:[#allocation10 + $0x1c] sm:$0xf]
        %v1992 = vunpack.c.l.bf16 %v1984
        %v1993 = vunpack.c.l.bf16 %v1985
        %v1994 = vunpack.c.l.bf16 %v1986
        %v1995 = vunpack.c.l.bf16 %v1987
        %v1996 = vunpack.c.l.bf16 %v1988
        %v1997 = vunpack.c.l.bf16 %v1989
        %v1998 = vunpack.c.l.bf16 %v1990
        %v1999 = vunpack.c.l.bf16 %v1991
        %v2000 = vld [vmem:[#allocation9] sm:$0xf]
        %v2001 = vld [vmem:[#allocation9 + $0x4] sm:$0xf]
        %v2002 = vld [vmem:[#allocation9 + $0x8] sm:$0xf]
        %v2003 = vld [vmem:[#allocation9 + $0xc] sm:$0xf]
        %v2004 = vld [vmem:[#allocation9 + $0x10] sm:$0xf]
        %v2005 = vld [vmem:[#allocation9 + $0x14] sm:$0xf]
        %v2006 = vld [vmem:[#allocation9 + $0x18] sm:$0xf]
        %v2007 = vld [vmem:[#allocation9 + $0x1c] sm:$0xf]
        %v2008 = vld [vmem:[#allocation9 + $0x20] sm:$0xf]
        %v2009 = vld [vmem:[#allocation9 + $0x24] sm:$0xf]
        %v2010 = vld [vmem:[#allocation9 + $0x28] sm:$0xf]
        %v2011 = vld [vmem:[#allocation9 + $0x2c] sm:$0xf]
        %v2012 = vld [vmem:[#allocation9 + $0x30] sm:$0xf]
        %v2013 = vld [vmem:[#allocation9 + $0x34] sm:$0xf]
        %v2014 = vld [vmem:[#allocation9 + $0x38] sm:$0xf]
        %v2015 = vld [vmem:[#allocation9 + $0x3c] sm:$0xf]
        %v2016 = vmul.f32 %v1609, %v1976
        %v2017 = vmul.f32 %v1610, %v1977
        %v2018 = vmul.f32 %v1611, %v1978
        %v2019 = vmul.f32 %v1612, %v1979
        %v2020 = vmul.f32 %v1613, %v1980
        %v2021 = vmul.f32 %v1614, %v1981
        %v2022 = vmul.f32 %v1615, %v1982
        %v2023 = vmul.f32 %v1616, %v1983
        %v2024 = vpack.c.bf16 %v1610, %v1609
        %v2025 = vpack.c.bf16 %v1612, %v1611
        %v2026 = vpack.c.bf16 %v1614, %v1613
        %v2027 = vpack.c.bf16 %v1616, %v1615
        %v2044 = vunpack.c.l.b16 %v2000
        %v2045 = vunpack.c.l.b16 %v2001
        %v2046 = vunpack.c.l.b16 %v2002
        %v2047 = vunpack.c.l.b16 %v2003
        %v2048 = vunpack.c.l.b16 %v2004
        %v2049 = vunpack.c.l.b16 %v2005
        %v2050 = vunpack.c.l.b16 %v2006
        %v2051 = vunpack.c.l.b16 %v2007
        %v2052 = vunpack.c.l.b16 %v2008
        %v2053 = vunpack.c.l.b16 %v2009
        %v2054 = vunpack.c.l.b16 %v2010
        %v2055 = vunpack.c.l.b16 %v2011
        %v2056 = vunpack.c.l.b16 %v2012
        %v2057 = vunpack.c.l.b16 %v2013
        %v2058 = vunpack.c.l.b16 %v2014
        %v2059 = vunpack.c.l.b16 %v2015
        %v2060 = vpack.c.b16 %v2045, %v2044
        %v2061 = vpack.c.b16 %v2047, %v2046
        %v2062 = vpack.c.b16 %v2049, %v2048
        %v2063 = vpack.c.b16 %v2051, %v2050
        %v2064 = vpack.c.b16 %v2053, %v2052
        %v2065 = vpack.c.b16 %v2055, %v2054
        %v2066 = vpack.c.b16 %v2057, %v2056
        %v2067 = vpack.c.b16 %v2059, %v2058
        %2076 = vmatprep.subr.bf16.mxu0 0
        %2077 = vmatpush1.bf16.msra.mxu0 %v2060
        %2078 = vmatprep.subr.bf16.mxu0 0
        %2079 = vmatpush1.bf16.msra.mxu0 %v2061
        %2080 = vmatprep.subr.bf16.mxu0 0
        %2081 = vmatpush1.bf16.msra.mxu0 %v2062
        %2082 = vmatprep.subr.bf16.mxu0 0
        %2083 = vmatpush1.bf16.msra.mxu0 %v2063
        %2084 = vmatprep.subr.bf16.mxu0 0
        %2085 = vmatpush1.bf16.msra.mxu0 %v2064
        %2086 = vmatprep.subr.bf16.mxu0 0
        %2087 = vmatpush1.bf16.msra.mxu0 %v2065
        %2088 = vmatprep.subr.bf16.mxu0 0
        %2089 = vmatpush1.bf16.msra.mxu0 %v2066
        %2090 = vmatprep.subr.bf16.mxu0 0
        %2091 = vmatpush1.bf16.msra.mxu0 %v2067
        %2092 = vmatprep.subr.bf16.mxu0 0
        %2093 = vmatpush1.bf16.msra.mxu0 0
        %2094 = vmatprep.subr.bf16.mxu0 0
        %2095 = vmatpush1.bf16.msra.mxu0 0
        %2096 = vmatprep.subr.bf16.mxu0 0
        %2097 = vmatpush1.bf16.msra.mxu0 0
        %2098 = vmatprep.subr.bf16.mxu0 0
        %2099 = vmatpush1.bf16.msra.mxu0 0
        %2100 = vmatprep.subr.bf16.mxu0 0
        %2101 = vmatpush1.bf16.msra.mxu0 0
        %2102 = vmatprep.subr.bf16.mxu0 0
        %2103 = vmatpush1.bf16.msra.mxu0 0
        %2104 = vmatprep.subr.bf16.mxu0 0
        %2105 = vmatpush1.bf16.msra.mxu0 0
        %2106 = vmatprep.subr.bf16.mxu0 0
        %2107 = vmatpush1.bf16.msra.mxu0 0
        %2108 = vmatprep.mubr.bf16.mxu0 0
        %2109 = vmatmul.mubr.bf16.gmra.mrb[0].mxu0 %v2024
        %v2110 = vpop.f32.mrb[0].mxu0
        %v2111 = vadd.f32 0.0, %v2110
        %v2112 = vpop.f32.mrb[0].mxu0
        %v2113 = vpop.f32.mrb[0].mxu0
        %v2114 = vadd.f32 0.0, %v2113
        %v2115 = vpop.f32.mrb[0].mxu0
        %2116 = vmatprep.mubr.bf16.mxu0 0
        %2117 = vmatmul.mubr.bf16.gmra.mrb[0].mxu0 %v2025
        %v2118 = vpop.f32.mrb[0].mxu0
        %v2119 = vadd.f32 0.0, %v2118
        %v2120 = vpop.f32.mrb[0].mxu0
        %v2121 = vpop.f32.mrb[0].mxu0
        %v2122 = vadd.f32 0.0, %v2121
        %v2123 = vpop.f32.mrb[0].mxu0
        %2124 = vmatprep.mubr.bf16.mxu0 0
        %2125 = vmatmul.mubr.bf16.gmra.mrb[0].mxu0 %v2026
        %v2126 = vpop.f32.mrb[0].mxu0
        %v2127 = vadd.f32 0.0, %v2126
        %v2128 = vpop.f32.mrb[0].mxu0
        %v2129 = vpop.f32.mrb[0].mxu0
        %v2130 = vadd.f32 0.0, %v2129
        %v2131 = vpop.f32.mrb[0].mxu0
        %2132 = vmatprep.mubr.bf16.mxu0 0
        %2133 = vmatmul.mubr.bf16.gmra.mrb[0].mxu0 %v2027
        %v2134 = vpop.f32.mrb[0].mxu0
        %v2135 = vadd.f32 0.0, %v2134
        %v2136 = vpop.f32.mrb[0].mxu0
        %v2137 = vpop.f32.mrb[0].mxu0
        %v2138 = vadd.f32 0.0, %v2137
        %v2139 = vpop.f32.mrb[0].mxu0
        %2140 = vdwg.mxu0
        %v2141 = vmul.f32 %v2111, %v1992
        %v2142 = vmul.f32 %v2114, %v1993
        %v2143 = vmul.f32 %v2119, %v1994
        %v2144 = vmul.f32 %v2122, %v1995
        %v2145 = vmul.f32 %v2127, %v1996
        %v2146 = vmul.f32 %v2130, %v1997
        %v2147 = vmul.f32 %v2135, %v1998
        %v2148 = vmul.f32 %v2138, %v1999
        %v2149 = vadd.f32 %v2016, %v2141
        %v2150 = vadd.f32 %v2017, %v2142
        %v2151 = vadd.f32 %v2018, %v2143
        %v2152 = vadd.f32 %v2019, %v2144
        %v2153 = vadd.f32 %v2020, %v2145
        %v2154 = vadd.f32 %v2021, %v2146
        %v2155 = vadd.f32 %v2022, %v2147
        %v2156 = vadd.f32 %v2023, %v2148
        %v2157 = vmul.f32 %v1960, %v1976
        %v2158 = vmul.f32 %v1961, %v1977
        %v2159 = vmul.f32 %v1962, %v1978
        %v2160 = vmul.f32 %v1963, %v1979
        %v2161 = vmul.f32 %v1964, %v1980
        %v2162 = vmul.f32 %v1965, %v1981
        %v2163 = vmul.f32 %v1966, %v1982
        %v2164 = vmul.f32 %v1967, %v1983
        %v2165 = vpack.c.bf16 %v1961, %v1960
        %v2166 = vpack.c.bf16 %v1963, %v1962
        %v2167 = vpack.c.bf16 %v1965, %v1964
        %v2168 = vpack.c.bf16 %v1967, %v1966
        %2169 = vmatprep.subr.bf16.mxu0 0
        %2170 = vmatpush1.bf16.msra.mxu0 %v2060
        %2171 = vmatprep.subr.bf16.mxu0 0
        %2172 = vmatpush1.bf16.msra.mxu0 %v2061
        %2173 = vmatprep.subr.bf16.mxu0 0
        %2174 = vmatpush1.bf16.msra.mxu0 %v2062
        %2175 = vmatprep.subr.bf16.mxu0 0
        %2176 = vmatpush1.bf16.msra.mxu0 %v2063
        %2177 = vmatprep.subr.bf16.mxu0 0
        %2178 = vmatpush1.bf16.msra.mxu0 %v2064
        %2179 = vmatprep.subr.bf16.mxu0 0
        %2180 = vmatpush1.bf16.msra.mxu0 %v2065
        %2181 = vmatprep.subr.bf16.mxu0 0
        %2182 = vmatpush1.bf16.msra.mxu0 %v2066
        %2183 = vmatprep.subr.bf16.mxu0 0
        %2184 = vmatpush1.bf16.msra.mxu0 %v2067
        %2185 = vmatprep.subr.bf16.mxu0 0
        %2186 = vmatpush1.bf16.msra.mxu0 0
        %2187 = vmatprep.subr.bf16.mxu0 0
        %2188 = vmatpush1.bf16.msra.mxu0 0
        %2189 = vmatprep.subr.bf16.mxu0 0
        %2190 = vmatpush1.bf16.msra.mxu0 0
        %2191 = vmatprep.subr.bf16.mxu0 0
        %2192 = vmatpush1.bf16.msra.mxu0 0
        %2193 = vmatprep.subr.bf16.mxu0 0
        %2194 = vmatpush1.bf16.msra.mxu0 0
        %2195 = vmatprep.subr.bf16.mxu0 0
        %2196 = vmatpush1.bf16.msra.mxu0 0
        %2197 = vmatprep.subr.bf16.mxu0 0
        %2198 = vmatpush1.bf16.msra.mxu0 0
        %2199 = vmatprep.subr.bf16.mxu0 0
        %2200 = vmatpush1.bf16.msra.mxu0 0
        %2201 = vmatprep.mubr.bf16.mxu0 0
        %2202 = vmatmul.mubr.bf16.gmra.mrb[0].mxu0 %v2165
        %v2203 = vpop.f32.mrb[0].mxu0
        %v2204 = vadd.f32 0.0, %v2203
        %v2205 = vpop.f32.mrb[0].mxu0
        %v2206 = vpop.f32.mrb[0].mxu0
        %v2207 = vadd.f32 0.0, %v2206
        %v2208 = vpop.f32.mrb[0].mxu0
        %2209 = vmatprep.mubr.bf16.mxu0 0
        %2210 = vmatmul.mubr.bf16.gmra.mrb[0].mxu0 %v2166
        %v2211 = vpop.f32.mrb[0].mxu0
        %v2212 = vadd.f32 0.0, %v2211
        %v2213 = vpop.f32.mrb[0].mxu0
        %v2214 = vpop.f32.mrb[0].mxu0
        %v2215 = vadd.f32 0.0, %v2214
        %v2216 = vpop.f32.mrb[0].mxu0
        %2217 = vmatprep.mubr.bf16.mxu0 0
        %2218 = vmatmul.mubr.bf16.gmra.mrb[0].mxu0 %v2167
        %v2219 = vpop.f32.mrb[0].mxu0
        %v2220 = vadd.f32 0.0, %v2219
        %v2221 = vpop.f32.mrb[0].mxu0
        %v2222 = vpop.f32.mrb[0].mxu0
        %v2223 = vadd.f32 0.0, %v2222
        %v2224 = vpop.f32.mrb[0].mxu0
        %2225 = vmatprep.mubr.bf16.mxu0 0
        %2226 = vmatmul.mubr.bf16.gmra.mrb[0].mxu0 %v2168
        %v2227 = vpop.f32.mrb[0].mxu0
        %v2228 = vadd.f32 0.0, %v2227
        %v2229 = vpop.f32.mrb[0].mxu0
        %v2230 = vpop.f32.mrb[0].mxu0
        %v2231 = vadd.f32 0.0, %v2230
        %v2232 = vpop.f32.mrb[0].mxu0
        %2233 = vdwg.mxu0
        %v2234 = vmul.f32 %v2204, %v1992
        %v2235 = vmul.f32 %v2207, %v1993
        %v2236 = vmul.f32 %v2212, %v1994
        %v2237 = vmul.f32 %v2215, %v1995
        %v2238 = vmul.f32 %v2220, %v1996
        %v2239 = vmul.f32 %v2223, %v1997
        %v2240 = vmul.f32 %v2228, %v1998
        %v2241 = vmul.f32 %v2231, %v1999
        %v2242 = vadd.f32 %v2157, %v2234
        %v2243 = vadd.f32 %v2158, %v2235
        %v2244 = vadd.f32 %v2159, %v2236
        %v2245 = vadd.f32 %v2160, %v2237
        %v2246 = vadd.f32 %v2161, %v2238
        %v2247 = vadd.f32 %v2162, %v2239
        %v2248 = vadd.f32 %v2163, %v2240
        %v2249 = vadd.f32 %v2164, %v2241
        %v2250 = vmul.f32 %v2149, 0.17677669
        %v2251 = vmul.f32 %v2150, 0.17677669
        %v2252 = vmul.f32 %v2151, 0.17677669
        %v2253 = vmul.f32 %v2152, 0.17677669
        %v2254 = vmul.f32 %v2153, 0.17677669
        %v2255 = vmul.f32 %v2154, 0.17677669
        %v2256 = vmul.f32 %v2155, 0.17677669
        %v2257 = vmul.f32 %v2156, 0.17677669
        %2258 = vst [vmem:[%s739] sm:$0xff] %v2250
        %2259 = vst [vmem:[%s739 + $0x8] sm:$0xff] %v2251
        %2260 = vst [vmem:[%s739 + $0x10] sm:$0xff] %v2252
        %2261 = vst [vmem:[%s739 + $0x18] sm:$0xff] %v2253
        %2262 = vst [vmem:[%s739 + $0x20] sm:$0xff] %v2254
        %2263 = vst [vmem:[%s739 + $0x28] sm:$0xff] %v2255
        %2264 = vst [vmem:[%s739 + $0x30] sm:$0xff] %v2256
        %2265 = vst [vmem:[%s739 + $0x38] sm:$0xff] %v2257
        %2266 = vst [vmem:[%s745] sm:$0xff] %v2242
        %2267 = vst [vmem:[%s745 + $0x8] sm:$0xff] %v2243
        %2268 = vst [vmem:[%s745 + $0x10] sm:$0xff] %v2244
        %2269 = vst [vmem:[%s745 + $0x18] sm:$0xff] %v2245
        %2270 = vst [vmem:[%s745 + $0x20] sm:$0xff] %v2246
        %2271 = vst [vmem:[%s745 + $0x28] sm:$0xff] %v2247
        %2272 = vst [vmem:[%s745 + $0x30] sm:$0xff] %v2248
        %2273 = vst [vmem:[%s745 + $0x38] sm:$0xff] %v2249
        %2274 = vst [vmem:[%s751] sm:$0xff] %v1224
        %2275 = vst [vmem:[%s751 + $0x8] sm:$0xff] %v1229
        %2276 = vst [vmem:[%s751 + $0x10] sm:$0xff] %v1234
        %2277 = vst [vmem:[%s751 + $0x18] sm:$0xff] %v1239
        %2278 = vst [vmem:[%s751 + $0x20] sm:$0xff] %v1244
        %2279 = vst [vmem:[%s751 + $0x28] sm:$0xff] %v1249
        %2280 = vst [vmem:[%s751 + $0x30] sm:$0xff] %v1254
        %2281 = vst [vmem:[%s751 + $0x38] sm:$0xff] %v1259
        %s2282 = sand.u32 %s403, 1
        %s2283 = sand.u32 %s403, 1
        %s2284 = smul.addr %s2283, 64
        %s2285 = scalar_lea.vmem [#allocation12], %s2284
        %s2286 = sand.u32 %s433, 1
        %s2287 = sand.u32 %s433, 1
        %s2288 = smul.addr %s2287, 64
        %s2289 = scalar_lea.vmem [#allocation13], %s2288
        %s2290 = sand.u32 %s463, 1
        %s2291 = sand.u32 %s463, 1
        %s2292 = smul.addr %s2291, 64
        %s2293 = scalar_lea.vmem [#allocation14], %s2292
        // Predicated region
        $region97: #{tpu_custom_call.1} parent=71 // pred_check
          %p2294 = pneg %p413
        $region98: #{tpu_custom_call.1} parent=71 // pred_check_branch
          %2296 = sbr.rel (%p2294) target = $region100
        $region99: #{tpu_custom_call.1} parent=71 // pred_region
          %s2297 = smul.u32 8, %s40
          %s2298 = ssub.s32 10, %s2297
          %p2299 = scmp.lt.s32.totalorder %s2298, 8
          %s2300 = scalar_select %p2299, %s2298, 8
          %s2301 = smul.u32 128, %s2300
          %p2302 = scmp.ne.s32.totalorder 0, %s2301
          %s2303 = sadd.s32 %s39, %s2297
          %s2304 = smul.addr %s38, 10
          %s2305 = sadd.s32 %s2303, %s2304
          %s2306 = smul.addr %s2305, 8
          %s2307 = scalar_lea.vmem %s13, %s2306
          // Predicated region
          $region101: #{tpu_custom_call.1} parent=99 // pred_check
            %p2308 = pneg %p2302
          $region102: #{tpu_custom_call.1} parent=99 // pred_check_branch
            %2310 = sbr.rel (%p2308) target = $region104
          $region103: #{tpu_custom_call.1} parent=99 // pred_region
            // Predicated region
            $region105: #{tpu_custom_call.1} parent=103 // pred_check
              _
            $region106: #{tpu_custom_call.1} parent=103 // pred_check_branch
              %2312 = sbr.rel (0) target = $region108
            $region107: #{tpu_custom_call.1} parent=103 // pred_region
              // Predicated region
              $region127: #{tpu_custom_call.1} parent=107 // pred_check
                _
              $region128: #{tpu_custom_call.1} parent=107 // pred_check_branch
                %2375 = sbr.rel (0) target = $region130
              $region129: #{tpu_custom_call.1} parent=107 // pred_region
                %s2376 = sshrl.u32 %s2300, 3
                // While loop
                $region131: #{tpu_custom_call.1} parent=129 // loop_pre_header
                  _
                $region132: #{tpu_custom_call.1} parent=129 // loop_header
                  %s2378 = sphi 0, %s2380
                  %p2379 = scmp.ge.s32.totalorder %s2378, %s2376
                  %s2383 = sphi 0, %s2404
                  %s2384 = sphi %s2285, %s2407
                  %s2385 = sphi %s2307, %s2408
                $region133: #{tpu_custom_call.1} parent=129 // loop_header_branch
                  %2382 = sbr.rel (%p2379) target = $region137
                $region134: #{tpu_custom_call.1} parent=129 // loop_body
                  %v2386 = vld [vmem:[%s2384] sm:$0xff]
                  %2387 = vst [vmem:[%s2385] sm:$0xff] %v2386
                  %v2388 = vld [vmem:[%s2384 + $0x8] sm:$0xff]
                  %2389 = vst [vmem:[%s2385 + $0x8] sm:$0xff] %v2388
                  %v2390 = vld [vmem:[%s2384 + $0x10] sm:$0xff]
                  %2391 = vst [vmem:[%s2385 + $0x10] sm:$0xff] %v2390
                  %v2392 = vld [vmem:[%s2384 + $0x18] sm:$0xff]
                  %2393 = vst [vmem:[%s2385 + $0x18] sm:$0xff] %v2392
                  %v2394 = vld [vmem:[%s2384 + $0x20] sm:$0xff]
                  %2395 = vst [vmem:[%s2385 + $0x20] sm:$0xff] %v2394
                  %v2396 = vld [vmem:[%s2384 + $0x28] sm:$0xff]
                  %2397 = vst [vmem:[%s2385 + $0x28] sm:$0xff] %v2396
                  %v2398 = vld [vmem:[%s2384 + $0x30] sm:$0xff]
                  %2399 = vst [vmem:[%s2385 + $0x30] sm:$0xff] %v2398
                  %v2400 = vld [vmem:[%s2384 + $0x38] sm:$0xff]
                  %2401 = vst [vmem:[%s2385 + $0x38] sm:$0xff] %v2400
                  %s2402 = sadd.s32 1, %s2383
                  %p2403 = scmp.ge.s32.totalorder %s2402, %s2376
                  %s2404 = scalar_select %p2403, 0, %s2402
                  %s2405 = smul.u32 %s2404, 64
                  %s2406 = smul.u32 %s2404, 64
                  %s2407 = scalar_lea.vmem %s2285, %s2405 [#allocation12]
                  %s2408 = scalar_lea.vmem %s2307, %s2406
                $region135: #{tpu_custom_call.1} parent=129 // loop_footer
                  %s2380 = sadd.s32 %s2378, 1
                $region136: #{tpu_custom_call.1} parent=129 // loop_footer_branch
                  %2377 = sbr.rel target = $region132
                $region137: #{tpu_custom_call.1} parent=129 // loop_exit
                  _
                %s2409 = sshrl.u32 %s2300, 3
                %s2410 = sand.u32 %s2300, 7
                %s2411 = smul.u32 %s2409, 8
                %s2412 = smul.u32 8, %s2411
                %s2413 = scalar_lea.vmem %s2285, %s2412 [#allocation12]
                %s2414 = smul.u32 8, %s2411
                %s2415 = scalar_lea.vmem %s2307, %s2414
                // While loop
                $region138: #{tpu_custom_call.1} parent=129 // loop_pre_header
                  _
                $region139: #{tpu_custom_call.1} parent=129 // loop_header
                  %s2417 = sphi 0, %s2419
                  %p2418 = scmp.ge.s32.totalorder %s2417, %s2410
                  %s2422 = sphi 0, %s2429
                  %s2423 = sphi %s2413, %s2432
                  %s2424 = sphi %s2415, %s2433
                $region140: #{tpu_custom_call.1} parent=129 // loop_header_branch
                  %2421 = sbr.rel (%p2418) target = $region144
                $region141: #{tpu_custom_call.1} parent=129 // loop_body
                  %v2425 = vld [vmem:[%s2423] sm:$0xff]
                  %2426 = vst [vmem:[%s2424] sm:$0xff] %v2425
                  %s2427 = sadd.s32 1, %s2422
                  %p2428 = scmp.ge.s32.totalorder %s2427, %s2410
                  %s2429 = scalar_select %p2428, 0, %s2427
                  %s2430 = smul.u32 %s2429, 8
                  %s2431 = smul.u32 %s2429, 8
                  %s2432 = scalar_lea.vmem %s2413, %s2430 [#allocation12]
                  %s2433 = scalar_lea.vmem %s2415, %s2431
                $region142: #{tpu_custom_call.1} parent=129 // loop_footer
                  %s2419 = sadd.s32 %s2417, 1
                $region143: #{tpu_custom_call.1} parent=129 // loop_footer_branch
                  %2416 = sbr.rel target = $region139
                $region144: #{tpu_custom_call.1} parent=129 // loop_exit
                  _
              $region130: #{tpu_custom_call.1} parent=107 // pred_fallthru
                _
              // Predicated region
              $region145: #{tpu_custom_call.1} parent=107 // pred_check
                _
              $region146: #{tpu_custom_call.1} parent=107 // pred_check_branch
                %2435 = sbr.rel target = $region148
              $region147: #{tpu_custom_call.1} parent=107 // pred_region
                _
              $region148: #{tpu_custom_call.1} parent=107 // pred_fallthru
                _
            $region108: #{tpu_custom_call.1} parent=103 // pred_fallthru
              _
            // Predicated region
            $region109: #{tpu_custom_call.1} parent=103 // pred_check
              _
            $region110: #{tpu_custom_call.1} parent=103 // pred_check_branch
              %2314 = sbr.rel target = $region112
            $region111: #{tpu_custom_call.1} parent=103 // pred_region
              %s2316 = sshrl.u32 %s2300, 3
              // While loop
              $region113: #{tpu_custom_call.1} parent=111 // loop_pre_header
                _
              $region114: #{tpu_custom_call.1} parent=111 // loop_header
                %s2318 = sphi 0, %s2320
                %p2319 = scmp.ge.s32.totalorder %s2318, %s2316
                %s2323 = sphi 0, %s2344
                %s2324 = sphi %s2285, %s2347
                %s2325 = sphi %s2307, %s2348
              $region115: #{tpu_custom_call.1} parent=111 // loop_header_branch
                %2322 = sbr.rel (%p2319) target = $region119
              $region116: #{tpu_custom_call.1} parent=111 // loop_body
                %v2326 = vld [vmem:[%s2324] sm:$0xff]
                %2327 = vst [vmem:[%s2325] sm:$0xff] %v2326
                %v2328 = vld [vmem:[%s2324 + $0x8] sm:$0xff]
                %2329 = vst [vmem:[%s2325 + $0x8] sm:$0xff] %v2328
                %v2330 = vld [vmem:[%s2324 + $0x10] sm:$0xff]
                %2331 = vst [vmem:[%s2325 + $0x10] sm:$0xff] %v2330
                %v2332 = vld [vmem:[%s2324 + $0x18] sm:$0xff]
                %2333 = vst [vmem:[%s2325 + $0x18] sm:$0xff] %v2332
                %v2334 = vld [vmem:[%s2324 + $0x20] sm:$0xff]
                %2335 = vst [vmem:[%s2325 + $0x20] sm:$0xff] %v2334
                %v2336 = vld [vmem:[%s2324 + $0x28] sm:$0xff]
                %2337 = vst [vmem:[%s2325 + $0x28] sm:$0xff] %v2336
                %v2338 = vld [vmem:[%s2324 + $0x30] sm:$0xff]
                %2339 = vst [vmem:[%s2325 + $0x30] sm:$0xff] %v2338
                %v2340 = vld [vmem:[%s2324 + $0x38] sm:$0xff]
                %2341 = vst [vmem:[%s2325 + $0x38] sm:$0xff] %v2340
                %s2342 = sadd.s32 1, %s2323
                %p2343 = scmp.ge.s32.totalorder %s2342, %s2316
                %s2344 = scalar_select %p2343, 0, %s2342
                %s2345 = smul.u32 %s2344, 64
                %s2346 = smul.u32 %s2344, 64
                %s2347 = scalar_lea.vmem %s2285, %s2345 [#allocation12]
                %s2348 = scalar_lea.vmem %s2307, %s2346
              $region117: #{tpu_custom_call.1} parent=111 // loop_footer
                %s2320 = sadd.s32 %s2318, 1
              $region118: #{tpu_custom_call.1} parent=111 // loop_footer_branch
                %2317 = sbr.rel target = $region114
              $region119: #{tpu_custom_call.1} parent=111 // loop_exit
                _
              %s2349 = sshrl.u32 %s2300, 3
              %s2350 = sand.u32 %s2300, 7
              %s2351 = smul.u32 %s2349, 8
              %s2352 = smul.u32 8, %s2351
              %s2353 = scalar_lea.vmem %s2285, %s2352 [#allocation12]
              %s2354 = smul.u32 8, %s2351
              %s2355 = scalar_lea.vmem %s2307, %s2354
              // While loop
              $region120: #{tpu_custom_call.1} parent=111 // loop_pre_header
                _
              $region121: #{tpu_custom_call.1} parent=111 // loop_header
                %s2357 = sphi 0, %s2359
                %p2358 = scmp.ge.s32.totalorder %s2357, %s2350
                %s2362 = sphi 0, %s2369
                %s2363 = sphi %s2353, %s2372
                %s2364 = sphi %s2355, %s2373
              $region122: #{tpu_custom_call.1} parent=111 // loop_header_branch
                %2361 = sbr.rel (%p2358) target = $region126
              $region123: #{tpu_custom_call.1} parent=111 // loop_body
                %v2365 = vld [vmem:[%s2363] sm:$0xff]
                %2366 = vst [vmem:[%s2364] sm:$0xff] %v2365
                %s2367 = sadd.s32 1, %s2362
                %p2368 = scmp.ge.s32.totalorder %s2367, %s2350
                %s2369 = scalar_select %p2368, 0, %s2367
                %s2370 = smul.u32 %s2369, 8
                %s2371 = smul.u32 %s2369, 8
                %s2372 = scalar_lea.vmem %s2353, %s2370 [#allocation12]
                %s2373 = scalar_lea.vmem %s2355, %s2371
              $region124: #{tpu_custom_call.1} parent=111 // loop_footer
                %s2359 = sadd.s32 %s2357, 1
              $region125: #{tpu_custom_call.1} parent=111 // loop_footer_branch
                %2356 = sbr.rel target = $region121
              $region126: #{tpu_custom_call.1} parent=111 // loop_exit
                _
            $region112: #{tpu_custom_call.1} parent=103 // pred_fallthru
              _
          $region104: #{tpu_custom_call.1} parent=99 // pred_fallthru
            _
          %2436 = vnop
        $region100: #{tpu_custom_call.1} parent=71 // pred_fallthru
          _
        // Predicated region
        $region149: #{tpu_custom_call.1} parent=71 // pred_check
          %p2437 = pneg %p443
        $region150: #{tpu_custom_call.1} parent=71 // pred_check_branch
          %2439 = sbr.rel (%p2437) target = $region152
        $region151: #{tpu_custom_call.1} parent=71 // pred_region
          %s2440 = smul.u32 8, %s40
          %s2441 = ssub.s32 10, %s2440
          %p2442 = scmp.lt.s32.totalorder %s2441, 8
          %s2443 = scalar_select %p2442, %s2441, 8
          %s2444 = smul.u32 128, %s2443
          %p2445 = scmp.ne.s32.totalorder 0, %s2444
          %s2446 = sadd.s32 %s39, %s2440
          %s2447 = smul.addr %s38, 10
          %s2448 = sadd.s32 %s2446, %s2447
          %s2449 = smul.addr %s2448, 8
          %s2450 = scalar_lea.vmem %s14, %s2449
          // Predicated region
          $region153: #{tpu_custom_call.1} parent=151 // pred_check
            %p2451 = pneg %p2445
          $region154: #{tpu_custom_call.1} parent=151 // pred_check_branch
            %2453 = sbr.rel (%p2451) target = $region156
          $region155: #{tpu_custom_call.1} parent=151 // pred_region
            // Predicated region
            $region157: #{tpu_custom_call.1} parent=155 // pred_check
              _
            $region158: #{tpu_custom_call.1} parent=155 // pred_check_branch
              %2455 = sbr.rel (0) target = $region160
            $region159: #{tpu_custom_call.1} parent=155 // pred_region
              // Predicated region
              $region179: #{tpu_custom_call.1} parent=159 // pred_check
                _
              $region180: #{tpu_custom_call.1} parent=159 // pred_check_branch
                %2518 = sbr.rel (0) target = $region182
              $region181: #{tpu_custom_call.1} parent=159 // pred_region
                %s2519 = sshrl.u32 %s2443, 3
                // While loop
                $region183: #{tpu_custom_call.1} parent=181 // loop_pre_header
                  _
                $region184: #{tpu_custom_call.1} parent=181 // loop_header
                  %s2521 = sphi 0, %s2523
                  %p2522 = scmp.ge.s32.totalorder %s2521, %s2519
                  %s2526 = sphi 0, %s2547
                  %s2527 = sphi %s2289, %s2550
                  %s2528 = sphi %s2450, %s2551
                $region185: #{tpu_custom_call.1} parent=181 // loop_header_branch
                  %2525 = sbr.rel (%p2522) target = $region189
                $region186: #{tpu_custom_call.1} parent=181 // loop_body
                  %v2529 = vld [vmem:[%s2527] sm:$0xff]
                  %2530 = vst [vmem:[%s2528] sm:$0xff] %v2529
                  %v2531 = vld [vmem:[%s2527 + $0x8] sm:$0xff]
                  %2532 = vst [vmem:[%s2528 + $0x8] sm:$0xff] %v2531
                  %v2533 = vld [vmem:[%s2527 + $0x10] sm:$0xff]
                  %2534 = vst [vmem:[%s2528 + $0x10] sm:$0xff] %v2533
                  %v2535 = vld [vmem:[%s2527 + $0x18] sm:$0xff]
                  %2536 = vst [vmem:[%s2528 + $0x18] sm:$0xff] %v2535
                  %v2537 = vld [vmem:[%s2527 + $0x20] sm:$0xff]
                  %2538 = vst [vmem:[%s2528 + $0x20] sm:$0xff] %v2537
                  %v2539 = vld [vmem:[%s2527 + $0x28] sm:$0xff]
                  %2540 = vst [vmem:[%s2528 + $0x28] sm:$0xff] %v2539
                  %v2541 = vld [vmem:[%s2527 + $0x30] sm:$0xff]
                  %2542 = vst [vmem:[%s2528 + $0x30] sm:$0xff] %v2541
                  %v2543 = vld [vmem:[%s2527 + $0x38] sm:$0xff]
                  %2544 = vst [vmem:[%s2528 + $0x38] sm:$0xff] %v2543
                  %s2545 = sadd.s32 1, %s2526
                  %p2546 = scmp.ge.s32.totalorder %s2545, %s2519
                  %s2547 = scalar_select %p2546, 0, %s2545
                  %s2548 = smul.u32 %s2547, 64
                  %s2549 = smul.u32 %s2547, 64
                  %s2550 = scalar_lea.vmem %s2289, %s2548 [#allocation13]
                  %s2551 = scalar_lea.vmem %s2450, %s2549
                $region187: #{tpu_custom_call.1} parent=181 // loop_footer
                  %s2523 = sadd.s32 %s2521, 1
                $region188: #{tpu_custom_call.1} parent=181 // loop_footer_branch
                  %2520 = sbr.rel target = $region184
                $region189: #{tpu_custom_call.1} parent=181 // loop_exit
                  _
                %s2552 = sshrl.u32 %s2443, 3
                %s2553 = sand.u32 %s2443, 7
                %s2554 = smul.u32 %s2552, 8
                %s2555 = smul.u32 8, %s2554
                %s2556 = scalar_lea.vmem %s2289, %s2555 [#allocation13]
                %s2557 = smul.u32 8, %s2554
                %s2558 = scalar_lea.vmem %s2450, %s2557
                // While loop
                $region190: #{tpu_custom_call.1} parent=181 // loop_pre_header
                  _
                $region191: #{tpu_custom_call.1} parent=181 // loop_header
                  %s2560 = sphi 0, %s2562
                  %p2561 = scmp.ge.s32.totalorder %s2560, %s2553
                  %s2565 = sphi 0, %s2572
                  %s2566 = sphi %s2556, %s2575
                  %s2567 = sphi %s2558, %s2576
                $region192: #{tpu_custom_call.1} parent=181 // loop_header_branch
                  %2564 = sbr.rel (%p2561) target = $region196
                $region193: #{tpu_custom_call.1} parent=181 // loop_body
                  %v2568 = vld [vmem:[%s2566] sm:$0xff]
                  %2569 = vst [vmem:[%s2567] sm:$0xff] %v2568
                  %s2570 = sadd.s32 1, %s2565
                  %p2571 = scmp.ge.s32.totalorder %s2570, %s2553
                  %s2572 = scalar_select %p2571, 0, %s2570
                  %s2573 = smul.u32 %s2572, 8
                  %s2574 = smul.u32 %s2572, 8
                  %s2575 = scalar_lea.vmem %s2556, %s2573 [#allocation13]
                  %s2576 = scalar_lea.vmem %s2558, %s2574
                $region194: #{tpu_custom_call.1} parent=181 // loop_footer
                  %s2562 = sadd.s32 %s2560, 1
                $region195: #{tpu_custom_call.1} parent=181 // loop_footer_branch
                  %2559 = sbr.rel target = $region191
                $region196: #{tpu_custom_call.1} parent=181 // loop_exit
                  _
              $region182: #{tpu_custom_call.1} parent=159 // pred_fallthru
                _
              // Predicated region
              $region197: #{tpu_custom_call.1} parent=159 // pred_check
                _
              $region198: #{tpu_custom_call.1} parent=159 // pred_check_branch
                %2578 = sbr.rel target = $region200
              $region199: #{tpu_custom_call.1} parent=159 // pred_region
                _
              $region200: #{tpu_custom_call.1} parent=159 // pred_fallthru
                _
            $region160: #{tpu_custom_call.1} parent=155 // pred_fallthru
              _
            // Predicated region
            $region161: #{tpu_custom_call.1} parent=155 // pred_check
              _
            $region162: #{tpu_custom_call.1} parent=155 // pred_check_branch
              %2457 = sbr.rel target = $region164
            $region163: #{tpu_custom_call.1} parent=155 // pred_region
              %s2459 = sshrl.u32 %s2443, 3
              // While loop
              $region165: #{tpu_custom_call.1} parent=163 // loop_pre_header
                _
              $region166: #{tpu_custom_call.1} parent=163 // loop_header
                %s2461 = sphi 0, %s2463
                %p2462 = scmp.ge.s32.totalorder %s2461, %s2459
                %s2466 = sphi 0, %s2487
                %s2467 = sphi %s2289, %s2490
                %s2468 = sphi %s2450, %s2491
              $region167: #{tpu_custom_call.1} parent=163 // loop_header_branch
                %2465 = sbr.rel (%p2462) target = $region171
              $region168: #{tpu_custom_call.1} parent=163 // loop_body
                %v2469 = vld [vmem:[%s2467] sm:$0xff]
                %2470 = vst [vmem:[%s2468] sm:$0xff] %v2469
                %v2471 = vld [vmem:[%s2467 + $0x8] sm:$0xff]
                %2472 = vst [vmem:[%s2468 + $0x8] sm:$0xff] %v2471
                %v2473 = vld [vmem:[%s2467 + $0x10] sm:$0xff]
                %2474 = vst [vmem:[%s2468 + $0x10] sm:$0xff] %v2473
                %v2475 = vld [vmem:[%s2467 + $0x18] sm:$0xff]
                %2476 = vst [vmem:[%s2468 + $0x18] sm:$0xff] %v2475
                %v2477 = vld [vmem:[%s2467 + $0x20] sm:$0xff]
                %2478 = vst [vmem:[%s2468 + $0x20] sm:$0xff] %v2477
                %v2479 = vld [vmem:[%s2467 + $0x28] sm:$0xff]
                %2480 = vst [vmem:[%s2468 + $0x28] sm:$0xff] %v2479
                %v2481 = vld [vmem:[%s2467 + $0x30] sm:$0xff]
                %2482 = vst [vmem:[%s2468 + $0x30] sm:$0xff] %v2481
                %v2483 = vld [vmem:[%s2467 + $0x38] sm:$0xff]
                %2484 = vst [vmem:[%s2468 + $0x38] sm:$0xff] %v2483
                %s2485 = sadd.s32 1, %s2466
                %p2486 = scmp.ge.s32.totalorder %s2485, %s2459
                %s2487 = scalar_select %p2486, 0, %s2485
                %s2488 = smul.u32 %s2487, 64
                %s2489 = smul.u32 %s2487, 64
                %s2490 = scalar_lea.vmem %s2289, %s2488 [#allocation13]
                %s2491 = scalar_lea.vmem %s2450, %s2489
              $region169: #{tpu_custom_call.1} parent=163 // loop_footer
                %s2463 = sadd.s32 %s2461, 1
              $region170: #{tpu_custom_call.1} parent=163 // loop_footer_branch
                %2460 = sbr.rel target = $region166
              $region171: #{tpu_custom_call.1} parent=163 // loop_exit
                _
              %s2492 = sshrl.u32 %s2443, 3
              %s2493 = sand.u32 %s2443, 7
              %s2494 = smul.u32 %s2492, 8
              %s2495 = smul.u32 8, %s2494
              %s2496 = scalar_lea.vmem %s2289, %s2495 [#allocation13]
              %s2497 = smul.u32 8, %s2494
              %s2498 = scalar_lea.vmem %s2450, %s2497
              // While loop
              $region172: #{tpu_custom_call.1} parent=163 // loop_pre_header
                _
              $region173: #{tpu_custom_call.1} parent=163 // loop_header
                %s2500 = sphi 0, %s2502
                %p2501 = scmp.ge.s32.totalorder %s2500, %s2493
                %s2505 = sphi 0, %s2512
                %s2506 = sphi %s2496, %s2515
                %s2507 = sphi %s2498, %s2516
              $region174: #{tpu_custom_call.1} parent=163 // loop_header_branch
                %2504 = sbr.rel (%p2501) target = $region178
              $region175: #{tpu_custom_call.1} parent=163 // loop_body
                %v2508 = vld [vmem:[%s2506] sm:$0xff]
                %2509 = vst [vmem:[%s2507] sm:$0xff] %v2508
                %s2510 = sadd.s32 1, %s2505
                %p2511 = scmp.ge.s32.totalorder %s2510, %s2493
                %s2512 = scalar_select %p2511, 0, %s2510
                %s2513 = smul.u32 %s2512, 8
                %s2514 = smul.u32 %s2512, 8
                %s2515 = scalar_lea.vmem %s2496, %s2513 [#allocation13]
                %s2516 = scalar_lea.vmem %s2498, %s2514
              $region176: #{tpu_custom_call.1} parent=163 // loop_footer
                %s2502 = sadd.s32 %s2500, 1
              $region177: #{tpu_custom_call.1} parent=163 // loop_footer_branch
                %2499 = sbr.rel target = $region173
              $region178: #{tpu_custom_call.1} parent=163 // loop_exit
                _
            $region164: #{tpu_custom_call.1} parent=155 // pred_fallthru
              _
          $region156: #{tpu_custom_call.1} parent=151 // pred_fallthru
            _
          %2579 = vnop
        $region152: #{tpu_custom_call.1} parent=71 // pred_fallthru
          _
        // Predicated region
        $region201: #{tpu_custom_call.1} parent=71 // pred_check
          %p2580 = pneg %p473
        $region202: #{tpu_custom_call.1} parent=71 // pred_check_branch
          %2582 = sbr.rel (%p2580) target = $region204
        $region203: #{tpu_custom_call.1} parent=71 // pred_region
          %s2583 = smul.u32 8, %s40
          %s2584 = ssub.s32 10, %s2583
          %p2585 = scmp.lt.s32.totalorder %s2584, 8
          %s2586 = scalar_select %p2585, %s2584, 8
          %s2587 = smul.u32 128, %s2586
          %p2588 = scmp.ne.s32.totalorder 0, %s2587
          %s2589 = sadd.s32 %s39, %s2583
          %s2590 = smul.addr %s38, 10
          %s2591 = sadd.s32 %s2589, %s2590
          %s2592 = smul.addr %s2591, 8
          %s2593 = scalar_lea.vmem %s15, %s2592
          // Predicated region
          $region205: #{tpu_custom_call.1} parent=203 // pred_check
            %p2594 = pneg %p2588
          $region206: #{tpu_custom_call.1} parent=203 // pred_check_branch
            %2596 = sbr.rel (%p2594) target = $region208
          $region207: #{tpu_custom_call.1} parent=203 // pred_region
            // Predicated region
            $region209: #{tpu_custom_call.1} parent=207 // pred_check
              _
            $region210: #{tpu_custom_call.1} parent=207 // pred_check_branch
              %2598 = sbr.rel (0) target = $region212
            $region211: #{tpu_custom_call.1} parent=207 // pred_region
              // Predicated region
              $region231: #{tpu_custom_call.1} parent=211 // pred_check
                _
              $region232: #{tpu_custom_call.1} parent=211 // pred_check_branch
                %2661 = sbr.rel (0) target = $region234
              $region233: #{tpu_custom_call.1} parent=211 // pred_region
                %s2662 = sshrl.u32 %s2586, 3
                // While loop
                $region235: #{tpu_custom_call.1} parent=233 // loop_pre_header
                  _
                $region236: #{tpu_custom_call.1} parent=233 // loop_header
                  %s2664 = sphi 0, %s2666
                  %p2665 = scmp.ge.s32.totalorder %s2664, %s2662
                  %s2669 = sphi 0, %s2690
                  %s2670 = sphi %s2293, %s2693
                  %s2671 = sphi %s2593, %s2694
                $region237: #{tpu_custom_call.1} parent=233 // loop_header_branch
                  %2668 = sbr.rel (%p2665) target = $region241
                $region238: #{tpu_custom_call.1} parent=233 // loop_body
                  %v2672 = vld [vmem:[%s2670] sm:$0xff]
                  %2673 = vst [vmem:[%s2671] sm:$0xff] %v2672
                  %v2674 = vld [vmem:[%s2670 + $0x8] sm:$0xff]
                  %2675 = vst [vmem:[%s2671 + $0x8] sm:$0xff] %v2674
                  %v2676 = vld [vmem:[%s2670 + $0x10] sm:$0xff]
                  %2677 = vst [vmem:[%s2671 + $0x10] sm:$0xff] %v2676
                  %v2678 = vld [vmem:[%s2670 + $0x18] sm:$0xff]
                  %2679 = vst [vmem:[%s2671 + $0x18] sm:$0xff] %v2678
                  %v2680 = vld [vmem:[%s2670 + $0x20] sm:$0xff]
                  %2681 = vst [vmem:[%s2671 + $0x20] sm:$0xff] %v2680
                  %v2682 = vld [vmem:[%s2670 + $0x28] sm:$0xff]
                  %2683 = vst [vmem:[%s2671 + $0x28] sm:$0xff] %v2682
                  %v2684 = vld [vmem:[%s2670 + $0x30] sm:$0xff]
                  %2685 = vst [vmem:[%s2671 + $0x30] sm:$0xff] %v2684
                  %v2686 = vld [vmem:[%s2670 + $0x38] sm:$0xff]
                  %2687 = vst [vmem:[%s2671 + $0x38] sm:$0xff] %v2686
                  %s2688 = sadd.s32 1, %s2669
                  %p2689 = scmp.ge.s32.totalorder %s2688, %s2662
                  %s2690 = scalar_select %p2689, 0, %s2688
                  %s2691 = smul.u32 %s2690, 64
                  %s2692 = smul.u32 %s2690, 64
                  %s2693 = scalar_lea.vmem %s2293, %s2691 [#allocation14]
                  %s2694 = scalar_lea.vmem %s2593, %s2692
                $region239: #{tpu_custom_call.1} parent=233 // loop_footer
                  %s2666 = sadd.s32 %s2664, 1
                $region240: #{tpu_custom_call.1} parent=233 // loop_footer_branch
                  %2663 = sbr.rel target = $region236
                $region241: #{tpu_custom_call.1} parent=233 // loop_exit
                  _
                %s2695 = sshrl.u32 %s2586, 3
                %s2696 = sand.u32 %s2586, 7
                %s2697 = smul.u32 %s2695, 8
                %s2698 = smul.u32 8, %s2697
                %s2699 = scalar_lea.vmem %s2293, %s2698 [#allocation14]
                %s2700 = smul.u32 8, %s2697
                %s2701 = scalar_lea.vmem %s2593, %s2700
                // While loop
                $region242: #{tpu_custom_call.1} parent=233 // loop_pre_header
                  _
                $region243: #{tpu_custom_call.1} parent=233 // loop_header
                  %s2703 = sphi 0, %s2705
                  %p2704 = scmp.ge.s32.totalorder %s2703, %s2696
                  %s2708 = sphi 0, %s2715
                  %s2709 = sphi %s2699, %s2718
                  %s2710 = sphi %s2701, %s2719
                $region244: #{tpu_custom_call.1} parent=233 // loop_header_branch
                  %2707 = sbr.rel (%p2704) target = $region248
                $region245: #{tpu_custom_call.1} parent=233 // loop_body
                  %v2711 = vld [vmem:[%s2709] sm:$0xff]
                  %2712 = vst [vmem:[%s2710] sm:$0xff] %v2711
                  %s2713 = sadd.s32 1, %s2708
                  %p2714 = scmp.ge.s32.totalorder %s2713, %s2696
                  %s2715 = scalar_select %p2714, 0, %s2713
                  %s2716 = smul.u32 %s2715, 8
                  %s2717 = smul.u32 %s2715, 8
                  %s2718 = scalar_lea.vmem %s2699, %s2716 [#allocation14]
                  %s2719 = scalar_lea.vmem %s2701, %s2717
                $region246: #{tpu_custom_call.1} parent=233 // loop_footer
                  %s2705 = sadd.s32 %s2703, 1
                $region247: #{tpu_custom_call.1} parent=233 // loop_footer_branch
                  %2702 = sbr.rel target = $region243
                $region248: #{tpu_custom_call.1} parent=233 // loop_exit
                  _
              $region234: #{tpu_custom_call.1} parent=211 // pred_fallthru
                _
              // Predicated region
              $region249: #{tpu_custom_call.1} parent=211 // pred_check
                _
              $region250: #{tpu_custom_call.1} parent=211 // pred_check_branch
                %2721 = sbr.rel target = $region252
              $region251: #{tpu_custom_call.1} parent=211 // pred_region
                _
              $region252: #{tpu_custom_call.1} parent=211 // pred_fallthru
                _
            $region212: #{tpu_custom_call.1} parent=207 // pred_fallthru
              _
            // Predicated region
            $region213: #{tpu_custom_call.1} parent=207 // pred_check
              _
            $region214: #{tpu_custom_call.1} parent=207 // pred_check_branch
              %2600 = sbr.rel target = $region216
            $region215: #{tpu_custom_call.1} parent=207 // pred_region
              %s2602 = sshrl.u32 %s2586, 3
              // While loop
              $region217: #{tpu_custom_call.1} parent=215 // loop_pre_header
                _
              $region218: #{tpu_custom_call.1} parent=215 // loop_header
                %s2604 = sphi 0, %s2606
                %p2605 = scmp.ge.s32.totalorder %s2604, %s2602
                %s2609 = sphi 0, %s2630
                %s2610 = sphi %s2293, %s2633
                %s2611 = sphi %s2593, %s2634
              $region219: #{tpu_custom_call.1} parent=215 // loop_header_branch
                %2608 = sbr.rel (%p2605) target = $region223
              $region220: #{tpu_custom_call.1} parent=215 // loop_body
                %v2612 = vld [vmem:[%s2610] sm:$0xff]
                %2613 = vst [vmem:[%s2611] sm:$0xff] %v2612
                %v2614 = vld [vmem:[%s2610 + $0x8] sm:$0xff]
                %2615 = vst [vmem:[%s2611 + $0x8] sm:$0xff] %v2614
                %v2616 = vld [vmem:[%s2610 + $0x10] sm:$0xff]
                %2617 = vst [vmem:[%s2611 + $0x10] sm:$0xff] %v2616
                %v2618 = vld [vmem:[%s2610 + $0x18] sm:$0xff]
                %2619 = vst [vmem:[%s2611 + $0x18] sm:$0xff] %v2618
                %v2620 = vld [vmem:[%s2610 + $0x20] sm:$0xff]
                %2621 = vst [vmem:[%s2611 + $0x20] sm:$0xff] %v2620
                %v2622 = vld [vmem:[%s2610 + $0x28] sm:$0xff]
                %2623 = vst [vmem:[%s2611 + $0x28] sm:$0xff] %v2622
                %v2624 = vld [vmem:[%s2610 + $0x30] sm:$0xff]
                %2625 = vst [vmem:[%s2611 + $0x30] sm:$0xff] %v2624
                %v2626 = vld [vmem:[%s2610 + $0x38] sm:$0xff]
                %2627 = vst [vmem:[%s2611 + $0x38] sm:$0xff] %v2626
                %s2628 = sadd.s32 1, %s2609
                %p2629 = scmp.ge.s32.totalorder %s2628, %s2602
                %s2630 = scalar_select %p2629, 0, %s2628
                %s2631 = smul.u32 %s2630, 64
                %s2632 = smul.u32 %s2630, 64
                %s2633 = scalar_lea.vmem %s2293, %s2631 [#allocation14]
                %s2634 = scalar_lea.vmem %s2593, %s2632
              $region221: #{tpu_custom_call.1} parent=215 // loop_footer
                %s2606 = sadd.s32 %s2604, 1
              $region222: #{tpu_custom_call.1} parent=215 // loop_footer_branch
                %2603 = sbr.rel target = $region218
              $region223: #{tpu_custom_call.1} parent=215 // loop_exit
                _
              %s2635 = sshrl.u32 %s2586, 3
              %s2636 = sand.u32 %s2586, 7
              %s2637 = smul.u32 %s2635, 8
              %s2638 = smul.u32 8, %s2637
              %s2639 = scalar_lea.vmem %s2293, %s2638 [#allocation14]
              %s2640 = smul.u32 8, %s2637
              %s2641 = scalar_lea.vmem %s2593, %s2640
              // While loop
              $region224: #{tpu_custom_call.1} parent=215 // loop_pre_header
                _
              $region225: #{tpu_custom_call.1} parent=215 // loop_header
                %s2643 = sphi 0, %s2645
                %p2644 = scmp.ge.s32.totalorder %s2643, %s2636
                %s2648 = sphi 0, %s2655
                %s2649 = sphi %s2639, %s2658
                %s2650 = sphi %s2641, %s2659
              $region226: #{tpu_custom_call.1} parent=215 // loop_header_branch
                %2647 = sbr.rel (%p2644) target = $region230
              $region227: #{tpu_custom_call.1} parent=215 // loop_body
                %v2651 = vld [vmem:[%s2649] sm:$0xff]
                %2652 = vst [vmem:[%s2650] sm:$0xff] %v2651
                %s2653 = sadd.s32 1, %s2648
                %p2654 = scmp.ge.s32.totalorder %s2653, %s2636
                %s2655 = scalar_select %p2654, 0, %s2653
                %s2656 = smul.u32 %s2655, 8
                %s2657 = smul.u32 %s2655, 8
                %s2658 = scalar_lea.vmem %s2639, %s2656 [#allocation14]
                %s2659 = scalar_lea.vmem %s2641, %s2657
              $region228: #{tpu_custom_call.1} parent=215 // loop_footer
                %s2645 = sadd.s32 %s2643, 1
              $region229: #{tpu_custom_call.1} parent=215 // loop_footer_branch
                %2642 = sbr.rel target = $region225
              $region230: #{tpu_custom_call.1} parent=215 // loop_exit
                _
            $region216: #{tpu_custom_call.1} parent=207 // pred_fallthru
              _
          $region208: #{tpu_custom_call.1} parent=203 // pred_fallthru
            _
          %2722 = vnop
        $region204: #{tpu_custom_call.1} parent=71 // pred_fallthru
          _
      $region72: #{tpu_custom_call.1} parent=5 // pred_fallthru
        _
      %p2723 = scmp.le.s32.totalorder 2, %s28
      // Predicated region
      $region253: #{tpu_custom_call.1} parent=5 // pred_check
        %p2724 = pneg %p2723
      $region254: #{tpu_custom_call.1} parent=5 // pred_check_branch
        %2726 = sbr.rel (%p2724) target = $region256
      $region255: #{tpu_custom_call.1} parent=5 // pred_region
        %s2727 = ssub.s32 %s28, 2
        // Predicated region
        $region257: #{tpu_custom_call.1} parent=255 // pred_check
          %p2728 = pneg %p419
        $region258: #{tpu_custom_call.1} parent=255 // pred_check_branch
          %2730 = sbr.rel (%p2728) target = $region260
        $region259: #{tpu_custom_call.1} parent=255 // pred_region
          %s2731 = sand.u32 %s404, 1
          %s2732 = sand.u32 %s404, 1
          %s2733 = smul.addr %s2732, 64
          %s2734 = scalar_lea.vmem [#allocation12], %s2733
        $region260: #{tpu_custom_call.1} parent=255 // pred_fallthru
          _
        // Predicated region
        $region261: #{tpu_custom_call.1} parent=255 // pred_check
          %p2735 = pneg %p449
        $region262: #{tpu_custom_call.1} parent=255 // pred_check_branch
          %2737 = sbr.rel (%p2735) target = $region264
        $region263: #{tpu_custom_call.1} parent=255 // pred_region
          %s2738 = sand.u32 %s434, 1
          %s2739 = sand.u32 %s434, 1
          %s2740 = smul.addr %s2739, 64
          %s2741 = scalar_lea.vmem [#allocation13], %s2740
        $region264: #{tpu_custom_call.1} parent=255 // pred_fallthru
          _
        // Predicated region
        $region265: #{tpu_custom_call.1} parent=255 // pred_check
          %p2742 = pneg %p479
        $region266: #{tpu_custom_call.1} parent=255 // pred_check_branch
          %2744 = sbr.rel (%p2742) target = $region268
        $region267: #{tpu_custom_call.1} parent=255 // pred_region
          %s2745 = sand.u32 %s464, 1
          %s2746 = sand.u32 %s464, 1
          %s2747 = smul.addr %s2746, 64
          %s2748 = scalar_lea.vmem [#allocation14], %s2747
        $region268: #{tpu_custom_call.1} parent=255 // pred_fallthru
          _
      $region256: #{tpu_custom_call.1} parent=5 // pred_fallthru
        _
    $region6: #{tpu_custom_call.1} parent=1 // loop_footer
      %s32 = sadd.s32 1, %s28
    $region7: #{tpu_custom_call.1} parent=1 // loop_footer_branch
      %27 = sbr.rel target = $region3
    $region8: #{tpu_custom_call.1} parent=1 // loop_exit
      _
    %2749 = vsyncpa [#allocation3], 1
    %s2750 = scalar_lea.sflag [#allocation3], 1
    %2751 = vsyncpa %s2750, 1
    %2752 = vsyncpa [#allocation5], 1
    %2753 = vsyncpa [#allocation8], 1
    %2754 = vsyncpa [#allocation11], 1

</llo_original>
